<compile_context>
chip_gen: v7x
topology: tpu7x:2x2x1
jax: 0.10.0
libtpu: 0.0.40
codegen_flags: <defaults>
</compile_context>

<pallas_src>
import functools

import numpy as np
import jax
import jax.numpy as jnp
from jax.experimental import pallas as pl
from jax.experimental.pallas import tpu as pltpu

PAD = 0            # dataset.PAD
PAD_POSITION = 0   # dataset.PAD_POSITION
LN_EPS = 1e-5
NEG_INF = -1e30    # finite "minus infinity" -> no NaN on fully masked rows

PACKED_FIELDS = (
    "s_wqkv", "s_bqkv", "s_wfc", "s_bfc", "s_lg", "s_lb",
    "c_wq", "c_bq", "c_wkv", "c_bkv", "c_wfc", "c_bfc", "c_lg", "c_lb",
    "f_w1", "f_b1", "f_w2", "f_b2", "f_lg", "f_lb",
)


def _layer_norm(y, g, b):
    mu = jnp.mean(y, axis=-1, keepdims=True)
    var = jnp.mean((y - mu) ** 2, axis=-1, keepdims=True)
    return (y - mu) * jax.lax.rsqrt(var + LN_EPS) * g + b


# --------------------------------------------------------------------------
# Fused whole-decoder kernel (grid axis = layer index)
# --------------------------------------------------------------------------
def decoder_kernel(
    x_emb_ref, enc_ref, smask_ref, cmask_ref, npad_ref,
    s_wqkv_ref, s_bqkv_ref, s_wfc_ref, s_bfc_ref, s_lg_ref, s_lb_ref,
    c_wq_ref, c_bq_ref, c_wkv_ref, c_bkv_ref, c_wfc_ref, c_bfc_ref, c_lg_ref, c_lb_ref,
    f_w1_ref, f_b1_ref, f_w2_ref, f_b2_ref, f_lg_ref, f_lb_ref,
    out_ref, x_carry,
    *, B, LT, LS, H, DK, DV,
):
    layer = pl.program_id(0)
    inv_temp = 1.0 / float(np.power(DK, 0.5))   # multiply instead of divide

    @pl.when(layer == 0)
    def _():
        x_carry[...] = x_emb_ref[...]           # embedded target tokens

    x = x_carry[...]            # [B*LT, E]  activation carried across layers
    enc = enc_ref[...]          # [B*LS, E]
    smask = smask_ref[...]      # [B, LT, LT] (1.0 = masked)
    cmask = cmask_ref[...]      # [B, LT, LS]
    npad = npad_ref[...]        # [B*LT, 1]

    def attn_core(q, k, v, mask_val, lq, lk):
        # q: [B*lq, H*DK], k: [B*lk, H*DK], v: [B*lk, H*DV]
        # returns per-head contexts, each [B*lq, DV]
        ctx_heads = []
        for h in range(H):
            qh = q[:, h * DK:(h + 1) * DK]
            kh = k[:, h * DK:(h + 1) * DK]
            vh = v[:, h * DV:(h + 1) * DV]
            rows = []
            for bi in range(B):
                qb = qh[bi * lq:(bi + 1) * lq, :]
                kb = kh[bi * lk:(bi + 1) * lk, :]
                vb = vh[bi * lk:(bi + 1) * lk, :]
                mb = mask_val[bi]
                s = jax.lax.dot_general(
                    qb, kb, (((1,), (1,)), ((), ())),
                    preferred_element_type=jnp.float32) * inv_temp
                s = jnp.where(mb > 0.0, NEG_INF, s)
                smax = jnp.max(s, axis=-1, keepdims=True)
                ex = jnp.exp(s - smax)
                denom = jnp.sum(ex, axis=-1, keepdims=True)
                p = ex * pl.reciprocal(denom, approx=False)
                rows.append(jnp.dot(p, vb, preferred_element_type=jnp.float32))
            ctx_heads.append(jnp.concatenate(rows, axis=0))
        return ctx_heads

    def proj_ln_mask(ctx_heads, wfc, bfc, residual, g, b_):
        # fc(ctx) + residual + LayerNorm + non-pad mask, fused; the per-head
        # contexts are accumulated through row-slices of wfc so the
        # concatenated [B*LT, H*DV] context is never materialized.
        y = residual + bfc
        for h in range(H):
            y = y + jnp.dot(ctx_heads[h], wfc[h * DV:(h + 1) * DV, :],
                            preferred_element_type=jnp.float32)
        return _layer_norm(y, g, b_) * npad

    # ---- masked self attention (fused QKV projection) ----------------------
    qkv = jnp.dot(x, s_wqkv_ref[0], preferred_element_type=jnp.float32) + s_bqkv_ref[0]
    q = qkv[:, :H * DK]
    k = qkv[:, H * DK:2 * H * DK]
    v = qkv[:, 2 * H * DK:]
    ctx = attn_core(q, k, v, smask, LT, LT)
    x = proj_ln_mask(ctx, s_wfc_ref[0], s_bfc_ref[0], x, s_lg_ref[0], s_lb_ref[0])

    # ---- decoder-encoder attention (fused KV projection) -------------------
    q = jnp.dot(x, c_wq_ref[0], preferred_element_type=jnp.float32) + c_bq_ref[0]
    kv = jnp.dot(enc, c_wkv_ref[0], preferred_element_type=jnp.float32) + c_bkv_ref[0]
    k = kv[:, :H * DK]
    v = kv[:, H * DK:]
    ctx = attn_core(q, k, v, cmask, LT, LS)
    x = proj_ln_mask(ctx, c_wfc_ref[0], c_bfc_ref[0], x, c_lg_ref[0], c_lb_ref[0])

    # ---- position-wise feed forward ----------------------------------------
    h1 = jnp.dot(x, f_w1_ref[0], preferred_element_type=jnp.float32) + f_b1_ref[0]
    h1 = jnp.maximum(h1, 0.0)
    y = jnp.dot(h1, f_w2_ref[0], preferred_element_type=jnp.float32) + f_b2_ref[0] + x
    x = _layer_norm(y, f_lg_ref[0], f_lb_ref[0]) * npad

    x_carry[...] = x
    out_ref[...] = x


# --------------------------------------------------------------------------
# Mask construction + forward wrapper (single pallas_call for all layers)
# --------------------------------------------------------------------------
def build_masks(target_seq, source_seq):
    b, lt = target_seq.shape
    ls = source_seq.shape[1]
    pad_mask = jnp.broadcast_to((target_seq == PAD)[:, None, :], (b, lt, lt)).astype(jnp.int32)
    subseq = jnp.triu(jnp.ones((lt, lt), jnp.int32), k=1)[None, :, :]
    self_mask = ((pad_mask + subseq) > 0).astype(jnp.float32)                    # [B, Lt, Lt]
    non_pad = (target_seq != PAD).astype(jnp.float32)[:, :, None]                # [B, Lt, 1]
    dec_enc_mask = jnp.broadcast_to((source_seq == PAD)[:, None, :], (b, lt, ls)).astype(jnp.float32)
    return self_mask, non_pad, dec_enc_mask


def decoder_model_forward(params, target_seq, target_position, source_seq,
                          encoder_output, num_head, dk, dv):
    b, lt = target_seq.shape
    ls = source_seq.shape[1]
    e = params["word_emb"].shape[1]
    packed = params["packed"]
    n_layers = packed["s_wqkv"].shape[0]

    self_mask, non_pad, dec_enc_mask = build_masks(target_seq, source_seq)

    x = (jnp.take(params["word_emb"], target_seq, axis=0)
         + jnp.take(params["pos_emb"], target_position, axis=0))                 # [B, Lt, E]
    x = x.reshape(b * lt, e).astype(jnp.float32)
    enc = encoder_output.reshape(b * ls, e).astype(jnp.float32)
    npad = non_pad.reshape(b * lt, 1)

    kern = functools.partial(decoder_kernel, B=b, LT=lt, LS=ls,
                             H=num_head, DK=dk, DV=dv)

    in_specs = [
        pl.BlockSpec((b * lt, e), lambda l: (0, 0)),       # embedded target
        pl.BlockSpec((b * ls, e), lambda l: (0, 0)),       # encoder output
        pl.BlockSpec((b, lt, lt), lambda l: (0, 0, 0)),    # self-attn mask
        pl.BlockSpec((b, lt, ls), lambda l: (0, 0, 0)),    # dec-enc mask
        pl.BlockSpec((b * lt, 1), lambda l: (0, 0)),       # non-pad mask
    ]
    weight_args = []
    for name in PACKED_FIELDS:                             # per-layer stacked weights
        arr = packed[name]
        in_specs.append(pl.BlockSpec((1,) + arr.shape[1:], lambda l: (l, 0, 0)))
        weight_args.append(arr)

    out = pl.pallas_call(
        kern,
        out_shape=jax.ShapeDtypeStruct((b * lt, e), jnp.float32),
        grid=(n_layers,),
        in_specs=in_specs,
        out_specs=pl.BlockSpec((b * lt, e), lambda l: (0, 0)),
        scratch_shapes=[pltpu.VMEM((b * lt, e), jnp.float32)],   # activation carry
        compiler_params=pltpu.CompilerParams(
            # layer axis is inherently sequential (activation carry)
            dimension_semantics=("arbitrary",),
        ),
    )(x, enc, self_mask, dec_enc_mask, npad, *weight_args)
    return out.reshape(b, lt, e)


# --------------------------------------------------------------------------
# Deterministic parameter construction + packing
# --------------------------------------------------------------------------
def sinusoid_table(max_len, dim, padding_idx=None):
    pos = np.arange(max_len)[:, None].astype(np.float64)
    j = np.arange(dim)[None, :]
    angle = pos / np.power(10000.0, 2 * (j // 2) / dim)
    table = np.zeros((max_len, dim), dtype=np.float64)
    table[:, 0::2] = np.sin(angle[:, 0::2])
    table[:, 1::2] = np.cos(angle[:, 1::2])
    if padding_idx is not None:
        table[padding_idx] = 0.0
    return jnp.asarray(table, jnp.float32)


def init_mha_params(key, e, h, dk, dv):
    ks = jax.random.split(key, 7)
    qk_std = np.sqrt(2.0 / (e + dk))
    v_std = np.sqrt(2.0 / (e + dv))
    fc_std = np.sqrt(2.0 / (h * dv + e))
    return {
        "wq": jax.random.normal(ks[0], (e, h * dk), jnp.float32) * qk_std,
        "bq": jax.random.normal(ks[1], (h * dk,), jnp.float32) * 0.02,
        "wk": jax.random.normal(ks[2], (e, h * dk), jnp.float32) * qk_std,
        "bk": jax.random.normal(ks[3], (h * dk,), jnp.float32) * 0.02,
        "wv": jax.random.normal(ks[4], (e, h * dv), jnp.float32) * v_std,
        "bv": jax.random.normal(ks[5], (h * dv,), jnp.float32) * 0.02,
        "wfc": jax.random.normal(ks[6], (h * dv, e), jnp.float32) * fc_std,
        "bfc": jnp.zeros((e,), jnp.float32),
        "ln_g": jnp.ones((e,), jnp.float32),
        "ln_b": jnp.zeros((e,), jnp.float32),
    }


def init_ffn_params(key, e, inter):
    k1, k2 = jax.random.split(key, 2)
    return {
        "w1": jax.random.normal(k1, (e, inter), jnp.float32) * np.sqrt(2.0 / (e + inter)),
        "b1": jnp.zeros((inter,), jnp.float32),
        "w2": jax.random.normal(k2, (inter, e), jnp.float32) * np.sqrt(2.0 / (e + inter)),
        "b2": jnp.zeros((e,), jnp.float32),
        "ln_g": jnp.ones((e,), jnp.float32),
        "ln_b": jnp.zeros((e,), jnp.float32),
    }


def pack_layers(layers):
    """Stack per-layer params with a leading layer axis; fuse QKV / KV weights."""
    def stk(fn):
        return jnp.stack([fn(lp) for lp in layers], axis=0)
    sa = lambda lp: lp["self_attn"]
    ca = lambda lp: lp["cross_attn"]
    ff = lambda lp: lp["ffn"]
    return {
        "s_wqkv": stk(lambda lp: jnp.concatenate([sa(lp)["wq"], sa(lp)["wk"], sa(lp)["wv"]], axis=1)),
        "s_bqkv": stk(lambda lp: jnp.concatenate([sa(lp)["bq"], sa(lp)["bk"], sa(lp)["bv"]])[None, :]),
        "s_wfc": stk(lambda lp: sa(lp)["wfc"]),
        "s_bfc": stk(lambda lp: sa(lp)["bfc"][None, :]),
        "s_lg":  stk(lambda lp: sa(lp)["ln_g"][None, :]),
        "s_lb":  stk(lambda lp: sa(lp)["ln_b"][None, :]),
        "c_wq":  stk(lambda lp: ca(lp)["wq"]),
        "c_bq":  stk(lambda lp: ca(lp)["bq"][None, :]),
        "c_wkv": stk(lambda lp: jnp.concatenate([ca(lp)["wk"], ca(lp)["wv"]], axis=1)),
        "c_bkv": stk(lambda lp: jnp.concatenate([ca(lp)["bk"], ca(lp)["bv"]])[None, :]),
        "c_wfc": stk(lambda lp: ca(lp)["wfc"]),
        "c_bfc": stk(lambda lp: ca(lp)["bfc"][None, :]),
        "c_lg":  stk(lambda lp: ca(lp)["ln_g"][None, :]),
        "c_lb":  stk(lambda lp: ca(lp)["ln_b"][None, :]),
        "f_w1":  stk(lambda lp: ff(lp)["w1"]),
        "f_b1":  stk(lambda lp: ff(lp)["b1"][None, :]),
        "f_w2":  stk(lambda lp: ff(lp)["w2"]),
        "f_b2":  stk(lambda lp: ff(lp)["b2"][None, :]),
        "f_lg":  stk(lambda lp: ff(lp)["ln_g"][None, :]),
        "f_lb":  stk(lambda lp: ff(lp)["ln_b"][None, :]),
    }


def init_decoder_params(key, vocab, max_len, e, n_layers, h, dk, dv, inter):
    kw, *kls = jax.random.split(key, 1 + n_layers)
    word_emb = jax.random.normal(kw, (vocab, e), jnp.float32) * 0.1
    word_emb = word_emb.at[PAD].set(0.0)                     # padding_idx
    layers = []
    for kl in kls:
        ka, kb, kc = jax.random.split(kl, 3)
        layers.append({
            "self_attn": init_mha_params(ka, e, h, dk, dv),
            "cross_attn": init_mha_params(kb, e, h, dk, dv),
            "ffn": init_ffn_params(kc, e, inter),
        })
    return {
        "word_emb": word_emb,
        "pos_emb": sinusoid_table(max_len, e, padding_idx=PAD_POSITION),
        "packed": pack_layers(layers),
    }


# --------------------------------------------------------------------------
if __name__ == "__main__":
    B, LT, LS = 2, 8, 8
    VOCAB, E, H, DK, DV, FF, NLAYERS, MAXLEN = 50, 32, 2, 16, 16, 64, 2, 16

    key = jax.random.PRNGKey(0)
    k_tgt, k_src, k_enc, k_par = jax.random.split(key, 4)

    target_seq = jax.random.randint(k_tgt, (B, LT), 1, VOCAB)
    target_seq = target_seq.at[1, -2:].set(PAD)              # trailing pads in batch 1
    source_seq = jax.random.randint(k_src, (B, LS), 1, VOCAB)
    source_seq = source_seq.at[0, -1].set(PAD)               # trailing pad in batch 0
    target_position = jnp.where(target_seq != PAD,
                                jnp.arange(1, LT + 1, dtype=jnp.int32)[None, :],
                                PAD_POSITION)
    encoder_output = jax.random.normal(k_enc, (B, LS, E), jnp.float32)

    params = init_decoder_params(k_par, VOCAB, MAXLEN, E, NLAYERS, H, DK, DV, FF)

    out = decoder_model_forward(params, target_seq, target_position,
                                source_seq, encoder_output, H, DK, DV)
    out = jax.block_until_ready(out)
    assert out.shape == (B, LT, E)
    assert bool(jnp.all(jnp.isfinite(out)))
    print("KERNEL_OK")
</pallas_src>

<mosaic_0001>
module attributes {stable_mosaic.version = 11 : i64} {
  func.func @decoder_kernel(%arg0: i32, %arg1: memref<16x32xf32, #tpu.memory_space<vmem>>, %arg2: memref<16x32xf32, #tpu.memory_space<vmem>>, %arg3: memref<2x8x8xf32, #tpu.memory_space<vmem>>, %arg4: memref<2x8x8xf32, #tpu.memory_space<vmem>>, %arg5: memref<16x1xf32, #tpu.memory_space<vmem>>, %arg6: memref<1x32x96xf32, #tpu.memory_space<vmem>>, %arg7: memref<1x1x96xf32, #tpu.memory_space<vmem>>, %arg8: memref<1x32x32xf32, #tpu.memory_space<vmem>>, %arg9: memref<1x1x32xf32, #tpu.memory_space<vmem>>, %arg10: memref<1x1x32xf32, #tpu.memory_space<vmem>>, %arg11: memref<1x1x32xf32, #tpu.memory_space<vmem>>, %arg12: memref<1x32x32xf32, #tpu.memory_space<vmem>>, %arg13: memref<1x1x32xf32, #tpu.memory_space<vmem>>, %arg14: memref<1x32x64xf32, #tpu.memory_space<vmem>>, %arg15: memref<1x1x64xf32, #tpu.memory_space<vmem>>, %arg16: memref<1x32x32xf32, #tpu.memory_space<vmem>>, %arg17: memref<1x1x32xf32, #tpu.memory_space<vmem>>, %arg18: memref<1x1x32xf32, #tpu.memory_space<vmem>>, %arg19: memref<1x1x32xf32, #tpu.memory_space<vmem>>, %arg20: memref<1x32x64xf32, #tpu.memory_space<vmem>>, %arg21: memref<1x1x64xf32, #tpu.memory_space<vmem>>, %arg22: memref<1x64x32xf32, #tpu.memory_space<vmem>>, %arg23: memref<1x1x32xf32, #tpu.memory_space<vmem>>, %arg24: memref<1x1x32xf32, #tpu.memory_space<vmem>>, %arg25: memref<1x1x32xf32, #tpu.memory_space<vmem>>, %arg26: memref<16x32xf32, #tpu.memory_space<vmem>>, %arg27: memref<16x32xf32, #tpu.memory_space<vmem>>) attributes {dimension_semantics = [#tpu.dimension_semantics<arbitrary>], iteration_bounds = array<i64: 2>, scalar_prefetch = 0 : i64, scratch_operands = 1 : i64, tpu.core_type = #tpu.core_type<tc>, window_params = [{pipeline_mode = #tpu.pipeline_mode<synchronous>, transform_indices = @transform_0, window_bounds = array<i64: 16, 32>}, {pipeline_mode = #tpu.pipeline_mode<synchronous>, transform_indices = @transform_1, window_bounds = array<i64: 16, 32>}, {pipeline_mode = #tpu.pipeline_mode<synchronous>, transform_indices = @transform_2, window_bounds = array<i64: 2, 8, 8>}, {pipeline_mode = #tpu.pipeline_mode<synchronous>, transform_indices = @transform_3, window_bounds = array<i64: 2, 8, 8>}, {pipeline_mode = #tpu.pipeline_mode<synchronous>, transform_indices = @transform_4, window_bounds = array<i64: 16, 1>}, {transform_indices = @transform_5, window_bounds = array<i64: 1, 32, 96>}, {transform_indices = @transform_6, window_bounds = array<i64: 1, 1, 96>}, {transform_indices = @transform_7, window_bounds = array<i64: 1, 32, 32>}, {transform_indices = @transform_8, window_bounds = array<i64: 1, 1, 32>}, {transform_indices = @transform_9, window_bounds = array<i64: 1, 1, 32>}, {transform_indices = @transform_10, window_bounds = array<i64: 1, 1, 32>}, {transform_indices = @transform_11, window_bounds = array<i64: 1, 32, 32>}, {transform_indices = @transform_12, window_bounds = array<i64: 1, 1, 32>}, {transform_indices = @transform_13, window_bounds = array<i64: 1, 32, 64>}, {transform_indices = @transform_14, window_bounds = array<i64: 1, 1, 64>}, {transform_indices = @transform_15, window_bounds = array<i64: 1, 32, 32>}, {transform_indices = @transform_16, window_bounds = array<i64: 1, 1, 32>}, {transform_indices = @transform_17, window_bounds = array<i64: 1, 1, 32>}, {transform_indices = @transform_18, window_bounds = array<i64: 1, 1, 32>}, {transform_indices = @transform_19, window_bounds = array<i64: 1, 32, 64>}, {transform_indices = @transform_20, window_bounds = array<i64: 1, 1, 64>}, {transform_indices = @transform_21, window_bounds = array<i64: 1, 64, 32>}, {transform_indices = @transform_22, window_bounds = array<i64: 1, 1, 32>}, {transform_indices = @transform_23, window_bounds = array<i64: 1, 1, 32>}, {transform_indices = @transform_24, window_bounds = array<i64: 1, 1, 32>}, {pipeline_mode = #tpu.pipeline_mode<synchronous>, transform_indices = @transform_25, window_bounds = array<i64: 16, 32>}]} {
    %c0_i32 = arith.constant 0 : i32
    %0 = arith.cmpi eq, %arg0, %c0_i32 : i32
    %1 = arith.extui %0 : i1 to i32
    %c0_i32_0 = arith.constant 0 : i32
    %2 = arith.cmpi ne, %1, %c0_i32_0 : i32
    scf.if %2 {
      %c0_156 = arith.constant 0 : index
      %c0_157 = arith.constant 0 : index
      %361 = vector.load %arg1[%c0_156, %c0_157] : memref<16x32xf32, #tpu.memory_space<vmem>>, vector<16x32xf32>
      %c0_158 = arith.constant 0 : index
      %c0_159 = arith.constant 0 : index
      %362 = vector.load %arg27[%c0_158, %c0_159] : memref<16x32xf32, #tpu.memory_space<vmem>>, vector<16x32xf32>
      tpu.vector_store %arg27[%c0_158, %c0_159], %361 {strides = array<i32>} : memref<16x32xf32, #tpu.memory_space<vmem>>, vector<16x32xf32>,
    } else {
    }
    %c0 = arith.constant 0 : index
    %c0_1 = arith.constant 0 : index
    %3 = vector.load %arg27[%c0, %c0_1] : memref<16x32xf32, #tpu.memory_space<vmem>>, vector<16x32xf32>
    %c0_2 = arith.constant 0 : index
    %c0_3 = arith.constant 0 : index
    %4 = vector.load %arg2[%c0_2, %c0_3] : memref<16x32xf32, #tpu.memory_space<vmem>>, vector<16x32xf32>
    %c0_4 = arith.constant 0 : index
    %c0_5 = arith.constant 0 : index
    %c0_6 = arith.constant 0 : index
    %5 = vector.load %arg3[%c0_4, %c0_5, %c0_6] : memref<2x8x8xf32, #tpu.memory_space<vmem>>, vector<2x8x8xf32>
    %c0_7 = arith.constant 0 : index
    %c0_8 = arith.constant 0 : index
    %c0_9 = arith.constant 0 : index
    %6 = vector.load %arg4[%c0_7, %c0_8, %c0_9] : memref<2x8x8xf32, #tpu.memory_space<vmem>>, vector<2x8x8xf32>
    %c0_10 = arith.constant 0 : index
    %c0_11 = arith.constant 0 : index
    %7 = vector.load %arg5[%c0_10, %c0_11] : memref<16x1xf32, #tpu.memory_space<vmem>>, vector<16x1xf32>
    %c0_12 = arith.constant 0 : index
    %c0_13 = arith.constant 0 : index
    %c0_14 = arith.constant 0 : index
    %8 = vector.load %arg6[%c0_12, %c0_13, %c0_14] : memref<1x32x96xf32, #tpu.memory_space<vmem>>, vector<1x32x96xf32>
    %9 = vector.shape_cast %8 : vector<1x32x96xf32> to vector<32x96xf32>
    %cst = arith.constant dense<0.000000e+00> : vector<16x96xf32>
    %10 = tpu.matmul %3, %9, %cst {dimension_numbers = #tpu.dot_dimension_numbers<[1], [0], [0], [1], [0, 0, 1, 1], [], []>} : vector<16x32xf32>, vector<32x96xf32>, vector<16x96xf32> -> vector<16x96xf32>
    %c0_15 = arith.constant 0 : index
    %c0_16 = arith.constant 0 : index
    %c0_17 = arith.constant 0 : index
    %11 = vector.load %arg7[%c0_15, %c0_16, %c0_17] : memref<1x1x96xf32, #tpu.memory_space<vmem>>, vector<1x1x96xf32>
    %12 = vector.shape_cast %11 : vector<1x1x96xf32> to vector<1x96xf32>
    %13 = vector.broadcast %12 : vector<1x96xf32> to vector<16x96xf32>
    %14 = arith.addf %10, %13 : vector<16x96xf32>
    %15 = vector.extract_strided_slice %14 {offsets = [0, 0], sizes = [16, 32], strides = [1, 1]} : vector<16x96xf32> to vector<16x32xf32>
    %16 = vector.extract_strided_slice %14 {offsets = [0, 32], sizes = [16, 32], strides = [1, 1]} : vector<16x96xf32> to vector<16x32xf32>
    %17 = vector.extract_strided_slice %14 {offsets = [0, 64], sizes = [16, 32], strides = [1, 1]} : vector<16x96xf32> to vector<16x32xf32>
    %18 = vector.extract_strided_slice %15 {offsets = [0, 0], sizes = [16, 16], strides = [1, 1]} : vector<16x32xf32> to vector<16x16xf32>
    %19 = vector.extract_strided_slice %16 {offsets = [0, 0], sizes = [16, 16], strides = [1, 1]} : vector<16x32xf32> to vector<16x16xf32>
    %20 = vector.extract_strided_slice %17 {offsets = [0, 0], sizes = [16, 16], strides = [1, 1]} : vector<16x32xf32> to vector<16x16xf32>
    %21 = vector.extract_strided_slice %18 {offsets = [0, 0], sizes = [8, 16], strides = [1, 1]} : vector<16x16xf32> to vector<8x16xf32>
    %22 = vector.extract_strided_slice %19 {offsets = [0, 0], sizes = [8, 16], strides = [1, 1]} : vector<16x16xf32> to vector<8x16xf32>
    %23 = vector.extract_strided_slice %20 {offsets = [0, 0], sizes = [8, 16], strides = [1, 1]} : vector<16x16xf32> to vector<8x16xf32>
    %24 = vector.extract_strided_slice %5 {offsets = [0, 0, 0], sizes = [1, 8, 8], strides = [1, 1, 1]} : vector<2x8x8xf32> to vector<1x8x8xf32>
    %25 = vector.shape_cast %24 : vector<1x8x8xf32> to vector<8x8xf32>
    %cst_18 = arith.constant dense<0.000000e+00> : vector<8x8xf32>
    %26 = tpu.matmul %21, %22, %cst_18 {dimension_numbers = #tpu.dot_dimension_numbers<[1], [1], [0], [0], [0, 0, 1, 0], [], []>} : vector<8x16xf32>, vector<8x16xf32>, vector<8x8xf32> -> vector<8x8xf32>
    %cst_19 = arith.constant 2.500000e-01 : f32
    %27 = vector.broadcast %cst_19 : f32 to vector<8x8xf32>
    %28 = arith.mulf %26, %27 : vector<8x8xf32>
    %cst_20 = arith.constant 0.000000e+00 : f32
    %29 = vector.broadcast %cst_20 : f32 to vector<8x8xf32>
    %30 = arith.cmpf ogt, %25, %29 : vector<8x8xf32>
    %cst_21 = arith.constant -1.000000e+30 : f32
    %31 = vector.broadcast %cst_21 : f32 to vector<8x8xf32>
    %32 = arith.select %30, %31, %28 : vector<8x8xi1>, vector<8x8xf32>
    %cst_22 = arith.constant dense<0xFF800000> : vector<8xf32>
    %33 = vector.multi_reduction <maximumf>, %32, %cst_22 [1] : vector<8x8xf32> to vector<8xf32>
    %34 = vector.shape_cast %33 : vector<8xf32> to vector<8x1xf32>
    %35 = vector.broadcast %34 : vector<8x1xf32> to vector<8x8xf32>
    %36 = arith.subf %32, %35 : vector<8x8xf32>
    %37 = math.exp %36 : vector<8x8xf32>
    %cst_23 = arith.constant dense<0.000000e+00> : vector<8xf32>
    %38 = vector.multi_reduction <add>, %37, %cst_23 [1] : vector<8x8xf32> to vector<8xf32>
    %39 = vector.shape_cast %38 : vector<8xf32> to vector<8x1xf32>
    %40 = tpu.reciprocal %39 : vector<8x1xf32> -> vector<8x1xf32>
    %41 = vector.broadcast %40 : vector<8x1xf32> to vector<8x8xf32>
    %42 = arith.mulf %37, %41 : vector<8x8xf32>
    %cst_24 = arith.constant dense<0.000000e+00> : vector<8x16xf32>
    %43 = tpu.matmul %42, %23, %cst_24 {dimension_numbers = #tpu.dot_dimension_numbers<[1], [0], [0], [1], [0, 0, 1, 1], [], []>} : vector<8x8xf32>, vector<8x16xf32>, vector<8x16xf32> -> vector<8x16xf32>
    %44 = vector.extract_strided_slice %18 {offsets = [8, 0], sizes = [8, 16], strides = [1, 1]} : vector<16x16xf32> to vector<8x16xf32>
    %45 = vector.extract_strided_slice %19 {offsets = [8, 0], sizes = [8, 16], strides = [1, 1]} : vector<16x16xf32> to vector<8x16xf32>
    %46 = vector.extract_strided_slice %20 {offsets = [8, 0], sizes = [8, 16], strides = [1, 1]} : vector<16x16xf32> to vector<8x16xf32>
    %47 = vector.extract_strided_slice %5 {offsets = [1, 0, 0], sizes = [1, 8, 8], strides = [1, 1, 1]} : vector<2x8x8xf32> to vector<1x8x8xf32>
    %48 = vector.shape_cast %47 : vector<1x8x8xf32> to vector<8x8xf32>
    %cst_25 = arith.constant dense<0.000000e+00> : vector<8x8xf32>
    %49 = tpu.matmul %44, %45, %cst_25 {dimension_numbers = #tpu.dot_dimension_numbers<[1], [1], [0], [0], [0, 0, 1, 0], [], []>} : vector<8x16xf32>, vector<8x16xf32>, vector<8x8xf32> -> vector<8x8xf32>
    %cst_26 = arith.constant 2.500000e-01 : f32
    %50 = vector.broadcast %cst_26 : f32 to vector<8x8xf32>
    %51 = arith.mulf %49, %50 : vector<8x8xf32>
    %cst_27 = arith.constant 0.000000e+00 : f32
    %52 = vector.broadcast %cst_27 : f32 to vector<8x8xf32>
    %53 = arith.cmpf ogt, %48, %52 : vector<8x8xf32>
    %cst_28 = arith.constant -1.000000e+30 : f32
    %54 = vector.broadcast %cst_28 : f32 to vector<8x8xf32>
    %55 = arith.select %53, %54, %51 : vector<8x8xi1>, vector<8x8xf32>
    %cst_29 = arith.constant dense<0xFF800000> : vector<8xf32>
    %56 = vector.multi_reduction <maximumf>, %55, %cst_29 [1] : vector<8x8xf32> to vector<8xf32>
    %57 = vector.shape_cast %56 : vector<8xf32> to vector<8x1xf32>
    %58 = vector.broadcast %57 : vector<8x1xf32> to vector<8x8xf32>
    %59 = arith.subf %55, %58 : vector<8x8xf32>
    %60 = math.exp %59 : vector<8x8xf32>
    %cst_30 = arith.constant dense<0.000000e+00> : vector<8xf32>
    %61 = vector.multi_reduction <add>, %60, %cst_30 [1] : vector<8x8xf32> to vector<8xf32>
    %62 = vector.shape_cast %61 : vector<8xf32> to vector<8x1xf32>
    %63 = tpu.reciprocal %62 : vector<8x1xf32> -> vector<8x1xf32>
    %64 = vector.broadcast %63 : vector<8x1xf32> to vector<8x8xf32>
    %65 = arith.mulf %60, %64 : vector<8x8xf32>
    %cst_31 = arith.constant dense<0.000000e+00> : vector<8x16xf32>
    %66 = tpu.matmul %65, %46, %cst_31 {dimension_numbers = #tpu.dot_dimension_numbers<[1], [0], [0], [1], [0, 0, 1, 1], [], []>} : vector<8x8xf32>, vector<8x16xf32>, vector<8x16xf32> -> vector<8x16xf32>
    %67 = tpu.concatenate %43, %66 in 0 : vector<8x16xf32>, vector<8x16xf32> -> vector<16x16xf32>
    %68 = vector.extract_strided_slice %15 {offsets = [0, 16], sizes = [16, 16], strides = [1, 1]} : vector<16x32xf32> to vector<16x16xf32>
    %69 = vector.extract_strided_slice %16 {offsets = [0, 16], sizes = [16, 16], strides = [1, 1]} : vector<16x32xf32> to vector<16x16xf32>
    %70 = vector.extract_strided_slice %17 {offsets = [0, 16], sizes = [16, 16], strides = [1, 1]} : vector<16x32xf32> to vector<16x16xf32>
    %71 = vector.extract_strided_slice %68 {offsets = [0, 0], sizes = [8, 16], strides = [1, 1]} : vector<16x16xf32> to vector<8x16xf32>
    %72 = vector.extract_strided_slice %69 {offsets = [0, 0], sizes = [8, 16], strides = [1, 1]} : vector<16x16xf32> to vector<8x16xf32>
    %73 = vector.extract_strided_slice %70 {offsets = [0, 0], sizes = [8, 16], strides = [1, 1]} : vector<16x16xf32> to vector<8x16xf32>
    %74 = vector.extract_strided_slice %5 {offsets = [0, 0, 0], sizes = [1, 8, 8], strides = [1, 1, 1]} : vector<2x8x8xf32> to vector<1x8x8xf32>
    %75 = vector.shape_cast %74 : vector<1x8x8xf32> to vector<8x8xf32>
    %cst_32 = arith.constant dense<0.000000e+00> : vector<8x8xf32>
    %76 = tpu.matmul %71, %72, %cst_32 {dimension_numbers = #tpu.dot_dimension_numbers<[1], [1], [0], [0], [0, 0, 1, 0], [], []>} : vector<8x16xf32>, vector<8x16xf32>, vector<8x8xf32> -> vector<8x8xf32>
    %cst_33 = arith.constant 2.500000e-01 : f32
    %77 = vector.broadcast %cst_33 : f32 to vector<8x8xf32>
    %78 = arith.mulf %76, %77 : vector<8x8xf32>
    %cst_34 = arith.constant 0.000000e+00 : f32
    %79 = vector.broadcast %cst_34 : f32 to vector<8x8xf32>
    %80 = arith.cmpf ogt, %75, %79 : vector<8x8xf32>
    %cst_35 = arith.constant -1.000000e+30 : f32
    %81 = vector.broadcast %cst_35 : f32 to vector<8x8xf32>
    %82 = arith.select %80, %81, %78 : vector<8x8xi1>, vector<8x8xf32>
    %cst_36 = arith.constant dense<0xFF800000> : vector<8xf32>
    %83 = vector.multi_reduction <maximumf>, %82, %cst_36 [1] : vector<8x8xf32> to vector<8xf32>
    %84 = vector.shape_cast %83 : vector<8xf32> to vector<8x1xf32>
    %85 = vector.broadcast %84 : vector<8x1xf32> to vector<8x8xf32>
    %86 = arith.subf %82, %85 : vector<8x8xf32>
    %87 = math.exp %86 : vector<8x8xf32>
    %cst_37 = arith.constant dense<0.000000e+00> : vector<8xf32>
    %88 = vector.multi_reduction <add>, %87, %cst_37 [1] : vector<8x8xf32> to vector<8xf32>
    %89 = vector.shape_cast %88 : vector<8xf32> to vector<8x1xf32>
    %90 = tpu.reciprocal %89 : vector<8x1xf32> -> vector<8x1xf32>
    %91 = vector.broadcast %90 : vector<8x1xf32> to vector<8x8xf32>
    %92 = arith.mulf %87, %91 : vector<8x8xf32>
    %cst_38 = arith.constant dense<0.000000e+00> : vector<8x16xf32>
    %93 = tpu.matmul %92, %73, %cst_38 {dimension_numbers = #tpu.dot_dimension_numbers<[1], [0], [0], [1], [0, 0, 1, 1], [], []>} : vector<8x8xf32>, vector<8x16xf32>, vector<8x16xf32> -> vector<8x16xf32>
    %94 = vector.extract_strided_slice %68 {offsets = [8, 0], sizes = [8, 16], strides = [1, 1]} : vector<16x16xf32> to vector<8x16xf32>
    %95 = vector.extract_strided_slice %69 {offsets = [8, 0], sizes = [8, 16], strides = [1, 1]} : vector<16x16xf32> to vector<8x16xf32>
    %96 = vector.extract_strided_slice %70 {offsets = [8, 0], sizes = [8, 16], strides = [1, 1]} : vector<16x16xf32> to vector<8x16xf32>
    %97 = vector.extract_strided_slice %5 {offsets = [1, 0, 0], sizes = [1, 8, 8], strides = [1, 1, 1]} : vector<2x8x8xf32> to vector<1x8x8xf32>
    %98 = vector.shape_cast %97 : vector<1x8x8xf32> to vector<8x8xf32>
    %cst_39 = arith.constant dense<0.000000e+00> : vector<8x8xf32>
    %99 = tpu.matmul %94, %95, %cst_39 {dimension_numbers = #tpu.dot_dimension_numbers<[1], [1], [0], [0], [0, 0, 1, 0], [], []>} : vector<8x16xf32>, vector<8x16xf32>, vector<8x8xf32> -> vector<8x8xf32>
    %cst_40 = arith.constant 2.500000e-01 : f32
    %100 = vector.broadcast %cst_40 : f32 to vector<8x8xf32>
    %101 = arith.mulf %99, %100 : vector<8x8xf32>
    %cst_41 = arith.constant 0.000000e+00 : f32
    %102 = vector.broadcast %cst_41 : f32 to vector<8x8xf32>
    %103 = arith.cmpf ogt, %98, %102 : vector<8x8xf32>
    %cst_42 = arith.constant -1.000000e+30 : f32
    %104 = vector.broadcast %cst_42 : f32 to vector<8x8xf32>
    %105 = arith.select %103, %104, %101 : vector<8x8xi1>, vector<8x8xf32>
    %cst_43 = arith.constant dense<0xFF800000> : vector<8xf32>
    %106 = vector.multi_reduction <maximumf>, %105, %cst_43 [1] : vector<8x8xf32> to vector<8xf32>
    %107 = vector.shape_cast %106 : vector<8xf32> to vector<8x1xf32>
    %108 = vector.broadcast %107 : vector<8x1xf32> to vector<8x8xf32>
    %109 = arith.subf %105, %108 : vector<8x8xf32>
    %110 = math.exp %109 : vector<8x8xf32>
    %cst_44 = arith.constant dense<0.000000e+00> : vector<8xf32>
    %111 = vector.multi_reduction <add>, %110, %cst_44 [1] : vector<8x8xf32> to vector<8xf32>
    %112 = vector.shape_cast %111 : vector<8xf32> to vector<8x1xf32>
    %113 = tpu.reciprocal %112 : vector<8x1xf32> -> vector<8x1xf32>
    %114 = vector.broadcast %113 : vector<8x1xf32> to vector<8x8xf32>
    %115 = arith.mulf %110, %114 : vector<8x8xf32>
    %cst_45 = arith.constant dense<0.000000e+00> : vector<8x16xf32>
    %116 = tpu.matmul %115, %96, %cst_45 {dimension_numbers = #tpu.dot_dimension_numbers<[1], [0], [0], [1], [0, 0, 1, 1], [], []>} : vector<8x8xf32>, vector<8x16xf32>, vector<8x16xf32> -> vector<8x16xf32>
    %117 = tpu.concatenate %93, %116 in 0 : vector<8x16xf32>, vector<8x16xf32> -> vector<16x16xf32>
    %c0_46 = arith.constant 0 : index
    %c0_47 = arith.constant 0 : index
    %c0_48 = arith.constant 0 : index
    %118 = vector.load %arg8[%c0_46, %c0_47, %c0_48] : memref<1x32x32xf32, #tpu.memory_space<vmem>>, vector<1x32x32xf32>
    %119 = vector.shape_cast %118 : vector<1x32x32xf32> to vector<32x32xf32>
    %c0_49 = arith.constant 0 : index
    %c0_50 = arith.constant 0 : index
    %c0_51 = arith.constant 0 : index
    %120 = vector.load %arg9[%c0_49, %c0_50, %c0_51] : memref<1x1x32xf32, #tpu.memory_space<vmem>>, vector<1x1x32xf32>
    %121 = vector.shape_cast %120 : vector<1x1x32xf32> to vector<1x32xf32>
    %c0_52 = arith.constant 0 : index
    %c0_53 = arith.constant 0 : index
    %c0_54 = arith.constant 0 : index
    %122 = vector.load %arg10[%c0_52, %c0_53, %c0_54] : memref<1x1x32xf32, #tpu.memory_space<vmem>>, vector<1x1x32xf32>
    %123 = vector.shape_cast %122 : vector<1x1x32xf32> to vector<1x32xf32>
    %c0_55 = arith.constant 0 : index
    %c0_56 = arith.constant 0 : index
    %c0_57 = arith.constant 0 : index
    %124 = vector.load %arg11[%c0_55, %c0_56, %c0_57] : memref<1x1x32xf32, #tpu.memory_space<vmem>>, vector<1x1x32xf32>
    %125 = vector.shape_cast %124 : vector<1x1x32xf32> to vector<1x32xf32>
    %126 = vector.broadcast %121 : vector<1x32xf32> to vector<16x32xf32>
    %127 = arith.addf %3, %126 : vector<16x32xf32>
    %128 = vector.extract_strided_slice %119 {offsets = [0, 0], sizes = [16, 32], strides = [1, 1]} : vector<32x32xf32> to vector<16x32xf32>
    %cst_58 = arith.constant dense<0.000000e+00> : vector<16x32xf32>
    %129 = tpu.matmul %67, %128, %cst_58 {dimension_numbers = #tpu.dot_dimension_numbers<[1], [0], [0], [1], [0, 0, 1, 1], [], []>} : vector<16x16xf32>, vector<16x32xf32>, vector<16x32xf32> -> vector<16x32xf32>
    %130 = arith.addf %127, %129 : vector<16x32xf32>
    %131 = vector.extract_strided_slice %119 {offsets = [16, 0], sizes = [16, 32], strides = [1, 1]} : vector<32x32xf32> to vector<16x32xf32>
    %cst_59 = arith.constant dense<0.000000e+00> : vector<16x32xf32>
    %132 = tpu.matmul %117, %131, %cst_59 {dimension_numbers = #tpu.dot_dimension_numbers<[1], [0], [0], [1], [0, 0, 1, 1], [], []>} : vector<16x16xf32>, vector<16x32xf32>, vector<16x32xf32> -> vector<16x32xf32>
    %133 = arith.addf %130, %132 : vector<16x32xf32>
    %cst_60 = arith.constant dense<0.000000e+00> : vector<16xf32>
    %134 = vector.multi_reduction <add>, %133, %cst_60 [1] : vector<16x32xf32> to vector<16xf32>
    %135 = vector.shape_cast %134 : vector<16xf32> to vector<16x1xf32>
    %cst_61 = arith.constant 3.200000e+01 : f32
    %136 = vector.broadcast %cst_61 : f32 to vector<16x1xf32>
    %137 = arith.divf %135, %136 : vector<16x1xf32>
    %138 = vector.broadcast %137 : vector<16x1xf32> to vector<16x32xf32>
    %139 = arith.subf %133, %138 : vector<16x32xf32>
    %140 = arith.mulf %139, %139 : vector<16x32xf32>
    %cst_62 = arith.constant dense<0.000000e+00> : vector<16xf32>
    %141 = vector.multi_reduction <add>, %140, %cst_62 [1] : vector<16x32xf32> to vector<16xf32>
    %142 = vector.shape_cast %141 : vector<16xf32> to vector<16x1xf32>
    %cst_63 = arith.constant 3.200000e+01 : f32
    %143 = vector.broadcast %cst_63 : f32 to vector<16x1xf32>
    %144 = arith.divf %142, %143 : vector<16x1xf32>
    %145 = vector.broadcast %137 : vector<16x1xf32> to vector<16x32xf32>
    %146 = arith.subf %133, %145 : vector<16x32xf32>
    %cst_64 = arith.constant 9.99999974E-6 : f32
    %147 = vector.broadcast %cst_64 : f32 to vector<16x1xf32>
    %148 = arith.addf %144, %147 : vector<16x1xf32>
    %149 = math.rsqrt %148 : vector<16x1xf32>
    %150 = vector.broadcast %149 : vector<16x1xf32> to vector<16x32xf32>
    %151 = arith.mulf %146, %150 : vector<16x32xf32>
    %152 = vector.broadcast %123 : vector<1x32xf32> to vector<16x32xf32>
    %153 = arith.mulf %151, %152 : vector<16x32xf32>
    %154 = vector.broadcast %125 : vector<1x32xf32> to vector<16x32xf32>
    %155 = arith.addf %153, %154 : vector<16x32xf32>
    %156 = vector.broadcast %7 : vector<16x1xf32> to vector<16x32xf32>
    %157 = arith.mulf %155, %156 : vector<16x32xf32>
    %c0_65 = arith.constant 0 : index
    %c0_66 = arith.constant 0 : index
    %c0_67 = arith.constant 0 : index
    %158 = vector.load %arg12[%c0_65, %c0_66, %c0_67] : memref<1x32x32xf32, #tpu.memory_space<vmem>>, vector<1x32x32xf32>
    %159 = vector.shape_cast %158 : vector<1x32x32xf32> to vector<32x32xf32>
    %cst_68 = arith.constant dense<0.000000e+00> : vector<16x32xf32>
    %160 = tpu.matmul %157, %159, %cst_68 {dimension_numbers = #tpu.dot_dimension_numbers<[1], [0], [0], [1], [0, 0, 1, 1], [], []>} : vector<16x32xf32>, vector<32x32xf32>, vector<16x32xf32> -> vector<16x32xf32>
    %c0_69 = arith.constant 0 : index
    %c0_70 = arith.constant 0 : index
    %c0_71 = arith.constant 0 : index
    %161 = vector.load %arg13[%c0_69, %c0_70, %c0_71] : memref<1x1x32xf32, #tpu.memory_space<vmem>>, vector<1x1x32xf32>
    %162 = vector.shape_cast %161 : vector<1x1x32xf32> to vector<1x32xf32>
    %163 = vector.broadcast %162 : vector<1x32xf32> to vector<16x32xf32>
    %164 = arith.addf %160, %163 : vector<16x32xf32>
    %c0_72 = arith.constant 0 : index
    %c0_73 = arith.constant 0 : index
    %c0_74 = arith.constant 0 : index
    %165 = vector.load %arg14[%c0_72, %c0_73, %c0_74] : memref<1x32x64xf32, #tpu.memory_space<vmem>>, vector<1x32x64xf32>
    %166 = vector.shape_cast %165 : vector<1x32x64xf32> to vector<32x64xf32>
    %cst_75 = arith.constant dense<0.000000e+00> : vector<16x64xf32>
    %167 = tpu.matmul %4, %166, %cst_75 {dimension_numbers = #tpu.dot_dimension_numbers<[1], [0], [0], [1], [0, 0, 1, 1], [], []>} : vector<16x32xf32>, vector<32x64xf32>, vector<16x64xf32> -> vector<16x64xf32>
    %c0_76 = arith.constant 0 : index
    %c0_77 = arith.constant 0 : index
    %c0_78 = arith.constant 0 : index
    %168 = vector.load %arg15[%c0_76, %c0_77, %c0_78] : memref<1x1x64xf32, #tpu.memory_space<vmem>>, vector<1x1x64xf32>
    %169 = vector.shape_cast %168 : vector<1x1x64xf32> to vector<1x64xf32>
    %170 = vector.broadcast %169 : vector<1x64xf32> to vector<16x64xf32>
    %171 = arith.addf %167, %170 : vector<16x64xf32>
    %172 = vector.extract_strided_slice %171 {offsets = [0, 0], sizes = [16, 32], strides = [1, 1]} : vector<16x64xf32> to vector<16x32xf32>
    %173 = vector.extract_strided_slice %171 {offsets = [0, 32], sizes = [16, 32], strides = [1, 1]} : vector<16x64xf32> to vector<16x32xf32>
    %174 = vector.extract_strided_slice %164 {offsets = [0, 0], sizes = [16, 16], strides = [1, 1]} : vector<16x32xf32> to vector<16x16xf32>
    %175 = vector.extract_strided_slice %172 {offsets = [0, 0], sizes = [16, 16], strides = [1, 1]} : vector<16x32xf32> to vector<16x16xf32>
    %176 = vector.extract_strided_slice %173 {offsets = [0, 0], sizes = [16, 16], strides = [1, 1]} : vector<16x32xf32> to vector<16x16xf32>
    %177 = vector.extract_strided_slice %174 {offsets = [0, 0], sizes = [8, 16], strides = [1, 1]} : vector<16x16xf32> to vector<8x16xf32>
    %178 = vector.extract_strided_slice %175 {offsets = [0, 0], sizes = [8, 16], strides = [1, 1]} : vector<16x16xf32> to vector<8x16xf32>
    %179 = vector.extract_strided_slice %176 {offsets = [0, 0], sizes = [8, 16], strides = [1, 1]} : vector<16x16xf32> to vector<8x16xf32>
    %180 = vector.extract_strided_slice %6 {offsets = [0, 0, 0], sizes = [1, 8, 8], strides = [1, 1, 1]} : vector<2x8x8xf32> to vector<1x8x8xf32>
    %181 = vector.shape_cast %180 : vector<1x8x8xf32> to vector<8x8xf32>
    %cst_79 = arith.constant dense<0.000000e+00> : vector<8x8xf32>
    %182 = tpu.matmul %177, %178, %cst_79 {dimension_numbers = #tpu.dot_dimension_numbers<[1], [1], [0], [0], [0, 0, 1, 0], [], []>} : vector<8x16xf32>, vector<8x16xf32>, vector<8x8xf32> -> vector<8x8xf32>
    %cst_80 = arith.constant 2.500000e-01 : f32
    %183 = vector.broadcast %cst_80 : f32 to vector<8x8xf32>
    %184 = arith.mulf %182, %183 : vector<8x8xf32>
    %cst_81 = arith.constant 0.000000e+00 : f32
    %185 = vector.broadcast %cst_81 : f32 to vector<8x8xf32>
    %186 = arith.cmpf ogt, %181, %185 : vector<8x8xf32>
    %cst_82 = arith.constant -1.000000e+30 : f32
    %187 = vector.broadcast %cst_82 : f32 to vector<8x8xf32>
    %188 = arith.select %186, %187, %184 : vector<8x8xi1>, vector<8x8xf32>
    %cst_83 = arith.constant dense<0xFF800000> : vector<8xf32>
    %189 = vector.multi_reduction <maximumf>, %188, %cst_83 [1] : vector<8x8xf32> to vector<8xf32>
    %190 = vector.shape_cast %189 : vector<8xf32> to vector<8x1xf32>
    %191 = vector.broadcast %190 : vector<8x1xf32> to vector<8x8xf32>
    %192 = arith.subf %188, %191 : vector<8x8xf32>
    %193 = math.exp %192 : vector<8x8xf32>
    %cst_84 = arith.constant dense<0.000000e+00> : vector<8xf32>
    %194 = vector.multi_reduction <add>, %193, %cst_84 [1] : vector<8x8xf32> to vector<8xf32>
    %195 = vector.shape_cast %194 : vector<8xf32> to vector<8x1xf32>
    %196 = tpu.reciprocal %195 : vector<8x1xf32> -> vector<8x1xf32>
    %197 = vector.broadcast %196 : vector<8x1xf32> to vector<8x8xf32>
    %198 = arith.mulf %193, %197 : vector<8x8xf32>
    %cst_85 = arith.constant dense<0.000000e+00> : vector<8x16xf32>
    %199 = tpu.matmul %198, %179, %cst_85 {dimension_numbers = #tpu.dot_dimension_numbers<[1], [0], [0], [1], [0, 0, 1, 1], [], []>} : vector<8x8xf32>, vector<8x16xf32>, vector<8x16xf32> -> vector<8x16xf32>
    %200 = vector.extract_strided_slice %174 {offsets = [8, 0], sizes = [8, 16], strides = [1, 1]} : vector<16x16xf32> to vector<8x16xf32>
    %201 = vector.extract_strided_slice %175 {offsets = [8, 0], sizes = [8, 16], strides = [1, 1]} : vector<16x16xf32> to vector<8x16xf32>
    %202 = vector.extract_strided_slice %176 {offsets = [8, 0], sizes = [8, 16], strides = [1, 1]} : vector<16x16xf32> to vector<8x16xf32>
    %203 = vector.extract_strided_slice %6 {offsets = [1, 0, 0], sizes = [1, 8, 8], strides = [1, 1, 1]} : vector<2x8x8xf32> to vector<1x8x8xf32>
    %204 = vector.shape_cast %203 : vector<1x8x8xf32> to vector<8x8xf32>
    %cst_86 = arith.constant dense<0.000000e+00> : vector<8x8xf32>
    %205 = tpu.matmul %200, %201, %cst_86 {dimension_numbers = #tpu.dot_dimension_numbers<[1], [1], [0], [0], [0, 0, 1, 0], [], []>} : vector<8x16xf32>, vector<8x16xf32>, vector<8x8xf32> -> vector<8x8xf32>
    %cst_87 = arith.constant 2.500000e-01 : f32
    %206 = vector.broadcast %cst_87 : f32 to vector<8x8xf32>
    %207 = arith.mulf %205, %206 : vector<8x8xf32>
    %cst_88 = arith.constant 0.000000e+00 : f32
    %208 = vector.broadcast %cst_88 : f32 to vector<8x8xf32>
    %209 = arith.cmpf ogt, %204, %208 : vector<8x8xf32>
    %cst_89 = arith.constant -1.000000e+30 : f32
    %210 = vector.broadcast %cst_89 : f32 to vector<8x8xf32>
    %211 = arith.select %209, %210, %207 : vector<8x8xi1>, vector<8x8xf32>
    %cst_90 = arith.constant dense<0xFF800000> : vector<8xf32>
    %212 = vector.multi_reduction <maximumf>, %211, %cst_90 [1] : vector<8x8xf32> to vector<8xf32>
    %213 = vector.shape_cast %212 : vector<8xf32> to vector<8x1xf32>
    %214 = vector.broadcast %213 : vector<8x1xf32> to vector<8x8xf32>
    %215 = arith.subf %211, %214 : vector<8x8xf32>
    %216 = math.exp %215 : vector<8x8xf32>
    %cst_91 = arith.constant dense<0.000000e+00> : vector<8xf32>
    %217 = vector.multi_reduction <add>, %216, %cst_91 [1] : vector<8x8xf32> to vector<8xf32>
    %218 = vector.shape_cast %217 : vector<8xf32> to vector<8x1xf32>
    %219 = tpu.reciprocal %218 : vector<8x1xf32> -> vector<8x1xf32>
    %220 = vector.broadcast %219 : vector<8x1xf32> to vector<8x8xf32>
    %221 = arith.mulf %216, %220 : vector<8x8xf32>
    %cst_92 = arith.constant dense<0.000000e+00> : vector<8x16xf32>
    %222 = tpu.matmul %221, %202, %cst_92 {dimension_numbers = #tpu.dot_dimension_numbers<[1], [0], [0], [1], [0, 0, 1, 1], [], []>} : vector<8x8xf32>, vector<8x16xf32>, vector<8x16xf32> -> vector<8x16xf32>
    %223 = tpu.concatenate %199, %222 in 0 : vector<8x16xf32>, vector<8x16xf32> -> vector<16x16xf32>
    %224 = vector.extract_strided_slice %164 {offsets = [0, 16], sizes = [16, 16], strides = [1, 1]} : vector<16x32xf32> to vector<16x16xf32>
    %225 = vector.extract_strided_slice %172 {offsets = [0, 16], sizes = [16, 16], strides = [1, 1]} : vector<16x32xf32> to vector<16x16xf32>
    %226 = vector.extract_strided_slice %173 {offsets = [0, 16], sizes = [16, 16], strides = [1, 1]} : vector<16x32xf32> to vector<16x16xf32>
    %227 = vector.extract_strided_slice %224 {offsets = [0, 0], sizes = [8, 16], strides = [1, 1]} : vector<16x16xf32> to vector<8x16xf32>
    %228 = vector.extract_strided_slice %225 {offsets = [0, 0], sizes = [8, 16], strides = [1, 1]} : vector<16x16xf32> to vector<8x16xf32>
    %229 = vector.extract_strided_slice %226 {offsets = [0, 0], sizes = [8, 16], strides = [1, 1]} : vector<16x16xf32> to vector<8x16xf32>
    %230 = vector.extract_strided_slice %6 {offsets = [0, 0, 0], sizes = [1, 8, 8], strides = [1, 1, 1]} : vector<2x8x8xf32> to vector<1x8x8xf32>
    %231 = vector.shape_cast %230 : vector<1x8x8xf32> to vector<8x8xf32>
    %cst_93 = arith.constant dense<0.000000e+00> : vector<8x8xf32>
    %232 = tpu.matmul %227, %228, %cst_93 {dimension_numbers = #tpu.dot_dimension_numbers<[1], [1], [0], [0], [0, 0, 1, 0], [], []>} : vector<8x16xf32>, vector<8x16xf32>, vector<8x8xf32> -> vector<8x8xf32>
    %cst_94 = arith.constant 2.500000e-01 : f32
    %233 = vector.broadcast %cst_94 : f32 to vector<8x8xf32>
    %234 = arith.mulf %232, %233 : vector<8x8xf32>
    %cst_95 = arith.constant 0.000000e+00 : f32
    %235 = vector.broadcast %cst_95 : f32 to vector<8x8xf32>
    %236 = arith.cmpf ogt, %231, %235 : vector<8x8xf32>
    %cst_96 = arith.constant -1.000000e+30 : f32
    %237 = vector.broadcast %cst_96 : f32 to vector<8x8xf32>
    %238 = arith.select %236, %237, %234 : vector<8x8xi1>, vector<8x8xf32>
    %cst_97 = arith.constant dense<0xFF800000> : vector<8xf32>
    %239 = vector.multi_reduction <maximumf>, %238, %cst_97 [1] : vector<8x8xf32> to vector<8xf32>
    %240 = vector.shape_cast %239 : vector<8xf32> to vector<8x1xf32>
    %241 = vector.broadcast %240 : vector<8x1xf32> to vector<8x8xf32>
    %242 = arith.subf %238, %241 : vector<8x8xf32>
    %243 = math.exp %242 : vector<8x8xf32>
    %cst_98 = arith.constant dense<0.000000e+00> : vector<8xf32>
    %244 = vector.multi_reduction <add>, %243, %cst_98 [1] : vector<8x8xf32> to vector<8xf32>
    %245 = vector.shape_cast %244 : vector<8xf32> to vector<8x1xf32>
    %246 = tpu.reciprocal %245 : vector<8x1xf32> -> vector<8x1xf32>
    %247 = vector.broadcast %246 : vector<8x1xf32> to vector<8x8xf32>
    %248 = arith.mulf %243, %247 : vector<8x8xf32>
    %cst_99 = arith.constant dense<0.000000e+00> : vector<8x16xf32>
    %249 = tpu.matmul %248, %229, %cst_99 {dimension_numbers = #tpu.dot_dimension_numbers<[1], [0], [0], [1], [0, 0, 1, 1], [], []>} : vector<8x8xf32>, vector<8x16xf32>, vector<8x16xf32> -> vector<8x16xf32>
    %250 = vector.extract_strided_slice %224 {offsets = [8, 0], sizes = [8, 16], strides = [1, 1]} : vector<16x16xf32> to vector<8x16xf32>
    %251 = vector.extract_strided_slice %225 {offsets = [8, 0], sizes = [8, 16], strides = [1, 1]} : vector<16x16xf32> to vector<8x16xf32>
    %252 = vector.extract_strided_slice %226 {offsets = [8, 0], sizes = [8, 16], strides = [1, 1]} : vector<16x16xf32> to vector<8x16xf32>
    %253 = vector.extract_strided_slice %6 {offsets = [1, 0, 0], sizes = [1, 8, 8], strides = [1, 1, 1]} : vector<2x8x8xf32> to vector<1x8x8xf32>
    %254 = vector.shape_cast %253 : vector<1x8x8xf32> to vector<8x8xf32>
    %cst_100 = arith.constant dense<0.000000e+00> : vector<8x8xf32>
    %255 = tpu.matmul %250, %251, %cst_100 {dimension_numbers = #tpu.dot_dimension_numbers<[1], [1], [0], [0], [0, 0, 1, 0], [], []>} : vector<8x16xf32>, vector<8x16xf32>, vector<8x8xf32> -> vector<8x8xf32>
    %cst_101 = arith.constant 2.500000e-01 : f32
    %256 = vector.broadcast %cst_101 : f32 to vector<8x8xf32>
    %257 = arith.mulf %255, %256 : vector<8x8xf32>
    %cst_102 = arith.constant 0.000000e+00 : f32
    %258 = vector.broadcast %cst_102 : f32 to vector<8x8xf32>
    %259 = arith.cmpf ogt, %254, %258 : vector<8x8xf32>
    %cst_103 = arith.constant -1.000000e+30 : f32
    %260 = vector.broadcast %cst_103 : f32 to vector<8x8xf32>
    %261 = arith.select %259, %260, %257 : vector<8x8xi1>, vector<8x8xf32>
    %cst_104 = arith.constant dense<0xFF800000> : vector<8xf32>
    %262 = vector.multi_reduction <maximumf>, %261, %cst_104 [1] : vector<8x8xf32> to vector<8xf32>
    %263 = vector.shape_cast %262 : vector<8xf32> to vector<8x1xf32>
    %264 = vector.broadcast %263 : vector<8x1xf32> to vector<8x8xf32>
    %265 = arith.subf %261, %264 : vector<8x8xf32>
    %266 = math.exp %265 : vector<8x8xf32>
    %cst_105 = arith.constant dense<0.000000e+00> : vector<8xf32>
    %267 = vector.multi_reduction <add>, %266, %cst_105 [1] : vector<8x8xf32> to vector<8xf32>
    %268 = vector.shape_cast %267 : vector<8xf32> to vector<8x1xf32>
    %269 = tpu.reciprocal %268 : vector<8x1xf32> -> vector<8x1xf32>
    %270 = vector.broadcast %269 : vector<8x1xf32> to vector<8x8xf32>
    %271 = arith.mulf %266, %270 : vector<8x8xf32>
    %cst_106 = arith.constant dense<0.000000e+00> : vector<8x16xf32>
    %272 = tpu.matmul %271, %252, %cst_106 {dimension_numbers = #tpu.dot_dimension_numbers<[1], [0], [0], [1], [0, 0, 1, 1], [], []>} : vector<8x8xf32>, vector<8x16xf32>, vector<8x16xf32> -> vector<8x16xf32>
    %273 = tpu.concatenate %249, %272 in 0 : vector<8x16xf32>, vector<8x16xf32> -> vector<16x16xf32>
    %c0_107 = arith.constant 0 : index
    %c0_108 = arith.constant 0 : index
    %c0_109 = arith.constant 0 : index
    %274 = vector.load %arg16[%c0_107, %c0_108, %c0_109] : memref<1x32x32xf32, #tpu.memory_space<vmem>>, vector<1x32x32xf32>
    %275 = vector.shape_cast %274 : vector<1x32x32xf32> to vector<32x32xf32>
    %c0_110 = arith.constant 0 : index
    %c0_111 = arith.constant 0 : index
    %c0_112 = arith.constant 0 : index
    %276 = vector.load %arg17[%c0_110, %c0_111, %c0_112] : memref<1x1x32xf32, #tpu.memory_space<vmem>>, vector<1x1x32xf32>
    %277 = vector.shape_cast %276 : vector<1x1x32xf32> to vector<1x32xf32>
    %c0_113 = arith.constant 0 : index
    %c0_114 = arith.constant 0 : index
    %c0_115 = arith.constant 0 : index
    %278 = vector.load %arg18[%c0_113, %c0_114, %c0_115] : memref<1x1x32xf32, #tpu.memory_space<vmem>>, vector<1x1x32xf32>
    %279 = vector.shape_cast %278 : vector<1x1x32xf32> to vector<1x32xf32>
    %c0_116 = arith.constant 0 : index
    %c0_117 = arith.constant 0 : index
    %c0_118 = arith.constant 0 : index
    %280 = vector.load %arg19[%c0_116, %c0_117, %c0_118] : memref<1x1x32xf32, #tpu.memory_space<vmem>>, vector<1x1x32xf32>
    %281 = vector.shape_cast %280 : vector<1x1x32xf32> to vector<1x32xf32>
    %282 = vector.broadcast %277 : vector<1x32xf32> to vector<16x32xf32>
    %283 = arith.addf %157, %282 : vector<16x32xf32>
    %284 = vector.extract_strided_slice %275 {offsets = [0, 0], sizes = [16, 32], strides = [1, 1]} : vector<32x32xf32> to vector<16x32xf32>
    %cst_119 = arith.constant dense<0.000000e+00> : vector<16x32xf32>
    %285 = tpu.matmul %223, %284, %cst_119 {dimension_numbers = #tpu.dot_dimension_numbers<[1], [0], [0], [1], [0, 0, 1, 1], [], []>} : vector<16x16xf32>, vector<16x32xf32>, vector<16x32xf32> -> vector<16x32xf32>
    %286 = arith.addf %283, %285 : vector<16x32xf32>
    %287 = vector.extract_strided_slice %275 {offsets = [16, 0], sizes = [16, 32], strides = [1, 1]} : vector<32x32xf32> to vector<16x32xf32>
    %cst_120 = arith.constant dense<0.000000e+00> : vector<16x32xf32>
    %288 = tpu.matmul %273, %287, %cst_120 {dimension_numbers = #tpu.dot_dimension_numbers<[1], [0], [0], [1], [0, 0, 1, 1], [], []>} : vector<16x16xf32>, vector<16x32xf32>, vector<16x32xf32> -> vector<16x32xf32>
    %289 = arith.addf %286, %288 : vector<16x32xf32>
    %cst_121 = arith.constant dense<0.000000e+00> : vector<16xf32>
    %290 = vector.multi_reduction <add>, %289, %cst_121 [1] : vector<16x32xf32> to vector<16xf32>
    %291 = vector.shape_cast %290 : vector<16xf32> to vector<16x1xf32>
    %cst_122 = arith.constant 3.200000e+01 : f32
    %292 = vector.broadcast %cst_122 : f32 to vector<16x1xf32>
    %293 = arith.divf %291, %292 : vector<16x1xf32>
    %294 = vector.broadcast %293 : vector<16x1xf32> to vector<16x32xf32>
    %295 = arith.subf %289, %294 : vector<16x32xf32>
    %296 = arith.mulf %295, %295 : vector<16x32xf32>
    %cst_123 = arith.constant dense<0.000000e+00> : vector<16xf32>
    %297 = vector.multi_reduction <add>, %296, %cst_123 [1] : vector<16x32xf32> to vector<16xf32>
    %298 = vector.shape_cast %297 : vector<16xf32> to vector<16x1xf32>
    %cst_124 = arith.constant 3.200000e+01 : f32
    %299 = vector.broadcast %cst_124 : f32 to vector<16x1xf32>
    %300 = arith.divf %298, %299 : vector<16x1xf32>
    %301 = vector.broadcast %293 : vector<16x1xf32> to vector<16x32xf32>
    %302 = arith.subf %289, %301 : vector<16x32xf32>
    %cst_125 = arith.constant 9.99999974E-6 : f32
    %303 = vector.broadcast %cst_125 : f32 to vector<16x1xf32>
    %304 = arith.addf %300, %303 : vector<16x1xf32>
    %305 = math.rsqrt %304 : vector<16x1xf32>
    %306 = vector.broadcast %305 : vector<16x1xf32> to vector<16x32xf32>
    %307 = arith.mulf %302, %306 : vector<16x32xf32>
    %308 = vector.broadcast %279 : vector<1x32xf32> to vector<16x32xf32>
    %309 = arith.mulf %307, %308 : vector<16x32xf32>
    %310 = vector.broadcast %281 : vector<1x32xf32> to vector<16x32xf32>
    %311 = arith.addf %309, %310 : vector<16x32xf32>
    %312 = vector.broadcast %7 : vector<16x1xf32> to vector<16x32xf32>
    %313 = arith.mulf %311, %312 : vector<16x32xf32>
    %c0_126 = arith.constant 0 : index
    %c0_127 = arith.constant 0 : index
    %c0_128 = arith.constant 0 : index
    %314 = vector.load %arg20[%c0_126, %c0_127, %c0_128] : memref<1x32x64xf32, #tpu.memory_space<vmem>>, vector<1x32x64xf32>
    %315 = vector.shape_cast %314 : vector<1x32x64xf32> to vector<32x64xf32>
    %cst_129 = arith.constant dense<0.000000e+00> : vector<16x64xf32>
    %316 = tpu.matmul %313, %315, %cst_129 {dimension_numbers = #tpu.dot_dimension_numbers<[1], [0], [0], [1], [0, 0, 1, 1], [], []>} : vector<16x32xf32>, vector<32x64xf32>, vector<16x64xf32> -> vector<16x64xf32>
    %c0_130 = arith.constant 0 : index
    %c0_131 = arith.constant 0 : index
    %c0_132 = arith.constant 0 : index
    %317 = vector.load %arg21[%c0_130, %c0_131, %c0_132] : memref<1x1x64xf32, #tpu.memory_space<vmem>>, vector<1x1x64xf32>
    %318 = vector.shape_cast %317 : vector<1x1x64xf32> to vector<1x64xf32>
    %319 = vector.broadcast %318 : vector<1x64xf32> to vector<16x64xf32>
    %320 = arith.addf %316, %319 : vector<16x64xf32>
    %cst_133 = arith.constant 0.000000e+00 : f32
    %321 = vector.broadcast %cst_133 : f32 to vector<16x64xf32>
    %322 = arith.maximumf %320, %321 : vector<16x64xf32>
    %c0_134 = arith.constant 0 : index
    %c0_135 = arith.constant 0 : index
    %c0_136 = arith.constant 0 : index
    %323 = vector.load %arg22[%c0_134, %c0_135, %c0_136] : memref<1x64x32xf32, #tpu.memory_space<vmem>>, vector<1x64x32xf32>
    %324 = vector.shape_cast %323 : vector<1x64x32xf32> to vector<64x32xf32>
    %cst_137 = arith.constant dense<0.000000e+00> : vector<16x32xf32>
    %325 = tpu.matmul %322, %324, %cst_137 {dimension_numbers = #tpu.dot_dimension_numbers<[1], [0], [0], [1], [0, 0, 1, 1], [], []>} : vector<16x64xf32>, vector<64x32xf32>, vector<16x32xf32> -> vector<16x32xf32>
    %c0_138 = arith.constant 0 : index
    %c0_139 = arith.constant 0 : index
    %c0_140 = arith.constant 0 : index
    %326 = vector.load %arg23[%c0_138, %c0_139, %c0_140] : memref<1x1x32xf32, #tpu.memory_space<vmem>>, vector<1x1x32xf32>
    %327 = vector.shape_cast %326 : vector<1x1x32xf32> to vector<1x32xf32>
    %328 = vector.broadcast %327 : vector<1x32xf32> to vector<16x32xf32>
    %329 = arith.addf %325, %328 : vector<16x32xf32>
    %330 = arith.addf %329, %313 : vector<16x32xf32>
    %c0_141 = arith.constant 0 : index
    %c0_142 = arith.constant 0 : index
    %c0_143 = arith.constant 0 : index
    %331 = vector.load %arg24[%c0_141, %c0_142, %c0_143] : memref<1x1x32xf32, #tpu.memory_space<vmem>>, vector<1x1x32xf32>
    %332 = vector.shape_cast %331 : vector<1x1x32xf32> to vector<1x32xf32>
    %c0_144 = arith.constant 0 : index
    %c0_145 = arith.constant 0 : index
    %c0_146 = arith.constant 0 : index
    %333 = vector.load %arg25[%c0_144, %c0_145, %c0_146] : memref<1x1x32xf32, #tpu.memory_space<vmem>>, vector<1x1x32xf32>
    %334 = vector.shape_cast %333 : vector<1x1x32xf32> to vector<1x32xf32>
    %cst_147 = arith.constant dense<0.000000e+00> : vector<16xf32>
    %335 = vector.multi_reduction <add>, %330, %cst_147 [1] : vector<16x32xf32> to vector<16xf32>
    %336 = vector.shape_cast %335 : vector<16xf32> to vector<16x1xf32>
    %cst_148 = arith.constant 3.200000e+01 : f32
    %337 = vector.broadcast %cst_148 : f32 to vector<16x1xf32>
    %338 = arith.divf %336, %337 : vector<16x1xf32>
    %339 = vector.broadcast %338 : vector<16x1xf32> to vector<16x32xf32>
    %340 = arith.subf %330, %339 : vector<16x32xf32>
    %341 = arith.mulf %340, %340 : vector<16x32xf32>
    %cst_149 = arith.constant dense<0.000000e+00> : vector<16xf32>
    %342 = vector.multi_reduction <add>, %341, %cst_149 [1] : vector<16x32xf32> to vector<16xf32>
    %343 = vector.shape_cast %342 : vector<16xf32> to vector<16x1xf32>
    %cst_150 = arith.constant 3.200000e+01 : f32
    %344 = vector.broadcast %cst_150 : f32 to vector<16x1xf32>
    %345 = arith.divf %343, %344 : vector<16x1xf32>
    %346 = vector.broadcast %338 : vector<16x1xf32> to vector<16x32xf32>
    %347 = arith.subf %330, %346 : vector<16x32xf32>
    %cst_151 = arith.constant 9.99999974E-6 : f32
    %348 = vector.broadcast %cst_151 : f32 to vector<16x1xf32>
    %349 = arith.addf %345, %348 : vector<16x1xf32>
    %350 = math.rsqrt %349 : vector<16x1xf32>
    %351 = vector.broadcast %350 : vector<16x1xf32> to vector<16x32xf32>
    %352 = arith.mulf %347, %351 : vector<16x32xf32>
    %353 = vector.broadcast %332 : vector<1x32xf32> to vector<16x32xf32>
    %354 = arith.mulf %352, %353 : vector<16x32xf32>
    %355 = vector.broadcast %334 : vector<1x32xf32> to vector<16x32xf32>
    %356 = arith.addf %354, %355 : vector<16x32xf32>
    %357 = vector.broadcast %7 : vector<16x1xf32> to vector<16x32xf32>
    %358 = arith.mulf %356, %357 : vector<16x32xf32>
    %c0_152 = arith.constant 0 : index
    %c0_153 = arith.constant 0 : index
    %359 = vector.load %arg27[%c0_152, %c0_153] : memref<16x32xf32, #tpu.memory_space<vmem>>, vector<16x32xf32>
    tpu.vector_store %arg27[%c0_152, %c0_153], %358 {strides = array<i32>} : memref<16x32xf32, #tpu.memory_space<vmem>>, vector<16x32xf32>,
    %c0_154 = arith.constant 0 : index
    %c0_155 = arith.constant 0 : index
    %360 = vector.load %arg26[%c0_154, %c0_155] : memref<16x32xf32, #tpu.memory_space<vmem>>, vector<16x32xf32>
    tpu.vector_store %arg26[%c0_154, %c0_155], %358 {strides = array<i32>} : memref<16x32xf32, #tpu.memory_space<vmem>>, vector<16x32xf32>,
    return
  }
  func.func @transform_0(%arg0: i32) -> (i32, i32) {
    %c0_i32 = arith.constant 0 : i32
    %c0_i32_0 = arith.constant 0 : i32
    %c0_i32_1 = arith.constant 0 : i32
    return %c0_i32, %c0_i32_0 : i32, i32
  }
  func.func @transform_1(%arg0: i32) -> (i32, i32) {
    %c0_i32 = arith.constant 0 : i32
    %c0_i32_0 = arith.constant 0 : i32
    %c0_i32_1 = arith.constant 0 : i32
    return %c0_i32, %c0_i32_0 : i32, i32
  }
  func.func @transform_2(%arg0: i32) -> (i32, i32, i32) {
    %c0_i32 = arith.constant 0 : i32
    %c0_i32_0 = arith.constant 0 : i32
    %c0_i32_1 = arith.constant 0 : i32
    %c0_i32_2 = arith.constant 0 : i32
    return %c0_i32, %c0_i32_0, %c0_i32_1 : i32, i32, i32
  }
  func.func @transform_3(%arg0: i32) -> (i32, i32, i32) {
    %c0_i32 = arith.constant 0 : i32
    %c0_i32_0 = arith.constant 0 : i32
    %c0_i32_1 = arith.constant 0 : i32
    %c0_i32_2 = arith.constant 0 : i32
    return %c0_i32, %c0_i32_0, %c0_i32_1 : i32, i32, i32
  }
  func.func @transform_4(%arg0: i32) -> (i32, i32) {
    %c0_i32 = arith.constant 0 : i32
    %c0_i32_0 = arith.constant 0 : i32
    %c0_i32_1 = arith.constant 0 : i32
    return %c0_i32, %c0_i32_0 : i32, i32
  }
  func.func @transform_5(%arg0: i32) -> (i32, i32, i32) {
    %c0_i32 = arith.constant 0 : i32
    %c0_i32_0 = arith.constant 0 : i32
    %c0_i32_1 = arith.constant 0 : i32
    return %arg0, %c0_i32, %c0_i32_0 : i32, i32, i32
  }
  func.func @transform_6(%arg0: i32) -> (i32, i32, i32) {
    %c0_i32 = arith.constant 0 : i32
    %c0_i32_0 = arith.constant 0 : i32
    %c0_i32_1 = arith.constant 0 : i32
    return %arg0, %c0_i32, %c0_i32_0 : i32, i32, i32
  }
  func.func @transform_7(%arg0: i32) -> (i32, i32, i32) {
    %c0_i32 = arith.constant 0 : i32
    %c0_i32_0 = arith.constant 0 : i32
    %c0_i32_1 = arith.constant 0 : i32
    return %arg0, %c0_i32, %c0_i32_0 : i32, i32, i32
  }
  func.func @transform_8(%arg0: i32) -> (i32, i32, i32) {
    %c0_i32 = arith.constant 0 : i32
    %c0_i32_0 = arith.constant 0 : i32
    %c0_i32_1 = arith.constant 0 : i32
    return %arg0, %c0_i32, %c0_i32_0 : i32, i32, i32
  }
  func.func @transform_9(%arg0: i32) -> (i32, i32, i32) {
    %c0_i32 = arith.constant 0 : i32
    %c0_i32_0 = arith.constant 0 : i32
    %c0_i32_1 = arith.constant 0 : i32
    return %arg0, %c0_i32, %c0_i32_0 : i32, i32, i32
  }
  func.func @transform_10(%arg0: i32) -> (i32, i32, i32) {
    %c0_i32 = arith.constant 0 : i32
    %c0_i32_0 = arith.constant 0 : i32
    %c0_i32_1 = arith.constant 0 : i32
    return %arg0, %c0_i32, %c0_i32_0 : i32, i32, i32
  }
  func.func @transform_11(%arg0: i32) -> (i32, i32, i32) {
    %c0_i32 = arith.constant 0 : i32
    %c0_i32_0 = arith.constant 0 : i32
    %c0_i32_1 = arith.constant 0 : i32
    return %arg0, %c0_i32, %c0_i32_0 : i32, i32, i32
  }
  func.func @transform_12(%arg0: i32) -> (i32, i32, i32) {
    %c0_i32 = arith.constant 0 : i32
    %c0_i32_0 = arith.constant 0 : i32
    %c0_i32_1 = arith.constant 0 : i32
    return %arg0, %c0_i32, %c0_i32_0 : i32, i32, i32
  }
  func.func @transform_13(%arg0: i32) -> (i32, i32, i32) {
    %c0_i32 = arith.constant 0 : i32
    %c0_i32_0 = arith.constant 0 : i32
    %c0_i32_1 = arith.constant 0 : i32
    return %arg0, %c0_i32, %c0_i32_0 : i32, i32, i32
  }
  func.func @transform_14(%arg0: i32) -> (i32, i32, i32) {
    %c0_i32 = arith.constant 0 : i32
    %c0_i32_0 = arith.constant 0 : i32
    %c0_i32_1 = arith.constant 0 : i32
    return %arg0, %c0_i32, %c0_i32_0 : i32, i32, i32
  }
  func.func @transform_15(%arg0: i32) -> (i32, i32, i32) {
    %c0_i32 = arith.constant 0 : i32
    %c0_i32_0 = arith.constant 0 : i32
    %c0_i32_1 = arith.constant 0 : i32
    return %arg0, %c0_i32, %c0_i32_0 : i32, i32, i32
  }
  func.func @transform_16(%arg0: i32) -> (i32, i32, i32) {
    %c0_i32 = arith.constant 0 : i32
    %c0_i32_0 = arith.constant 0 : i32
    %c0_i32_1 = arith.constant 0 : i32
    return %arg0, %c0_i32, %c0_i32_0 : i32, i32, i32
  }
  func.func @transform_17(%arg0: i32) -> (i32, i32, i32) {
    %c0_i32 = arith.constant 0 : i32
    %c0_i32_0 = arith.constant 0 : i32
    %c0_i32_1 = arith.constant 0 : i32
    return %arg0, %c0_i32, %c0_i32_0 : i32, i32, i32
  }
  func.func @transform_18(%arg0: i32) -> (i32, i32, i32) {
    %c0_i32 = arith.constant 0 : i32
    %c0_i32_0 = arith.constant 0 : i32
    %c0_i32_1 = arith.constant 0 : i32
    return %arg0, %c0_i32, %c0_i32_0 : i32, i32, i32
  }
  func.func @transform_19(%arg0: i32) -> (i32, i32, i32) {
    %c0_i32 = arith.constant 0 : i32
    %c0_i32_0 = arith.constant 0 : i32
    %c0_i32_1 = arith.constant 0 : i32
    return %arg0, %c0_i32, %c0_i32_0 : i32, i32, i32
  }
  func.func @transform_20(%arg0: i32) -> (i32, i32, i32) {
    %c0_i32 = arith.constant 0 : i32
    %c0_i32_0 = arith.constant 0 : i32
    %c0_i32_1 = arith.constant 0 : i32
    return %arg0, %c0_i32, %c0_i32_0 : i32, i32, i32
  }
  func.func @transform_21(%arg0: i32) -> (i32, i32, i32) {
    %c0_i32 = arith.constant 0 : i32
    %c0_i32_0 = arith.constant 0 : i32
    %c0_i32_1 = arith.constant 0 : i32
    return %arg0, %c0_i32, %c0_i32_0 : i32, i32, i32
  }
  func.func @transform_22(%arg0: i32) -> (i32, i32, i32) {
    %c0_i32 = arith.constant 0 : i32
    %c0_i32_0 = arith.constant 0 : i32
    %c0_i32_1 = arith.constant 0 : i32
    return %arg0, %c0_i32, %c0_i32_0 : i32, i32, i32
  }
  func.func @transform_23(%arg0: i32) -> (i32, i32, i32) {
    %c0_i32 = arith.constant 0 : i32
    %c0_i32_0 = arith.constant 0 : i32
    %c0_i32_1 = arith.constant 0 : i32
    return %arg0, %c0_i32, %c0_i32_0 : i32, i32, i32
  }
  func.func @transform_24(%arg0: i32) -> (i32, i32, i32) {
    %c0_i32 = arith.constant 0 : i32
    %c0_i32_0 = arith.constant 0 : i32
    %c0_i32_1 = arith.constant 0 : i32
    return %arg0, %c0_i32, %c0_i32_0 : i32, i32, i32
  }
  func.func @transform_25(%arg0: i32) -> (i32, i32) {
    %c0_i32 = arith.constant 0 : i32
    %c0_i32_0 = arith.constant 0 : i32
    %c0_i32_1 = arith.constant 0 : i32
    return %c0_i32, %c0_i32_0 : i32, i32
  }
}

</mosaic_0001>

<llo_original>
// kernel: tpu_custom_call.1
$region0: #{tpu_custom_call.1}
  #allocation0 [shape = 'u32[]', space=smem, size = 0x4, offset = 0x4, fixed_abs, tag = 'smem constant byte address 0x4 - core index']
  #allocation1 [shape = 'u32[144,128]{1,0:T(1,128)}', space=vmem, size = 0x12000, scoped, tag = 'internal scratch']
  #allocation2 [shape = 'f32[16,32]{1,0:T(8,128)}', space=vmem, size = 0x2000, scoped, tag = 'scratch operand']
  %s0 = inlined_call_operand.vmem [shape: f32[16,32], index: 0, kind: input, shape index: {}]
  %s1 = inlined_call_operand.hbm [shape: f32[16,32], index: 1, kind: input, shape index: {}]
  %s2 = inlined_call_operand.hbm [shape: f32[2,8,8], index: 2, kind: input, shape index: {}]
  %s3 = inlined_call_operand.hbm [shape: f32[2,8,8], index: 3, kind: input, shape index: {}]
  %s4 = inlined_call_operand.vmem [shape: f32[16,1], index: 4, kind: input, shape index: {}]
  %s5 = inlined_call_operand.vmem [shape: f32[2,32,96], index: 5, kind: input, shape index: {}]
  %s6 = inlined_call_operand.vmem [shape: f32[2,1,96], index: 6, kind: input, shape index: {}]
  %s7 = inlined_call_operand.vmem [shape: f32[2,32,32], index: 7, kind: input, shape index: {}]
  %s8 = inlined_call_operand.vmem [shape: f32[2,1,32], index: 8, kind: input, shape index: {}]
  %s9 = inlined_call_operand.vmem [shape: f32[2,1,32], index: 9, kind: input, shape index: {}]
  %s10 = inlined_call_operand.vmem [shape: f32[2,1,32], index: 10, kind: input, shape index: {}]
  %s11 = inlined_call_operand.vmem [shape: f32[2,32,32], index: 11, kind: input, shape index: {}]
  %s12 = inlined_call_operand.vmem [shape: f32[2,1,32], index: 12, kind: input, shape index: {}]
  %s13 = inlined_call_operand.hbm [shape: f32[2,32,64], index: 13, kind: input, shape index: {}]
  %s14 = inlined_call_operand.vmem [shape: f32[2,1,64], index: 14, kind: input, shape index: {}]
  %s15 = inlined_call_operand.hbm [shape: f32[2,32,32], index: 15, kind: input, shape index: {}]
  %s16 = inlined_call_operand.vmem [shape: f32[2,1,32], index: 16, kind: input, shape index: {}]
  %s17 = inlined_call_operand.vmem [shape: f32[2,1,32], index: 17, kind: input, shape index: {}]
  %s18 = inlined_call_operand.hbm [shape: f32[2,1,32], index: 18, kind: input, shape index: {}]
  %s19 = inlined_call_operand.hbm [shape: f32[2,32,64], index: 19, kind: input, shape index: {}]
  %s20 = inlined_call_operand.hbm [shape: f32[2,1,64], index: 20, kind: input, shape index: {}]
  %s21 = inlined_call_operand.vmem [shape: f32[2,64,32], index: 21, kind: input, shape index: {}]
  %s22 = inlined_call_operand.vmem [shape: f32[2,1,32], index: 22, kind: input, shape index: {}]
  %s23 = inlined_call_operand.vmem [shape: f32[2,1,32], index: 23, kind: input, shape index: {}]
  %s24 = inlined_call_operand.vmem [shape: f32[2,1,32], index: 24, kind: input, shape index: {}]
  %s25 = inlined_call_operand.hbm [shape: f32[16,32], index: 25, kind: output, shape index: {}]
  %s26 = sld [smem:[#allocation0]]
  $region169: #{tpu_custom_call.1} parent=0
    _
  %s28 = ssub.s32 1, %s26
  %s29 = scalar_select 0, %s28, %s26
  $region1: #{tpu_custom_call.1} parent=0
    #allocation3 [shape = 'u8[8192]{0}', space=vmem, size = 0x2000, scoped, tag = 'input window, operand 1, single buffered']
    #allocation4 [shape = 's32[2]{0}', space=sflag, size = 0x8, scoped, tag = 'scoped memory for tpu_custom_call.1']
    #allocation5 [shape = 's32[2]{0}', space=sflag, size = 0x8, scoped, tag = 'scoped memory for tpu_custom_call.1']
    #allocation6 [shape = 'u8[8192]{0}', space=vmem, size = 0x2000, scoped, tag = 'input window, operand 2, single buffered']
    #allocation7 [shape = 's32[1]{0}', space=sflag, size = 0x4, scoped, tag = 'scoped memory for tpu_custom_call.1']
    #allocation8 [shape = 'u8[8192]{0}', space=vmem, size = 0x2000, scoped, tag = 'input window, operand 3, single buffered']
    #allocation9 [shape = 'u8[32768]{0}', space=vmem, size = 0x8000, scoped, tag = 'input window, operand 13']
    #allocation10 [shape = 's32[2]{0}', space=sflag, size = 0x8, scoped, tag = 'scoped memory for tpu_custom_call.1']
    #allocation11 [shape = 'u8[32768]{0}', space=vmem, size = 0x8000, scoped, tag = 'input window, operand 15']
    #allocation12 [shape = 'u8[1024]{0}', space=vmem, size = 0x400, scoped, tag = 'input window, operand 18']
    #allocation13 [shape = 's32[2]{0}', space=sflag, size = 0x8, scoped, tag = 'scoped memory for tpu_custom_call.1']
    #allocation14 [shape = 'u8[32768]{0}', space=vmem, size = 0x8000, scoped, tag = 'input window, operand 19']
    #allocation15 [shape = 'u8[1024]{0}', space=vmem, size = 0x400, scoped, tag = 'input window, operand 20']
    #allocation16 [shape = 's32[2]{0}', space=sflag, size = 0x8, scoped, tag = 'scoped memory for tpu_custom_call.1']
    #allocation17 [shape = 'u8[8192]{0}', space=vmem, size = 0x2000, scoped, tag = 'output window, operand 0, single buffered']
    %30 = vsyncpa [#allocation4], 0
    %31 = vsyncpa [#allocation7], 0
    %32 = vsyncpa [#allocation10], 0
    %s33 = scalar_lea.sflag [#allocation10], 1
    %34 = vsyncpa %s33, 0
    %35 = vsyncpa [#allocation13], 0
    %s36 = scalar_lea.sflag [#allocation13], 1
    %37 = vsyncpa %s36, 0
    %38 = vsyncpa [#allocation16], 0
    %s39 = scalar_lea.sflag [#allocation16], 1
    %40 = vsyncpa %s39, 0
    %41 = vsyncpa [#allocation5], 0
    loop: start=0, step=1, limit=4
    $region2: #{tpu_custom_call.1} parent=1 // loop_pre_header
      _
    $region3: #{tpu_custom_call.1} parent=1 // loop_header
      %s43 = sphi 0, %s47
      %p44 = scmp.ge.s32.totalorder %s43, 4
      %s51 = sphi 0, %s51
      %s53 = sphi 0, %s51
      %s54 = sphi 0, %s53
      %s68 = sphi 0, %s54
      %s72 = sphi 0, %s72
      %s74 = sphi 0, %s72
      %s75 = sphi 0, %s74
      %s89 = sphi 0, %s75
      %s93 = sphi 0, %s93
      %s95 = sphi 0, %s93
      %s96 = sphi 0, %s95
      %s110 = sphi 0, %s96
      %s114 = sphi 0, %s114
      %s116 = sphi 0, %s114
      %s117 = sphi 0, %s116
      %s131 = sphi 0, %s117
      %s135 = sphi 0, %s135
      %s137 = sphi 0, %s135
      %s138 = sphi 0, %s137
      %s152 = sphi 0, %s138
      %s158 = sphi 0, %s160
      %s161 = sphi 0, %s158
      %s162 = sphi 0, %s161
      %s178 = sphi 0, %s162
      %s184 = sphi 0, %s186
      %s187 = sphi 0, %s184
      %s188 = sphi 0, %s187
      %s204 = sphi 0, %s188
      %s210 = sphi 0, %s212
      %s213 = sphi 0, %s210
      %s214 = sphi 0, %s213
      %s230 = sphi 0, %s214
      %s236 = sphi 0, %s238
      %s239 = sphi 0, %s236
      %s240 = sphi 0, %s239
      %s256 = sphi 0, %s240
      %s262 = sphi 0, %s264
      %s265 = sphi 0, %s262
      %s266 = sphi 0, %s265
      %s282 = sphi 0, %s266
      %s288 = sphi 0, %s290
      %s291 = sphi 0, %s288
      %s292 = sphi 0, %s291
      %s308 = sphi 0, %s292
      %s314 = sphi 0, %s316
      %s317 = sphi 0, %s314
      %s318 = sphi 0, %s317
      %s334 = sphi 0, %s318
      %s340 = sphi 0, %s342
      %s343 = sphi 0, %s340
      %s344 = sphi 0, %s343
      %s360 = sphi 0, %s344
      %s366 = sphi 0, %s368
      %s369 = sphi 0, %s366
      %s370 = sphi 0, %s369
      %s386 = sphi 0, %s370
      %s392 = sphi 0, %s394
      %s395 = sphi 0, %s392
      %s396 = sphi 0, %s395
      %s412 = sphi 0, %s396
      %s418 = sphi 0, %s420
      %s421 = sphi 0, %s418
      %s422 = sphi 0, %s421
      %s438 = sphi 0, %s422
      %s444 = sphi 0, %s446
      %s447 = sphi 0, %s444
      %s448 = sphi 0, %s447
      %s464 = sphi 0, %s448
      %s470 = sphi 0, %s472
      %s473 = sphi 0, %s470
      %s474 = sphi 0, %s473
      %s490 = sphi 0, %s474
      %s496 = sphi 0, %s498
      %s499 = sphi 0, %s496
      %s500 = sphi 0, %s499
      %s516 = sphi 0, %s500
      %s522 = sphi 0, %s524
      %s525 = sphi 0, %s522
      %s526 = sphi 0, %s525
      %s542 = sphi 0, %s526
      %s548 = sphi 0, %s550
      %s551 = sphi 0, %s548
      %s552 = sphi 0, %s551
      %s568 = sphi 0, %s552
      %s574 = sphi 0, %s576
      %s577 = sphi 0, %s574
      %s578 = sphi 0, %s577
      %s594 = sphi 0, %s578
      %s600 = sphi 0, %s602
      %s603 = sphi 0, %s600
      %s604 = sphi 0, %s603
      %s620 = sphi 0, %s604
      %s626 = sphi 0, %s628
      %s629 = sphi 0, %s626
      %s630 = sphi 0, %s629
      %s646 = sphi 0, %s630
      %s652 = sphi 0, %s654
      %s655 = sphi 0, %s652
      %s656 = sphi 0, %s655
      %s672 = sphi 0, %s656
      %s676 = sphi 0, %s676
      %s678 = sphi 0, %s676
      %s679 = sphi 0, %s678
      %s693 = sphi 0, %s679
    $region4: #{tpu_custom_call.1} parent=1 // loop_header_branch
      %46 = sbr.rel (%p44) target = $region8
    $region5: #{tpu_custom_call.1} parent=1 // loop_body
      %s48 = ssub.s32 %s43, 1
      %s49 = ssub.s32 %s43, 2
      %s50 = sadd.s32 %s43, 1
      %s52 = sadd.s32 %s51, 1
      %p55 = scmp.eq.s32.totalorder %s43, 1
      %p56 = scmp.ne.s32.totalorder %s51, %s53
      %p57 = scmp.eq.s32.totalorder %s43, 0
      %p58 = por %p56, %p57
      %p59 = scmp.ne.s32.totalorder %s51, %s53
      %p60 = scmp.eq.s32.totalorder %s48, 1
      %p61 = por %p59, %p60
      %p62 = scmp.ne.s32.totalorder %s53, %s54
      %p63 = scmp.eq.s32.totalorder %s48, 0
      %p64 = por %p62, %p63
      %p65 = scmp.ne.s32.totalorder %s53, %s54
      %p66 = scmp.eq.s32.totalorder %s49, 1
      %p67 = por %p65, %p66
      %p69 = scmp.ne.s32.totalorder %s54, %s68
      %p70 = scmp.eq.s32.totalorder %s49, 0
      %p71 = por %p69, %p70
      %s73 = sadd.s32 %s72, 1
      %p76 = scmp.eq.s32.totalorder %s43, 1
      %p77 = scmp.ne.s32.totalorder %s72, %s74
      %p78 = scmp.eq.s32.totalorder %s43, 0
      %p79 = por %p77, %p78
      %p80 = scmp.ne.s32.totalorder %s72, %s74
      %p81 = scmp.eq.s32.totalorder %s48, 1
      %p82 = por %p80, %p81
      %p83 = scmp.ne.s32.totalorder %s74, %s75
      %p84 = scmp.eq.s32.totalorder %s48, 0
      %p85 = por %p83, %p84
      %p86 = scmp.ne.s32.totalorder %s74, %s75
      %p87 = scmp.eq.s32.totalorder %s49, 1
      %p88 = por %p86, %p87
      %p90 = scmp.ne.s32.totalorder %s75, %s89
      %p91 = scmp.eq.s32.totalorder %s49, 0
      %p92 = por %p90, %p91
      %s94 = sadd.s32 %s93, 1
      %p97 = scmp.eq.s32.totalorder %s43, 1
      %p98 = scmp.ne.s32.totalorder %s93, %s95
      %p99 = scmp.eq.s32.totalorder %s43, 0
      %p100 = por %p98, %p99
      %p101 = scmp.ne.s32.totalorder %s93, %s95
      %p102 = scmp.eq.s32.totalorder %s48, 1
      %p103 = por %p101, %p102
      %p104 = scmp.ne.s32.totalorder %s95, %s96
      %p105 = scmp.eq.s32.totalorder %s48, 0
      %p106 = por %p104, %p105
      %p107 = scmp.ne.s32.totalorder %s95, %s96
      %p108 = scmp.eq.s32.totalorder %s49, 1
      %p109 = por %p107, %p108
      %p111 = scmp.ne.s32.totalorder %s96, %s110
      %p112 = scmp.eq.s32.totalorder %s49, 0
      %p113 = por %p111, %p112
      %s115 = sadd.s32 %s114, 1
      %p118 = scmp.eq.s32.totalorder %s43, 1
      %p119 = scmp.ne.s32.totalorder %s114, %s116
      %p120 = scmp.eq.s32.totalorder %s43, 0
      %p121 = por %p119, %p120
      %p122 = scmp.ne.s32.totalorder %s114, %s116
      %p123 = scmp.eq.s32.totalorder %s48, 1
      %p124 = por %p122, %p123
      %p125 = scmp.ne.s32.totalorder %s116, %s117
      %p126 = scmp.eq.s32.totalorder %s48, 0
      %p127 = por %p125, %p126
      %p128 = scmp.ne.s32.totalorder %s116, %s117
      %p129 = scmp.eq.s32.totalorder %s49, 1
      %p130 = por %p128, %p129
      %p132 = scmp.ne.s32.totalorder %s117, %s131
      %p133 = scmp.eq.s32.totalorder %s49, 0
      %p134 = por %p132, %p133
      %s136 = sadd.s32 %s135, 1
      %p139 = scmp.eq.s32.totalorder %s43, 1
      %p140 = scmp.ne.s32.totalorder %s135, %s137
      %p141 = scmp.eq.s32.totalorder %s43, 0
      %p142 = por %p140, %p141
      %p143 = scmp.ne.s32.totalorder %s135, %s137
      %p144 = scmp.eq.s32.totalorder %s48, 1
      %p145 = por %p143, %p144
      %p146 = scmp.ne.s32.totalorder %s137, %s138
      %p147 = scmp.eq.s32.totalorder %s48, 0
      %p148 = por %p146, %p147
      %p149 = scmp.ne.s32.totalorder %s137, %s138
      %p150 = scmp.eq.s32.totalorder %s49, 1
      %p151 = por %p149, %p150
      %p153 = scmp.ne.s32.totalorder %s138, %s152
      %p154 = scmp.eq.s32.totalorder %s49, 0
      %p155 = por %p153, %p154
      %s156 = ssub.s32 %s43, %s50
      %p157 = scmp.eq.s32.totalorder %s156, 0
      %s159 = sadd.s32 %s158, 1
      %s160 = scalar_select %p157, %s158, %s159
      %p163 = pneg %p157
      %p164 = scmp.eq.s32.totalorder %s43, 1
      %p165 = por %p163, %p164
      %p166 = scmp.ne.s32.totalorder %s158, %s161
      %p167 = scmp.eq.s32.totalorder %s43, 0
      %p168 = por %p166, %p167
      %p169 = scmp.ne.s32.totalorder %s158, %s161
      %p170 = scmp.eq.s32.totalorder %s48, 1
      %p171 = por %p169, %p170
      %p172 = scmp.ne.s32.totalorder %s161, %s162
      %p173 = scmp.eq.s32.totalorder %s48, 0
      %p174 = por %p172, %p173
      %p175 = scmp.ne.s32.totalorder %s161, %s162
      %p176 = scmp.eq.s32.totalorder %s49, 1
      %p177 = por %p175, %p176
      %p179 = scmp.ne.s32.totalorder %s162, %s178
      %p180 = scmp.eq.s32.totalorder %s49, 0
      %p181 = por %p179, %p180
      %s182 = ssub.s32 %s43, %s50
      %p183 = scmp.eq.s32.totalorder %s182, 0
      %s185 = sadd.s32 %s184, 1
      %s186 = scalar_select %p183, %s184, %s185
      %p189 = pneg %p183
      %p190 = scmp.eq.s32.totalorder %s43, 1
      %p191 = por %p189, %p190
      %p192 = scmp.ne.s32.totalorder %s184, %s187
      %p193 = scmp.eq.s32.totalorder %s43, 0
      %p194 = por %p192, %p193
      %p195 = scmp.ne.s32.totalorder %s184, %s187
      %p196 = scmp.eq.s32.totalorder %s48, 1
      %p197 = por %p195, %p196
      %p198 = scmp.ne.s32.totalorder %s187, %s188
      %p199 = scmp.eq.s32.totalorder %s48, 0
      %p200 = por %p198, %p199
      %p201 = scmp.ne.s32.totalorder %s187, %s188
      %p202 = scmp.eq.s32.totalorder %s49, 1
      %p203 = por %p201, %p202
      %p205 = scmp.ne.s32.totalorder %s188, %s204
      %p206 = scmp.eq.s32.totalorder %s49, 0
      %p207 = por %p205, %p206
      %s208 = ssub.s32 %s43, %s50
      %p209 = scmp.eq.s32.totalorder %s208, 0
      %s211 = sadd.s32 %s210, 1
      %s212 = scalar_select %p209, %s210, %s211
      %p215 = pneg %p209
      %p216 = scmp.eq.s32.totalorder %s43, 1
      %p217 = por %p215, %p216
      %p218 = scmp.ne.s32.totalorder %s210, %s213
      %p219 = scmp.eq.s32.totalorder %s43, 0
      %p220 = por %p218, %p219
      %p221 = scmp.ne.s32.totalorder %s210, %s213
      %p222 = scmp.eq.s32.totalorder %s48, 1
      %p223 = por %p221, %p222
      %p224 = scmp.ne.s32.totalorder %s213, %s214
      %p225 = scmp.eq.s32.totalorder %s48, 0
      %p226 = por %p224, %p225
      %p227 = scmp.ne.s32.totalorder %s213, %s214
      %p228 = scmp.eq.s32.totalorder %s49, 1
      %p229 = por %p227, %p228
      %p231 = scmp.ne.s32.totalorder %s214, %s230
      %p232 = scmp.eq.s32.totalorder %s49, 0
      %p233 = por %p231, %p232
      %s234 = ssub.s32 %s43, %s50
      %p235 = scmp.eq.s32.totalorder %s234, 0
      %s237 = sadd.s32 %s236, 1
      %s238 = scalar_select %p235, %s236, %s237
      %p241 = pneg %p235
      %p242 = scmp.eq.s32.totalorder %s43, 1
      %p243 = por %p241, %p242
      %p244 = scmp.ne.s32.totalorder %s236, %s239
      %p245 = scmp.eq.s32.totalorder %s43, 0
      %p246 = por %p244, %p245
      %p247 = scmp.ne.s32.totalorder %s236, %s239
      %p248 = scmp.eq.s32.totalorder %s48, 1
      %p249 = por %p247, %p248
      %p250 = scmp.ne.s32.totalorder %s239, %s240
      %p251 = scmp.eq.s32.totalorder %s48, 0
      %p252 = por %p250, %p251
      %p253 = scmp.ne.s32.totalorder %s239, %s240
      %p254 = scmp.eq.s32.totalorder %s49, 1
      %p255 = por %p253, %p254
      %p257 = scmp.ne.s32.totalorder %s240, %s256
      %p258 = scmp.eq.s32.totalorder %s49, 0
      %p259 = por %p257, %p258
      %s260 = ssub.s32 %s43, %s50
      %p261 = scmp.eq.s32.totalorder %s260, 0
      %s263 = sadd.s32 %s262, 1
      %s264 = scalar_select %p261, %s262, %s263
      %p267 = pneg %p261
      %p268 = scmp.eq.s32.totalorder %s43, 1
      %p269 = por %p267, %p268
      %p270 = scmp.ne.s32.totalorder %s262, %s265
      %p271 = scmp.eq.s32.totalorder %s43, 0
      %p272 = por %p270, %p271
      %p273 = scmp.ne.s32.totalorder %s262, %s265
      %p274 = scmp.eq.s32.totalorder %s48, 1
      %p275 = por %p273, %p274
      %p276 = scmp.ne.s32.totalorder %s265, %s266
      %p277 = scmp.eq.s32.totalorder %s48, 0
      %p278 = por %p276, %p277
      %p279 = scmp.ne.s32.totalorder %s265, %s266
      %p280 = scmp.eq.s32.totalorder %s49, 1
      %p281 = por %p279, %p280
      %p283 = scmp.ne.s32.totalorder %s266, %s282
      %p284 = scmp.eq.s32.totalorder %s49, 0
      %p285 = por %p283, %p284
      %s286 = ssub.s32 %s43, %s50
      %p287 = scmp.eq.s32.totalorder %s286, 0
      %s289 = sadd.s32 %s288, 1
      %s290 = scalar_select %p287, %s288, %s289
      %p293 = pneg %p287
      %p294 = scmp.eq.s32.totalorder %s43, 1
      %p295 = por %p293, %p294
      %p296 = scmp.ne.s32.totalorder %s288, %s291
      %p297 = scmp.eq.s32.totalorder %s43, 0
      %p298 = por %p296, %p297
      %p299 = scmp.ne.s32.totalorder %s288, %s291
      %p300 = scmp.eq.s32.totalorder %s48, 1
      %p301 = por %p299, %p300
      %p302 = scmp.ne.s32.totalorder %s291, %s292
      %p303 = scmp.eq.s32.totalorder %s48, 0
      %p304 = por %p302, %p303
      %p305 = scmp.ne.s32.totalorder %s291, %s292
      %p306 = scmp.eq.s32.totalorder %s49, 1
      %p307 = por %p305, %p306
      %p309 = scmp.ne.s32.totalorder %s292, %s308
      %p310 = scmp.eq.s32.totalorder %s49, 0
      %p311 = por %p309, %p310
      %s312 = ssub.s32 %s43, %s50
      %p313 = scmp.eq.s32.totalorder %s312, 0
      %s315 = sadd.s32 %s314, 1
      %s316 = scalar_select %p313, %s314, %s315
      %p319 = pneg %p313
      %p320 = scmp.eq.s32.totalorder %s43, 1
      %p321 = por %p319, %p320
      %p322 = scmp.ne.s32.totalorder %s314, %s317
      %p323 = scmp.eq.s32.totalorder %s43, 0
      %p324 = por %p322, %p323
      %p325 = scmp.ne.s32.totalorder %s314, %s317
      %p326 = scmp.eq.s32.totalorder %s48, 1
      %p327 = por %p325, %p326
      %p328 = scmp.ne.s32.totalorder %s317, %s318
      %p329 = scmp.eq.s32.totalorder %s48, 0
      %p330 = por %p328, %p329
      %p331 = scmp.ne.s32.totalorder %s317, %s318
      %p332 = scmp.eq.s32.totalorder %s49, 1
      %p333 = por %p331, %p332
      %p335 = scmp.ne.s32.totalorder %s318, %s334
      %p336 = scmp.eq.s32.totalorder %s49, 0
      %p337 = por %p335, %p336
      %s338 = ssub.s32 %s43, %s50
      %p339 = scmp.eq.s32.totalorder %s338, 0
      %s341 = sadd.s32 %s340, 1
      %s342 = scalar_select %p339, %s340, %s341
      %p345 = pneg %p339
      %p346 = scmp.eq.s32.totalorder %s43, 1
      %p347 = por %p345, %p346
      %p348 = scmp.ne.s32.totalorder %s340, %s343
      %p349 = scmp.eq.s32.totalorder %s43, 0
      %p350 = por %p348, %p349
      %p351 = scmp.ne.s32.totalorder %s340, %s343
      %p352 = scmp.eq.s32.totalorder %s48, 1
      %p353 = por %p351, %p352
      %p354 = scmp.ne.s32.totalorder %s343, %s344
      %p355 = scmp.eq.s32.totalorder %s48, 0
      %p356 = por %p354, %p355
      %p357 = scmp.ne.s32.totalorder %s343, %s344
      %p358 = scmp.eq.s32.totalorder %s49, 1
      %p359 = por %p357, %p358
      %p361 = scmp.ne.s32.totalorder %s344, %s360
      %p362 = scmp.eq.s32.totalorder %s49, 0
      %p363 = por %p361, %p362
      %s364 = ssub.s32 %s43, %s50
      %p365 = scmp.eq.s32.totalorder %s364, 0
      %s367 = sadd.s32 %s366, 1
      %s368 = scalar_select %p365, %s366, %s367
      %p371 = pneg %p365
      %p372 = scmp.eq.s32.totalorder %s43, 1
      %p373 = por %p371, %p372
      %p374 = scmp.ne.s32.totalorder %s366, %s369
      %p375 = scmp.eq.s32.totalorder %s43, 0
      %p376 = por %p374, %p375
      %p377 = scmp.ne.s32.totalorder %s366, %s369
      %p378 = scmp.eq.s32.totalorder %s48, 1
      %p379 = por %p377, %p378
      %p380 = scmp.ne.s32.totalorder %s369, %s370
      %p381 = scmp.eq.s32.totalorder %s48, 0
      %p382 = por %p380, %p381
      %p383 = scmp.ne.s32.totalorder %s369, %s370
      %p384 = scmp.eq.s32.totalorder %s49, 1
      %p385 = por %p383, %p384
      %p387 = scmp.ne.s32.totalorder %s370, %s386
      %p388 = scmp.eq.s32.totalorder %s49, 0
      %p389 = por %p387, %p388
      %s390 = ssub.s32 %s43, %s50
      %p391 = scmp.eq.s32.totalorder %s390, 0
      %s393 = sadd.s32 %s392, 1
      %s394 = scalar_select %p391, %s392, %s393
      %p397 = pneg %p391
      %p398 = scmp.eq.s32.totalorder %s43, 1
      %p399 = por %p397, %p398
      %p400 = scmp.ne.s32.totalorder %s392, %s395
      %p401 = scmp.eq.s32.totalorder %s43, 0
      %p402 = por %p400, %p401
      %p403 = scmp.ne.s32.totalorder %s392, %s395
      %p404 = scmp.eq.s32.totalorder %s48, 1
      %p405 = por %p403, %p404
      %p406 = scmp.ne.s32.totalorder %s395, %s396
      %p407 = scmp.eq.s32.totalorder %s48, 0
      %p408 = por %p406, %p407
      %p409 = scmp.ne.s32.totalorder %s395, %s396
      %p410 = scmp.eq.s32.totalorder %s49, 1
      %p411 = por %p409, %p410
      %p413 = scmp.ne.s32.totalorder %s396, %s412
      %p414 = scmp.eq.s32.totalorder %s49, 0
      %p415 = por %p413, %p414
      %s416 = ssub.s32 %s43, %s50
      %p417 = scmp.eq.s32.totalorder %s416, 0
      %s419 = sadd.s32 %s418, 1
      %s420 = scalar_select %p417, %s418, %s419
      %p423 = pneg %p417
      %p424 = scmp.eq.s32.totalorder %s43, 1
      %p425 = por %p423, %p424
      %p426 = scmp.ne.s32.totalorder %s418, %s421
      %p427 = scmp.eq.s32.totalorder %s43, 0
      %p428 = por %p426, %p427
      %p429 = scmp.ne.s32.totalorder %s418, %s421
      %p430 = scmp.eq.s32.totalorder %s48, 1
      %p431 = por %p429, %p430
      %p432 = scmp.ne.s32.totalorder %s421, %s422
      %p433 = scmp.eq.s32.totalorder %s48, 0
      %p434 = por %p432, %p433
      %p435 = scmp.ne.s32.totalorder %s421, %s422
      %p436 = scmp.eq.s32.totalorder %s49, 1
      %p437 = por %p435, %p436
      %p439 = scmp.ne.s32.totalorder %s422, %s438
      %p440 = scmp.eq.s32.totalorder %s49, 0
      %p441 = por %p439, %p440
      %s442 = ssub.s32 %s43, %s50
      %p443 = scmp.eq.s32.totalorder %s442, 0
      %s445 = sadd.s32 %s444, 1
      %s446 = scalar_select %p443, %s444, %s445
      %p449 = pneg %p443
      %p450 = scmp.eq.s32.totalorder %s43, 1
      %p451 = por %p449, %p450
      %p452 = scmp.ne.s32.totalorder %s444, %s447
      %p453 = scmp.eq.s32.totalorder %s43, 0
      %p454 = por %p452, %p453
      %p455 = scmp.ne.s32.totalorder %s444, %s447
      %p456 = scmp.eq.s32.totalorder %s48, 1
      %p457 = por %p455, %p456
      %p458 = scmp.ne.s32.totalorder %s447, %s448
      %p459 = scmp.eq.s32.totalorder %s48, 0
      %p460 = por %p458, %p459
      %p461 = scmp.ne.s32.totalorder %s447, %s448
      %p462 = scmp.eq.s32.totalorder %s49, 1
      %p463 = por %p461, %p462
      %p465 = scmp.ne.s32.totalorder %s448, %s464
      %p466 = scmp.eq.s32.totalorder %s49, 0
      %p467 = por %p465, %p466
      %s468 = ssub.s32 %s43, %s50
      %p469 = scmp.eq.s32.totalorder %s468, 0
      %s471 = sadd.s32 %s470, 1
      %s472 = scalar_select %p469, %s470, %s471
      %p475 = pneg %p469
      %p476 = scmp.eq.s32.totalorder %s43, 1
      %p477 = por %p475, %p476
      %p478 = scmp.ne.s32.totalorder %s470, %s473
      %p479 = scmp.eq.s32.totalorder %s43, 0
      %p480 = por %p478, %p479
      %p481 = scmp.ne.s32.totalorder %s470, %s473
      %p482 = scmp.eq.s32.totalorder %s48, 1
      %p483 = por %p481, %p482
      %p484 = scmp.ne.s32.totalorder %s473, %s474
      %p485 = scmp.eq.s32.totalorder %s48, 0
      %p486 = por %p484, %p485
      %p487 = scmp.ne.s32.totalorder %s473, %s474
      %p488 = scmp.eq.s32.totalorder %s49, 1
      %p489 = por %p487, %p488
      %p491 = scmp.ne.s32.totalorder %s474, %s490
      %p492 = scmp.eq.s32.totalorder %s49, 0
      %p493 = por %p491, %p492
      %s494 = ssub.s32 %s43, %s50
      %p495 = scmp.eq.s32.totalorder %s494, 0
      %s497 = sadd.s32 %s496, 1
      %s498 = scalar_select %p495, %s496, %s497
      %p501 = pneg %p495
      %p502 = scmp.eq.s32.totalorder %s43, 1
      %p503 = por %p501, %p502
      %p504 = scmp.ne.s32.totalorder %s496, %s499
      %p505 = scmp.eq.s32.totalorder %s43, 0
      %p506 = por %p504, %p505
      %p507 = scmp.ne.s32.totalorder %s496, %s499
      %p508 = scmp.eq.s32.totalorder %s48, 1
      %p509 = por %p507, %p508
      %p510 = scmp.ne.s32.totalorder %s499, %s500
      %p511 = scmp.eq.s32.totalorder %s48, 0
      %p512 = por %p510, %p511
      %p513 = scmp.ne.s32.totalorder %s499, %s500
      %p514 = scmp.eq.s32.totalorder %s49, 1
      %p515 = por %p513, %p514
      %p517 = scmp.ne.s32.totalorder %s500, %s516
      %p518 = scmp.eq.s32.totalorder %s49, 0
      %p519 = por %p517, %p518
      %s520 = ssub.s32 %s43, %s50
      %p521 = scmp.eq.s32.totalorder %s520, 0
      %s523 = sadd.s32 %s522, 1
      %s524 = scalar_select %p521, %s522, %s523
      %p527 = pneg %p521
      %p528 = scmp.eq.s32.totalorder %s43, 1
      %p529 = por %p527, %p528
      %p530 = scmp.ne.s32.totalorder %s522, %s525
      %p531 = scmp.eq.s32.totalorder %s43, 0
      %p532 = por %p530, %p531
      %p533 = scmp.ne.s32.totalorder %s522, %s525
      %p534 = scmp.eq.s32.totalorder %s48, 1
      %p535 = por %p533, %p534
      %p536 = scmp.ne.s32.totalorder %s525, %s526
      %p537 = scmp.eq.s32.totalorder %s48, 0
      %p538 = por %p536, %p537
      %p539 = scmp.ne.s32.totalorder %s525, %s526
      %p540 = scmp.eq.s32.totalorder %s49, 1
      %p541 = por %p539, %p540
      %p543 = scmp.ne.s32.totalorder %s526, %s542
      %p544 = scmp.eq.s32.totalorder %s49, 0
      %p545 = por %p543, %p544
      %s546 = ssub.s32 %s43, %s50
      %p547 = scmp.eq.s32.totalorder %s546, 0
      %s549 = sadd.s32 %s548, 1
      %s550 = scalar_select %p547, %s548, %s549
      %p553 = pneg %p547
      %p554 = scmp.eq.s32.totalorder %s43, 1
      %p555 = por %p553, %p554
      %p556 = scmp.ne.s32.totalorder %s548, %s551
      %p557 = scmp.eq.s32.totalorder %s43, 0
      %p558 = por %p556, %p557
      %p559 = scmp.ne.s32.totalorder %s548, %s551
      %p560 = scmp.eq.s32.totalorder %s48, 1
      %p561 = por %p559, %p560
      %p562 = scmp.ne.s32.totalorder %s551, %s552
      %p563 = scmp.eq.s32.totalorder %s48, 0
      %p564 = por %p562, %p563
      %p565 = scmp.ne.s32.totalorder %s551, %s552
      %p566 = scmp.eq.s32.totalorder %s49, 1
      %p567 = por %p565, %p566
      %p569 = scmp.ne.s32.totalorder %s552, %s568
      %p570 = scmp.eq.s32.totalorder %s49, 0
      %p571 = por %p569, %p570
      %s572 = ssub.s32 %s43, %s50
      %p573 = scmp.eq.s32.totalorder %s572, 0
      %s575 = sadd.s32 %s574, 1
      %s576 = scalar_select %p573, %s574, %s575
      %p579 = pneg %p573
      %p580 = scmp.eq.s32.totalorder %s43, 1
      %p581 = por %p579, %p580
      %p582 = scmp.ne.s32.totalorder %s574, %s577
      %p583 = scmp.eq.s32.totalorder %s43, 0
      %p584 = por %p582, %p583
      %p585 = scmp.ne.s32.totalorder %s574, %s577
      %p586 = scmp.eq.s32.totalorder %s48, 1
      %p587 = por %p585, %p586
      %p588 = scmp.ne.s32.totalorder %s577, %s578
      %p589 = scmp.eq.s32.totalorder %s48, 0
      %p590 = por %p588, %p589
      %p591 = scmp.ne.s32.totalorder %s577, %s578
      %p592 = scmp.eq.s32.totalorder %s49, 1
      %p593 = por %p591, %p592
      %p595 = scmp.ne.s32.totalorder %s578, %s594
      %p596 = scmp.eq.s32.totalorder %s49, 0
      %p597 = por %p595, %p596
      %s598 = ssub.s32 %s43, %s50
      %p599 = scmp.eq.s32.totalorder %s598, 0
      %s601 = sadd.s32 %s600, 1
      %s602 = scalar_select %p599, %s600, %s601
      %p605 = pneg %p599
      %p606 = scmp.eq.s32.totalorder %s43, 1
      %p607 = por %p605, %p606
      %p608 = scmp.ne.s32.totalorder %s600, %s603
      %p609 = scmp.eq.s32.totalorder %s43, 0
      %p610 = por %p608, %p609
      %p611 = scmp.ne.s32.totalorder %s600, %s603
      %p612 = scmp.eq.s32.totalorder %s48, 1
      %p613 = por %p611, %p612
      %p614 = scmp.ne.s32.totalorder %s603, %s604
      %p615 = scmp.eq.s32.totalorder %s48, 0
      %p616 = por %p614, %p615
      %p617 = scmp.ne.s32.totalorder %s603, %s604
      %p618 = scmp.eq.s32.totalorder %s49, 1
      %p619 = por %p617, %p618
      %p621 = scmp.ne.s32.totalorder %s604, %s620
      %p622 = scmp.eq.s32.totalorder %s49, 0
      %p623 = por %p621, %p622
      %s624 = ssub.s32 %s43, %s50
      %p625 = scmp.eq.s32.totalorder %s624, 0
      %s627 = sadd.s32 %s626, 1
      %s628 = scalar_select %p625, %s626, %s627
      %p631 = pneg %p625
      %p632 = scmp.eq.s32.totalorder %s43, 1
      %p633 = por %p631, %p632
      %p634 = scmp.ne.s32.totalorder %s626, %s629
      %p635 = scmp.eq.s32.totalorder %s43, 0
      %p636 = por %p634, %p635
      %p637 = scmp.ne.s32.totalorder %s626, %s629
      %p638 = scmp.eq.s32.totalorder %s48, 1
      %p639 = por %p637, %p638
      %p640 = scmp.ne.s32.totalorder %s629, %s630
      %p641 = scmp.eq.s32.totalorder %s48, 0
      %p642 = por %p640, %p641
      %p643 = scmp.ne.s32.totalorder %s629, %s630
      %p644 = scmp.eq.s32.totalorder %s49, 1
      %p645 = por %p643, %p644
      %p647 = scmp.ne.s32.totalorder %s630, %s646
      %p648 = scmp.eq.s32.totalorder %s49, 0
      %p649 = por %p647, %p648
      %s650 = ssub.s32 %s43, %s50
      %p651 = scmp.eq.s32.totalorder %s650, 0
      %s653 = sadd.s32 %s652, 1
      %s654 = scalar_select %p651, %s652, %s653
      %p657 = pneg %p651
      %p658 = scmp.eq.s32.totalorder %s43, 1
      %p659 = por %p657, %p658
      %p660 = scmp.ne.s32.totalorder %s652, %s655
      %p661 = scmp.eq.s32.totalorder %s43, 0
      %p662 = por %p660, %p661
      %p663 = scmp.ne.s32.totalorder %s652, %s655
      %p664 = scmp.eq.s32.totalorder %s48, 1
      %p665 = por %p663, %p664
      %p666 = scmp.ne.s32.totalorder %s655, %s656
      %p667 = scmp.eq.s32.totalorder %s48, 0
      %p668 = por %p666, %p667
      %p669 = scmp.ne.s32.totalorder %s655, %s656
      %p670 = scmp.eq.s32.totalorder %s49, 1
      %p671 = por %p669, %p670
      %p673 = scmp.ne.s32.totalorder %s656, %s672
      %p674 = scmp.eq.s32.totalorder %s49, 0
      %p675 = por %p673, %p674
      %s677 = sadd.s32 %s676, 1
      %p680 = scmp.eq.s32.totalorder %s43, 1
      %p681 = scmp.ne.s32.totalorder %s676, %s678
      %p682 = scmp.eq.s32.totalorder %s43, 0
      %p683 = por %p681, %p682
      %p684 = scmp.ne.s32.totalorder %s676, %s678
      %p685 = scmp.eq.s32.totalorder %s48, 1
      %p686 = por %p684, %p685
      %p687 = scmp.ne.s32.totalorder %s678, %s679
      %p688 = scmp.eq.s32.totalorder %s48, 0
      %p689 = por %p687, %p688
      %p690 = scmp.ne.s32.totalorder %s678, %s679
      %p691 = scmp.eq.s32.totalorder %s49, 1
      %p692 = por %p690, %p691
      %p694 = scmp.ne.s32.totalorder %s679, %s693
      %p695 = scmp.eq.s32.totalorder %s49, 0
      %p696 = por %p694, %p695
      %p697 = scmp.le.s32.totalorder 1, %s43
      %p698 = scmp.lt.s32.totalorder %s43, 3
      %p699 = pnand %p697, %p698
      %p700 = pneg %p699
      // Predicated region
      $region9: #{tpu_custom_call.1} parent=5 // pred_check
        _
      $region10: #{tpu_custom_call.1} parent=5 // pred_check_branch
        %702 = sbr.rel (%p699) target = $region12
      $region11: #{tpu_custom_call.1} parent=5 // pred_region
        %s703 = ssub.s32 %s43, 1
        // Predicated region
        $region13: #{tpu_custom_call.1} parent=11 // pred_check
          %p704 = pneg %p64
        $region14: #{tpu_custom_call.1} parent=11 // pred_check_branch
          %706 = sbr.rel (%p704) target = $region16
        $region15: #{tpu_custom_call.1} parent=11 // pred_region
          _
        $region16: #{tpu_custom_call.1} parent=11 // pred_fallthru
          _
        // Predicated region
        $region17: #{tpu_custom_call.1} parent=11 // pred_check
          %p707 = pneg %p85
        $region18: #{tpu_custom_call.1} parent=11 // pred_check_branch
          %709 = sbr.rel (%p707) target = $region20
        $region19: #{tpu_custom_call.1} parent=11 // pred_region
          %s711 = ssub.s32 256, 256
          %712 = vsyncadd [#allocation4], %s711
          %s713 = sshll.u32 [#allocation3], 4
          %s714 = int_to_ptr.vmem [resolvable:$true] %s713
          %719 = dma.hbm_to_vmem [thread:$0]  %s1, 256, %s714, [#allocation4], 128, 128, 8
        $region20: #{tpu_custom_call.1} parent=11 // pred_fallthru
          _
        // Predicated region
        $region21: #{tpu_custom_call.1} parent=11 // pred_check
          %p720 = pneg %p106
        $region22: #{tpu_custom_call.1} parent=11 // pred_check_branch
          %722 = sbr.rel (%p720) target = $region24
        $region23: #{tpu_custom_call.1} parent=11 // pred_region
          %s724 = ssub.s32 256, 256
          %725 = vsyncadd [#allocation7], %s724
          %s726 = sshll.u32 [#allocation6], 4
          %s727 = int_to_ptr.vmem [resolvable:$true] %s726
          %732 = dma.hbm_to_vmem [thread:$0]  %s2, 256, %s727, [#allocation7], 128, 128, 8
        $region24: #{tpu_custom_call.1} parent=11 // pred_fallthru
          _
        // Predicated region
        $region25: #{tpu_custom_call.1} parent=11 // pred_check
          %p733 = pneg %p127
        $region26: #{tpu_custom_call.1} parent=11 // pred_check_branch
          %735 = sbr.rel (%p733) target = $region28
        $region27: #{tpu_custom_call.1} parent=11 // pred_region
          %s737 = ssub.s32 256, 256
          %738 = vsyncadd [#allocation7], %s737
          %s739 = sshll.u32 [#allocation8], 4
          %s740 = int_to_ptr.vmem [resolvable:$true] %s739
          %745 = dma.hbm_to_vmem [thread:$0]  %s3, 256, %s740, [#allocation7], 128, 128, 8
        $region28: #{tpu_custom_call.1} parent=11 // pred_fallthru
          _
        // Predicated region
        $region29: #{tpu_custom_call.1} parent=11 // pred_check
          %p746 = pneg %p148
        $region30: #{tpu_custom_call.1} parent=11 // pred_check_branch
          %748 = sbr.rel (%p746) target = $region32
        $region31: #{tpu_custom_call.1} parent=11 // pred_region
          _
        $region32: #{tpu_custom_call.1} parent=11 // pred_fallthru
          _
      $region12: #{tpu_custom_call.1} parent=5 // pred_fallthru
        _
      %p749 = scmp.lt.s32.totalorder %s43, 2
      // Predicated region
      $region33: #{tpu_custom_call.1} parent=5 // pred_check
        %p750 = pneg %p749
      $region34: #{tpu_custom_call.1} parent=5 // pred_check_branch
        %752 = sbr.rel (%p750) target = $region36
      $region35: #{tpu_custom_call.1} parent=5 // pred_region
        // Predicated region
        $region37: #{tpu_custom_call.1} parent=35 // pred_check
          %p753 = pneg %p168
        $region38: #{tpu_custom_call.1} parent=35 // pred_check_branch
          %755 = sbr.rel (%p753) target = $region40
        $region39: #{tpu_custom_call.1} parent=35 // pred_region
          %p756 = scmp.lt.s32.totalorder %s43, 1
          %s757 = scalar_select %p756, %s43, 1
          %s758 = smul.addr %s757, 4
          %s759 = smul.addr %s758, 8
          %s760 = scalar_lea.vmem %s5, %s759
        $region40: #{tpu_custom_call.1} parent=35 // pred_fallthru
          _
        // Predicated region
        $region41: #{tpu_custom_call.1} parent=35 // pred_check
          %p761 = pneg %p194
        $region42: #{tpu_custom_call.1} parent=35 // pred_check_branch
          %763 = sbr.rel (%p761) target = $region44
        $region43: #{tpu_custom_call.1} parent=35 // pred_region
          %p764 = scmp.lt.s32.totalorder %s43, 1
          %s765 = scalar_select %p764, %s43, 1
          %s766 = scalar_lea.vmem %s6, %s765
        $region44: #{tpu_custom_call.1} parent=35 // pred_fallthru
          _
        // Predicated region
        $region45: #{tpu_custom_call.1} parent=35 // pred_check
          %p767 = pneg %p220
        $region46: #{tpu_custom_call.1} parent=35 // pred_check_branch
          %769 = sbr.rel (%p767) target = $region48
        $region47: #{tpu_custom_call.1} parent=35 // pred_region
          %p770 = scmp.lt.s32.totalorder %s43, 1
          %s771 = scalar_select %p770, %s43, 1
          %s772 = smul.addr %s771, 4
          %s773 = smul.addr %s772, 8
          %s774 = scalar_lea.vmem %s7, %s773
        $region48: #{tpu_custom_call.1} parent=35 // pred_fallthru
          _
        // Predicated region
        $region49: #{tpu_custom_call.1} parent=35 // pred_check
          %p775 = pneg %p246
        $region50: #{tpu_custom_call.1} parent=35 // pred_check_branch
          %777 = sbr.rel (%p775) target = $region52
        $region51: #{tpu_custom_call.1} parent=35 // pred_region
          %p778 = scmp.lt.s32.totalorder %s43, 1
          %s779 = scalar_select %p778, %s43, 1
          %s780 = scalar_lea.vmem %s8, %s779
        $region52: #{tpu_custom_call.1} parent=35 // pred_fallthru
          _
        // Predicated region
        $region53: #{tpu_custom_call.1} parent=35 // pred_check
          %p781 = pneg %p272
        $region54: #{tpu_custom_call.1} parent=35 // pred_check_branch
          %783 = sbr.rel (%p781) target = $region56
        $region55: #{tpu_custom_call.1} parent=35 // pred_region
          %p784 = scmp.lt.s32.totalorder %s43, 1
          %s785 = scalar_select %p784, %s43, 1
          %s786 = scalar_lea.vmem %s9, %s785
        $region56: #{tpu_custom_call.1} parent=35 // pred_fallthru
          _
        // Predicated region
        $region57: #{tpu_custom_call.1} parent=35 // pred_check
          %p787 = pneg %p298
        $region58: #{tpu_custom_call.1} parent=35 // pred_check_branch
          %789 = sbr.rel (%p787) target = $region60
        $region59: #{tpu_custom_call.1} parent=35 // pred_region
          %p790 = scmp.lt.s32.totalorder %s43, 1
          %s791 = scalar_select %p790, %s43, 1
          %s792 = scalar_lea.vmem %s10, %s791
        $region60: #{tpu_custom_call.1} parent=35 // pred_fallthru
          _
        // Predicated region
        $region61: #{tpu_custom_call.1} parent=35 // pred_check
          %p793 = pneg %p324
        $region62: #{tpu_custom_call.1} parent=35 // pred_check_branch
          %795 = sbr.rel (%p793) target = $region64
        $region63: #{tpu_custom_call.1} parent=35 // pred_region
          %p796 = scmp.lt.s32.totalorder %s43, 1
          %s797 = scalar_select %p796, %s43, 1
          %s798 = smul.addr %s797, 4
          %s799 = smul.addr %s798, 8
          %s800 = scalar_lea.vmem %s11, %s799
        $region64: #{tpu_custom_call.1} parent=35 // pred_fallthru
          _
        // Predicated region
        $region65: #{tpu_custom_call.1} parent=35 // pred_check
          %p801 = pneg %p350
        $region66: #{tpu_custom_call.1} parent=35 // pred_check_branch
          %803 = sbr.rel (%p801) target = $region68
        $region67: #{tpu_custom_call.1} parent=35 // pred_region
          %p804 = scmp.lt.s32.totalorder %s43, 1
          %s805 = scalar_select %p804, %s43, 1
          %s806 = scalar_lea.vmem %s12, %s805
        $region68: #{tpu_custom_call.1} parent=35 // pred_fallthru
          _
        // Predicated region
        $region69: #{tpu_custom_call.1} parent=35 // pred_check
          %p807 = pneg %p376
        $region70: #{tpu_custom_call.1} parent=35 // pred_check_branch
          %809 = sbr.rel (%p807) target = $region72
        $region71: #{tpu_custom_call.1} parent=35 // pred_region
          %s810 = sand.u32 %s43, 1
          %s811 = scalar_lea.sflag [#allocation10], %s810
          %s812 = sand.u32 %s366, 1
          %s813 = smul.addr %s812, 32
          %s814 = scalar_lea.vmem [#allocation9], %s813
          %s816 = ssub.s32 512, 512
          %817 = vsyncadd %s811, %s816
          %s818 = smul.addr %s43, 4
          %s819 = smul.addr %s818, 128
          %s820 = scalar_lea.hbm %s13, %s819
          %s821 = sshll.u32 %s814, 4
          %s822 = int_to_ptr.vmem [resolvable:$true] %s821
          %827 = dma.hbm_to_vmem [thread:$0]  %s820, 512, %s822, %s811, 128, 128, 8
        $region72: #{tpu_custom_call.1} parent=35 // pred_fallthru
          _
        // Predicated region
        $region73: #{tpu_custom_call.1} parent=35 // pred_check
          %p828 = pneg %p402
        $region74: #{tpu_custom_call.1} parent=35 // pred_check_branch
          %830 = sbr.rel (%p828) target = $region76
        $region75: #{tpu_custom_call.1} parent=35 // pred_region
          %p831 = scmp.lt.s32.totalorder %s43, 1
          %s832 = scalar_select %p831, %s43, 1
          %s833 = scalar_lea.vmem %s14, %s832
        $region76: #{tpu_custom_call.1} parent=35 // pred_fallthru
          _
        // Predicated region
        $region77: #{tpu_custom_call.1} parent=35 // pred_check
          %p834 = pneg %p428
        $region78: #{tpu_custom_call.1} parent=35 // pred_check_branch
          %836 = sbr.rel (%p834) target = $region80
        $region79: #{tpu_custom_call.1} parent=35 // pred_region
          %s837 = sand.u32 %s43, 1
          %s838 = scalar_lea.sflag [#allocation10], %s837
          %s839 = sand.u32 %s418, 1
          %s840 = smul.addr %s839, 32
          %s841 = scalar_lea.vmem [#allocation11], %s840
          %s843 = ssub.s32 512, 512
          %844 = vsyncadd %s838, %s843
          %s845 = smul.addr %s43, 4
          %s846 = smul.addr %s845, 128
          %s847 = scalar_lea.hbm %s15, %s846
          %s848 = sshll.u32 %s841, 4
          %s849 = int_to_ptr.vmem [resolvable:$true] %s848
          %854 = dma.hbm_to_vmem [thread:$0]  %s847, 512, %s849, %s838, 128, 128, 8
        $region80: #{tpu_custom_call.1} parent=35 // pred_fallthru
          _
        // Predicated region
        $region81: #{tpu_custom_call.1} parent=35 // pred_check
          %p855 = pneg %p454
        $region82: #{tpu_custom_call.1} parent=35 // pred_check_branch
          %857 = sbr.rel (%p855) target = $region84
        $region83: #{tpu_custom_call.1} parent=35 // pred_region
          %p858 = scmp.lt.s32.totalorder %s43, 1
          %s859 = scalar_select %p858, %s43, 1
          %s860 = scalar_lea.vmem %s16, %s859
        $region84: #{tpu_custom_call.1} parent=35 // pred_fallthru
          _
        // Predicated region
        $region85: #{tpu_custom_call.1} parent=35 // pred_check
          %p861 = pneg %p480
        $region86: #{tpu_custom_call.1} parent=35 // pred_check_branch
          %863 = sbr.rel (%p861) target = $region88
        $region87: #{tpu_custom_call.1} parent=35 // pred_region
          %p864 = scmp.lt.s32.totalorder %s43, 1
          %s865 = scalar_select %p864, %s43, 1
          %s866 = scalar_lea.vmem %s17, %s865
        $region88: #{tpu_custom_call.1} parent=35 // pred_fallthru
          _
        // Predicated region
        $region89: #{tpu_custom_call.1} parent=35 // pred_check
          %p867 = pneg %p506
        $region90: #{tpu_custom_call.1} parent=35 // pred_check_branch
          %869 = sbr.rel (%p867) target = $region92
        $region91: #{tpu_custom_call.1} parent=35 // pred_region
          %s870 = sand.u32 %s43, 1
          %s871 = scalar_lea.sflag [#allocation13], %s870
          %s872 = sand.u32 %s496, 1
          %s873 = scalar_lea.vmem [#allocation12], %s872
          %s875 = ssub.s32 16, 16
          %876 = vsyncadd %s871, %s875
          %s877 = smul.addr %s43, 16
          %s878 = scalar_lea.hbm %s18, %s877
          %s880 = sshll.u32 %s873, 4
          %s881 = int_to_ptr.vmem [resolvable:$true] %s880
          %883 = dma.hbm_to_vmem [thread:$0]  %s878, 16, %s881, %s871
        $region92: #{tpu_custom_call.1} parent=35 // pred_fallthru
          _
        // Predicated region
        $region93: #{tpu_custom_call.1} parent=35 // pred_check
          %p884 = pneg %p532
        $region94: #{tpu_custom_call.1} parent=35 // pred_check_branch
          %886 = sbr.rel (%p884) target = $region96
        $region95: #{tpu_custom_call.1} parent=35 // pred_region
          %s887 = sand.u32 %s43, 1
          %s888 = scalar_lea.sflag [#allocation13], %s887
          %s889 = sand.u32 %s522, 1
          %s890 = smul.addr %s889, 32
          %s891 = scalar_lea.vmem [#allocation14], %s890
          %s893 = ssub.s32 512, 512
          %894 = vsyncadd %s888, %s893
          %s895 = smul.addr %s43, 4
          %s896 = smul.addr %s895, 128
          %s897 = scalar_lea.hbm %s19, %s896
          %s898 = sshll.u32 %s891, 4
          %s899 = int_to_ptr.vmem [resolvable:$true] %s898
          %904 = dma.hbm_to_vmem [thread:$0]  %s897, 512, %s899, %s888, 128, 128, 8
        $region96: #{tpu_custom_call.1} parent=35 // pred_fallthru
          _
        // Predicated region
        $region97: #{tpu_custom_call.1} parent=35 // pred_check
          %p905 = pneg %p558
        $region98: #{tpu_custom_call.1} parent=35 // pred_check_branch
          %907 = sbr.rel (%p905) target = $region100
        $region99: #{tpu_custom_call.1} parent=35 // pred_region
          %s908 = sand.u32 %s548, 1
          %s909 = scalar_lea.sflag [#allocation16], %s908
          %s910 = sand.u32 %s548, 1
          %s911 = scalar_lea.vmem [#allocation15], %s910
          %s913 = ssub.s32 16, 16
          %914 = vsyncadd %s909, %s913
          %s915 = smul.addr %s43, 16
          %s916 = scalar_lea.hbm %s20, %s915
          %s918 = sshll.u32 %s911, 4
          %s919 = int_to_ptr.vmem [resolvable:$true] %s918
          %921 = dma.hbm_to_vmem [thread:$0]  %s916, 16, %s919, %s909
        $region100: #{tpu_custom_call.1} parent=35 // pred_fallthru
          _
        // Predicated region
        $region101: #{tpu_custom_call.1} parent=35 // pred_check
          %p922 = pneg %p584
        $region102: #{tpu_custom_call.1} parent=35 // pred_check_branch
          %924 = sbr.rel (%p922) target = $region104
        $region103: #{tpu_custom_call.1} parent=35 // pred_region
          %p925 = scmp.lt.s32.totalorder %s43, 1
          %s926 = scalar_select %p925, %s43, 1
          %s927 = smul.addr %s926, 8
          %s928 = smul.addr %s927, 8
          %s929 = scalar_lea.vmem %s21, %s928
        $region104: #{tpu_custom_call.1} parent=35 // pred_fallthru
          _
        // Predicated region
        $region105: #{tpu_custom_call.1} parent=35 // pred_check
          %p930 = pneg %p610
        $region106: #{tpu_custom_call.1} parent=35 // pred_check_branch
          %932 = sbr.rel (%p930) target = $region108
        $region107: #{tpu_custom_call.1} parent=35 // pred_region
          %p933 = scmp.lt.s32.totalorder %s43, 1
          %s934 = scalar_select %p933, %s43, 1
          %s935 = scalar_lea.vmem %s22, %s934
        $region108: #{tpu_custom_call.1} parent=35 // pred_fallthru
          _
        // Predicated region
        $region109: #{tpu_custom_call.1} parent=35 // pred_check
          %p936 = pneg %p636
        $region110: #{tpu_custom_call.1} parent=35 // pred_check_branch
          %938 = sbr.rel (%p936) target = $region112
        $region111: #{tpu_custom_call.1} parent=35 // pred_region
          %p939 = scmp.lt.s32.totalorder %s43, 1
          %s940 = scalar_select %p939, %s43, 1
          %s941 = scalar_lea.vmem %s23, %s940
        $region112: #{tpu_custom_call.1} parent=35 // pred_fallthru
          _
        // Predicated region
        $region113: #{tpu_custom_call.1} parent=35 // pred_check
          %p942 = pneg %p662
        $region114: #{tpu_custom_call.1} parent=35 // pred_check_branch
          %944 = sbr.rel (%p942) target = $region116
        $region115: #{tpu_custom_call.1} parent=35 // pred_region
          %p945 = scmp.lt.s32.totalorder %s43, 1
          %s946 = scalar_select %p945, %s43, 1
          %s947 = scalar_lea.vmem %s24, %s946
        $region116: #{tpu_custom_call.1} parent=35 // pred_fallthru
          _
      $region36: #{tpu_custom_call.1} parent=5 // pred_fallthru
        _
      %p948 = scmp.le.s32.totalorder 1, %s43
      %p949 = scmp.lt.s32.totalorder %s43, 3
      %p950 = pnand %p948, %p949
      %p951 = pneg %p950
      // Predicated region
      $region117: #{tpu_custom_call.1} parent=5 // pred_check
        _
      $region118: #{tpu_custom_call.1} parent=5 // pred_check_branch
        %953 = sbr.rel (%p950) target = $region120
      $region119: #{tpu_custom_call.1} parent=5 // pred_region
        %s954 = ssub.s32 %s43, 1
        // Predicated region
        $region121: #{tpu_custom_call.1} parent=119 // pred_check
          %p955 = pneg %p85
        $region122: #{tpu_custom_call.1} parent=119 // pred_check_branch
          %957 = sbr.rel (%p955) target = $region124
        $region123: #{tpu_custom_call.1} parent=119 // pred_region
          %958 = dma.done [#allocation4], 256
        $region124: #{tpu_custom_call.1} parent=119 // pred_fallthru
          _
        // Predicated region
        $region125: #{tpu_custom_call.1} parent=119 // pred_check
          %p959 = pneg %p106
        $region126: #{tpu_custom_call.1} parent=119 // pred_check_branch
          %961 = sbr.rel (%p959) target = $region128
        $region127: #{tpu_custom_call.1} parent=119 // pred_region
          %962 = dma.done [#allocation7], 256
        $region128: #{tpu_custom_call.1} parent=119 // pred_fallthru
          _
        // Predicated region
        $region129: #{tpu_custom_call.1} parent=119 // pred_check
          %p963 = pneg %p127
        $region130: #{tpu_custom_call.1} parent=119 // pred_check_branch
          %965 = sbr.rel (%p963) target = $region132
        $region131: #{tpu_custom_call.1} parent=119 // pred_region
          %966 = dma.done [#allocation7], 256
        $region132: #{tpu_custom_call.1} parent=119 // pred_fallthru
          _
        %s967 = sand.u32 %s48, 1
        %s968 = scalar_lea.sflag [#allocation10], %s967
        %s969 = sand.u32 %s369, 1
        %s970 = smul.addr %s969, 32
        %s971 = scalar_lea.vmem [#allocation9], %s970
        // Predicated region
        $region133: #{tpu_custom_call.1} parent=119 // pred_check
          %p972 = pneg %p382
        $region134: #{tpu_custom_call.1} parent=119 // pred_check_branch
          %974 = sbr.rel (%p972) target = $region136
        $region135: #{tpu_custom_call.1} parent=119 // pred_region
          %975 = dma.done %s968, 512
        $region136: #{tpu_custom_call.1} parent=119 // pred_fallthru
          _
        %s976 = sand.u32 %s48, 1
        %s977 = scalar_lea.sflag [#allocation10], %s976
        %s978 = sand.u32 %s421, 1
        %s979 = smul.addr %s978, 32
        %s980 = scalar_lea.vmem [#allocation11], %s979
        // Predicated region
        $region137: #{tpu_custom_call.1} parent=119 // pred_check
          %p981 = pneg %p434
        $region138: #{tpu_custom_call.1} parent=119 // pred_check_branch
          %983 = sbr.rel (%p981) target = $region140
        $region139: #{tpu_custom_call.1} parent=119 // pred_region
          %984 = dma.done %s977, 512
        $region140: #{tpu_custom_call.1} parent=119 // pred_fallthru
          _
        %s985 = sand.u32 %s48, 1
        %s986 = scalar_lea.sflag [#allocation13], %s985
        %s987 = sand.u32 %s499, 1
        %s988 = scalar_lea.vmem [#allocation12], %s987
        // Predicated region
        $region141: #{tpu_custom_call.1} parent=119 // pred_check
          %p989 = pneg %p512
        $region142: #{tpu_custom_call.1} parent=119 // pred_check_branch
          %991 = sbr.rel (%p989) target = $region144
        $region143: #{tpu_custom_call.1} parent=119 // pred_region
          %992 = dma.done %s986, 16
        $region144: #{tpu_custom_call.1} parent=119 // pred_fallthru
          _
        %s993 = sand.u32 %s48, 1
        %s994 = scalar_lea.sflag [#allocation13], %s993
        %s995 = sand.u32 %s525, 1
        %s996 = smul.addr %s995, 32
        %s997 = scalar_lea.vmem [#allocation14], %s996
        // Predicated region
        $region145: #{tpu_custom_call.1} parent=119 // pred_check
          %p998 = pneg %p538
        $region146: #{tpu_custom_call.1} parent=119 // pred_check_branch
          %1000 = sbr.rel (%p998) target = $region148
        $region147: #{tpu_custom_call.1} parent=119 // pred_region
          %1001 = dma.done %s994, 512
        $region148: #{tpu_custom_call.1} parent=119 // pred_fallthru
          _
        %s1002 = sand.u32 %s551, 1
        %s1003 = scalar_lea.sflag [#allocation16], %s1002
        %s1004 = sand.u32 %s551, 1
        %s1005 = scalar_lea.vmem [#allocation15], %s1004
        // Predicated region
        $region149: #{tpu_custom_call.1} parent=119 // pred_check
          %p1006 = pneg %p564
        $region150: #{tpu_custom_call.1} parent=119 // pred_check_branch
          %1008 = sbr.rel (%p1006) target = $region152
        $region151: #{tpu_custom_call.1} parent=119 // pred_region
          %1009 = dma.done %s1003, 16
        $region152: #{tpu_custom_call.1} parent=119 // pred_fallthru
          _
        %p1010 = pneg %p64
        %p1011 = pneg %p61
        %p1012 = pneg %p85
        %p1013 = pneg %p82
        %p1014 = pneg %p106
        %p1015 = pneg %p103
        %p1016 = pneg %p127
        %p1017 = pneg %p124
        %p1018 = pneg %p148
        %p1019 = pneg %p145
        %p1020 = scmp.lt.s32.totalorder %s48, 1
        %s1021 = scalar_select %p1020, %s48, 1
        %s1022 = smul.addr %s1021, 4
        %s1023 = smul.addr %s1022, 8
        %s1024 = scalar_lea.vmem %s5, %s1023
        %p1025 = pneg %p174
        %p1026 = pneg %p171
        %p1027 = scmp.lt.s32.totalorder %s48, 1
        %s1028 = scalar_select %p1027, %s48, 1
        %s1029 = scalar_lea.vmem %s6, %s1028
        %p1030 = pneg %p200
        %p1031 = pneg %p197
        %p1032 = scmp.lt.s32.totalorder %s48, 1
        %s1033 = scalar_select %p1032, %s48, 1
        %s1034 = smul.addr %s1033, 4
        %s1035 = smul.addr %s1034, 8
        %s1036 = scalar_lea.vmem %s7, %s1035
        %p1037 = pneg %p226
        %p1038 = pneg %p223
        %p1039 = scmp.lt.s32.totalorder %s48, 1
        %s1040 = scalar_select %p1039, %s48, 1
        %s1041 = scalar_lea.vmem %s8, %s1040
        %p1042 = pneg %p252
        %p1043 = pneg %p249
        %p1044 = scmp.lt.s32.totalorder %s48, 1
        %s1045 = scalar_select %p1044, %s48, 1
        %s1046 = scalar_lea.vmem %s9, %s1045
        %p1047 = pneg %p278
        %p1048 = pneg %p275
        %p1049 = scmp.lt.s32.totalorder %s48, 1
        %s1050 = scalar_select %p1049, %s48, 1
        %s1051 = scalar_lea.vmem %s10, %s1050
        %p1052 = pneg %p304
        %p1053 = pneg %p301
        %p1054 = scmp.lt.s32.totalorder %s48, 1
        %s1055 = scalar_select %p1054, %s48, 1
        %s1056 = smul.addr %s1055, 4
        %s1057 = smul.addr %s1056, 8
        %s1058 = scalar_lea.vmem %s11, %s1057
        %p1059 = pneg %p330
        %p1060 = pneg %p327
        %p1061 = scmp.lt.s32.totalorder %s48, 1
        %s1062 = scalar_select %p1061, %s48, 1
        %s1063 = scalar_lea.vmem %s12, %s1062
        %p1064 = pneg %p356
        %p1065 = pneg %p353
        %s1066 = sand.u32 %s48, 1
        %s1067 = scalar_lea.sflag [#allocation10], %s1066
        %s1068 = sand.u32 %s369, 1
        %s1069 = smul.addr %s1068, 32
        %s1070 = scalar_lea.vmem [#allocation9], %s1069
        %p1071 = pneg %p382
        %p1072 = pneg %p379
        %p1073 = scmp.lt.s32.totalorder %s48, 1
        %s1074 = scalar_select %p1073, %s48, 1
        %s1075 = scalar_lea.vmem %s14, %s1074
        %p1076 = pneg %p408
        %p1077 = pneg %p405
        %s1078 = sand.u32 %s48, 1
        %s1079 = scalar_lea.sflag [#allocation10], %s1078
        %s1080 = sand.u32 %s421, 1
        %s1081 = smul.addr %s1080, 32
        %s1082 = scalar_lea.vmem [#allocation11], %s1081
        %p1083 = pneg %p434
        %p1084 = pneg %p431
        %p1085 = scmp.lt.s32.totalorder %s48, 1
        %s1086 = scalar_select %p1085, %s48, 1
        %s1087 = scalar_lea.vmem %s16, %s1086
        %p1088 = pneg %p460
        %p1089 = pneg %p457
        %p1090 = scmp.lt.s32.totalorder %s48, 1
        %s1091 = scalar_select %p1090, %s48, 1
        %s1092 = scalar_lea.vmem %s17, %s1091
        %p1093 = pneg %p486
        %p1094 = pneg %p483
        %s1095 = sand.u32 %s48, 1
        %s1096 = scalar_lea.sflag [#allocation13], %s1095
        %s1097 = sand.u32 %s499, 1
        %s1098 = scalar_lea.vmem [#allocation12], %s1097
        %p1099 = pneg %p512
        %p1100 = pneg %p509
        %s1101 = sand.u32 %s48, 1
        %s1102 = scalar_lea.sflag [#allocation13], %s1101
        %s1103 = sand.u32 %s525, 1
        %s1104 = smul.addr %s1103, 32
        %s1105 = scalar_lea.vmem [#allocation14], %s1104
        %p1106 = pneg %p538
        %p1107 = pneg %p535
        %s1108 = sand.u32 %s551, 1
        %s1109 = scalar_lea.sflag [#allocation16], %s1108
        %s1110 = sand.u32 %s551, 1
        %s1111 = scalar_lea.vmem [#allocation15], %s1110
        %p1112 = pneg %p564
        %p1113 = pneg %p561
        %p1114 = scmp.lt.s32.totalorder %s48, 1
        %s1115 = scalar_select %p1114, %s48, 1
        %s1116 = smul.addr %s1115, 8
        %s1117 = smul.addr %s1116, 8
        %s1118 = scalar_lea.vmem %s21, %s1117
        %p1119 = pneg %p590
        %p1120 = pneg %p587
        %p1121 = scmp.lt.s32.totalorder %s48, 1
        %s1122 = scalar_select %p1121, %s48, 1
        %s1123 = scalar_lea.vmem %s22, %s1122
        %p1124 = pneg %p616
        %p1125 = pneg %p613
        %p1126 = scmp.lt.s32.totalorder %s48, 1
        %s1127 = scalar_select %p1126, %s48, 1
        %s1128 = scalar_lea.vmem %s23, %s1127
        %p1129 = pneg %p642
        %p1130 = pneg %p639
        %p1131 = scmp.lt.s32.totalorder %s48, 1
        %s1132 = scalar_select %p1131, %s48, 1
        %s1133 = scalar_lea.vmem %s24, %s1132
        %p1134 = pneg %p668
        %p1135 = pneg %p665
        %p1136 = pneg %p689
        %p1137 = pneg %p686
        %p1138 = scmp.lt.s32.totalorder %s48, 1
        %s1139 = scalar_select %p1138, %s48, 1
        %s1140 = smul.addr %s1139, 4
        %s1141 = smul.addr %s1140, 8
        %s1142 = scalar_lea.vmem %s5, %s1141
        %p1143 = scmp.lt.s32.totalorder %s48, 1
        %s1144 = scalar_select %p1143, %s48, 1
        %s1145 = scalar_lea.vmem %s6, %s1144
        %p1146 = scmp.lt.s32.totalorder %s48, 1
        %s1147 = scalar_select %p1146, %s48, 1
        %s1148 = smul.addr %s1147, 4
        %s1149 = smul.addr %s1148, 8
        %s1150 = scalar_lea.vmem %s7, %s1149
        %p1151 = scmp.lt.s32.totalorder %s48, 1
        %s1152 = scalar_select %p1151, %s48, 1
        %s1153 = scalar_lea.vmem %s8, %s1152
        %p1154 = scmp.lt.s32.totalorder %s48, 1
        %s1155 = scalar_select %p1154, %s48, 1
        %s1156 = scalar_lea.vmem %s9, %s1155
        %p1157 = scmp.lt.s32.totalorder %s48, 1
        %s1158 = scalar_select %p1157, %s48, 1
        %s1159 = scalar_lea.vmem %s10, %s1158
        %p1160 = scmp.lt.s32.totalorder %s48, 1
        %s1161 = scalar_select %p1160, %s48, 1
        %s1162 = smul.addr %s1161, 4
        %s1163 = smul.addr %s1162, 8
        %s1164 = scalar_lea.vmem %s11, %s1163
        %p1165 = scmp.lt.s32.totalorder %s48, 1
        %s1166 = scalar_select %p1165, %s48, 1
        %s1167 = scalar_lea.vmem %s12, %s1166
        %p1168 = scmp.lt.s32.totalorder %s48, 1
        %s1169 = scalar_select %p1168, %s48, 1
        %s1170 = scalar_lea.vmem %s14, %s1169
        %p1171 = scmp.lt.s32.totalorder %s48, 1
        %s1172 = scalar_select %p1171, %s48, 1
        %s1173 = scalar_lea.vmem %s16, %s1172
        %p1174 = scmp.lt.s32.totalorder %s48, 1
        %s1175 = scalar_select %p1174, %s48, 1
        %s1176 = scalar_lea.vmem %s17, %s1175
        %p1177 = scmp.lt.s32.totalorder %s48, 1
        %s1178 = scalar_select %p1177, %s48, 1
        %s1179 = smul.addr %s1178, 8
        %s1180 = smul.addr %s1179, 8
        %s1181 = scalar_lea.vmem %s21, %s1180
        %p1182 = scmp.lt.s32.totalorder %s48, 1
        %s1183 = scalar_select %p1182, %s48, 1
        %s1184 = scalar_lea.vmem %s22, %s1183
        %p1185 = scmp.lt.s32.totalorder %s48, 1
        %s1186 = scalar_select %p1185, %s48, 1
        %s1187 = scalar_lea.vmem %s23, %s1186
        %p1188 = scmp.lt.s32.totalorder %s48, 1
        %s1189 = scalar_select %p1188, %s48, 1
        %s1190 = scalar_lea.vmem %s24, %s1189
        %p1191 = scmp.eq.s32.totalorder %s48, 0
        // Predicated region
        $region153: #{tpu_custom_call.1} parent=119 // pred_check
          %p1192 = pneg %p1191
        $region154: #{tpu_custom_call.1} parent=119 // pred_check_branch
          %1194 = sbr.rel (%p1192) target = $region156
        $region155: #{tpu_custom_call.1} parent=119 // pred_region
          %v1195 = vld [vmem:[%s0] sm:$0xff]
          %v1196 = vld [vmem:[%s0 + $0x8] sm:$0xff]
          %vm1197 = vcmask 261120
          %1198 = vst.msk [vmem:[#allocation2] sm:$0xff] %vm1197, %v1195
          %1199 = vst.msk [vmem:[#allocation2 + $0x8] sm:$0xff] %vm1197, %v1196
        $region156: #{tpu_custom_call.1} parent=119 // pred_fallthru
          _
        %v1200 = vld [vmem:[#allocation2] sm:$0xff]
        %v1201 = vld [vmem:[#allocation2 + $0x8] sm:$0xff]
        %v1202 = vld [vmem:[#allocation3] sm:$0xff]
        %v1203 = vld [vmem:[#allocation3 + $0x8] sm:$0xff]
        %v1204 = vld [vmem:[#allocation6] sm:$0xff]
        %v1205 = vld [vmem:[#allocation6 + $0x8] sm:$0xff]
        %v1206 = vld [vmem:[#allocation8] sm:$0xff]
        %v1207 = vld [vmem:[#allocation8 + $0x8] sm:$0xff]
        %v1208 = vld [vmem:[%s4] sm:$0xff]
        %v1209 = vld [vmem:[%s4 + $0x8] sm:$0xff]
        %v1210 = vld [vmem:[%s1142] sm:$0xff]
        %v1211 = vld [vmem:[%s1142 + $0x8] sm:$0xff]
        %v1212 = vld [vmem:[%s1142 + $0x10] sm:$0xff]
        %v1213 = vld [vmem:[%s1142 + $0x18] sm:$0xff]
        %v1214 = vld [vmem:[%s1145] sm:$0x1]
        %v1216 = vlaneseq
        %v1217 = vshrl.u32 %v1216, 7
        %v1218 = vsub.s32 0, %v1217
        %v1219 = vrot.slane %v1214, %v1218
        %vm1221 = vcmask 261120
        %v1223 = vsel %vm1221, %v1200, 0
        %v1226 = vsel %vm1221, %v1201, 0
        %1228 = vmatprep.subr.mxu0 0.0
        %1229 = vmatpush1.msra.mxu0 %v1210
        %1230 = vmatprep.subr.mxu0 0.0
        %1231 = vmatpush1.msra.mxu0 %v1211
        %1232 = vmatprep.subr.mxu0 0.0
        %1233 = vmatpush1.msra.mxu0 %v1212
        %1234 = vmatprep.subr.mxu0 0.0
        %1235 = vmatpush1.msra.mxu0 %v1213
        %1236 = vmatprep.subr.mxu0 0.0
        %1237 = vmatpush1.msra.mxu0 0.0
        %1238 = vmatprep.subr.mxu0 0.0
        %1239 = vmatpush1.msra.mxu0 0.0
        %1240 = vmatprep.subr.mxu0 0.0
        %1241 = vmatpush1.msra.mxu0 0.0
        %1242 = vmatprep.subr.mxu0 0.0
        %1243 = vmatpush1.msra.mxu0 0.0
        %1244 = vmatprep.subr.mxu0 0.0
        %1245 = vmatpush1.msra.mxu0 0.0
        %1246 = vmatprep.subr.mxu0 0.0
        %1247 = vmatpush1.msra.mxu0 0.0
        %1248 = vmatprep.subr.mxu0 0.0
        %1249 = vmatpush1.msra.mxu0 0.0
        %1250 = vmatprep.subr.mxu0 0.0
        %1251 = vmatpush1.msra.mxu0 0.0
        %1252 = vmatprep.subr.mxu0 0.0
        %1253 = vmatpush1.msra.mxu0 0.0
        %1254 = vmatprep.subr.mxu0 0.0
        %1255 = vmatpush1.msra.mxu0 0.0
        %1256 = vmatprep.subr.mxu0 0.0
        %1257 = vmatpush1.msra.mxu0 0.0
        %1258 = vmatprep.subr.mxu0 0.0
        %1259 = vmatpush1.msra.mxu0 0.0
        %1260 = vmatprep.subr.mxu0 0.0
        %1261 = vmatpush1.msra.mxu0 0.0
        %1262 = vmatprep.subr.mxu0 0.0
        %1263 = vmatpush1.msra.mxu0 0.0
        %1264 = vmatprep.subr.mxu0 0.0
        %1265 = vmatpush1.msra.mxu0 0.0
        %1266 = vmatprep.subr.mxu0 0.0
        %1267 = vmatpush1.msra.mxu0 0.0
        %1268 = vmatprep.subr.mxu0 0.0
        %1269 = vmatpush1.msra.mxu0 0.0
        %1270 = vmatprep.subr.mxu0 0.0
        %1271 = vmatpush1.msra.mxu0 0.0
        %1272 = vmatprep.subr.mxu0 0.0
        %1273 = vmatpush1.msra.mxu0 0.0
        %1274 = vmatprep.subr.mxu0 0.0
        %1275 = vmatpush1.msra.mxu0 0.0
        %1276 = vmatprep.subr.mxu0 0.0
        %1277 = vmatpush1.msra.mxu0 0.0
        %1278 = vmatprep.subr.mxu0 0.0
        %1279 = vmatpush1.msra.mxu0 0.0
        %1280 = vmatprep.subr.mxu0 0.0
        %1281 = vmatpush1.msra.mxu0 0.0
        %1282 = vmatprep.subr.mxu0 0.0
        %1283 = vmatpush1.msra.mxu0 0.0
        %1284 = vmatprep.subr.mxu0 0.0
        %1285 = vmatpush1.msra.mxu0 0.0
        %1286 = vmatprep.subr.mxu0 0.0
        %1287 = vmatpush1.msra.mxu0 0.0
        %1288 = vmatprep.subr.mxu0 0.0
        %1289 = vmatpush1.msra.mxu0 0.0
        %1290 = vmatprep.subr.mxu0 0.0
        %1291 = vmatpush1.msra.mxu0 0.0
        %1292 = vmatprep.mubr.f32.mxu0 0.0
        %1293 = vmatmul.mubr.f32.gmra.mrb[0].mxu0 %v1223
        %v1294 = vpop.f32.mrb[0].mxu0
        %v1295 = vadd.f32 %v1219, %v1294
        %v1296 = vpop.f32.mrb[0].mxu0
        %1297 = vmatprep.mubr.f32.mxu0 0.0
        %1298 = vmatmul.mubr.f32.gmra.mrb[0].mxu0 %v1226
        %v1299 = vpop.f32.mrb[0].mxu0
        %v1300 = vadd.f32 %v1219, %v1299
        %v1301 = vpop.f32.mrb[0].mxu0
        %1302 = vdwg.mxu0
        %1304 = vrot.lane.b32.xlu0 %v1295, 96
        %v1305 = vpop.permute.xlu0 %1304
        %vm1306 = vcmask 130048
        %v1307 = vsel %vm1306, %v1295, 0
        %v1309 = vsel %vm1306, %v1305, 0
        %1311 = vmatprep.subr.mxu0 0.0
        %1312 = vmatpush1.xpose.msra.mxu0 %v1309
        %1313 = vmatprep.subr.mxu0 0.0
        %1314 = vmatpush1.xpose.msra.mxu0 0.0
        %1315 = vmatprep.subr.mxu0 0.0
        %1316 = vmatpush1.xpose.msra.mxu0 0.0
        %1317 = vmatprep.subr.mxu0 0.0
        %1318 = vmatpush1.xpose.msra.mxu0 0.0
        %1319 = vmatprep.subr.mxu0 0.0
        %1320 = vmatpush1.xpose.msra.mxu0 0.0
        %1321 = vmatprep.subr.mxu0 0.0
        %1322 = vmatpush1.xpose.msra.mxu0 0.0
        %1323 = vmatprep.subr.mxu0 0.0
        %1324 = vmatpush1.xpose.msra.mxu0 0.0
        %1325 = vmatprep.subr.mxu0 0.0
        %1326 = vmatpush1.xpose.msra.mxu0 0.0
        %1327 = vmatprep.subr.mxu0 0.0
        %1328 = vmatpush1.xpose.msra.mxu0 0.0
        %1329 = vmatprep.subr.mxu0 0.0
        %1330 = vmatpush1.xpose.msra.mxu0 0.0
        %1331 = vmatprep.subr.mxu0 0.0
        %1332 = vmatpush1.xpose.msra.mxu0 0.0
        %1333 = vmatprep.subr.mxu0 0.0
        %1334 = vmatpush1.xpose.msra.mxu0 0.0
        %1335 = vmatprep.subr.mxu0 0.0
        %1336 = vmatpush1.xpose.msra.mxu0 0.0
        %1337 = vmatprep.subr.mxu0 0.0
        %1338 = vmatpush1.xpose.msra.mxu0 0.0
        %1339 = vmatprep.subr.mxu0 0.0
        %1340 = vmatpush1.xpose.msra.mxu0 0.0
        %1341 = vmatprep.subr.mxu0 0.0
        %1342 = vmatpush1.xpose.msra.mxu0 0.0
        %1343 = vmatprep.subr.mxu0 0.0
        %1344 = vmatpush1.xpose.msra.mxu0 0.0
        %1345 = vmatprep.subr.mxu0 0.0
        %1346 = vmatpush1.xpose.msra.mxu0 0.0
        %1347 = vmatprep.subr.mxu0 0.0
        %1348 = vmatpush1.xpose.msra.mxu0 0.0
        %1349 = vmatprep.subr.mxu0 0.0
        %1350 = vmatpush1.xpose.msra.mxu0 0.0
        %1351 = vmatprep.subr.mxu0 0.0
        %1352 = vmatpush1.xpose.msra.mxu0 0.0
        %1353 = vmatprep.subr.mxu0 0.0
        %1354 = vmatpush1.xpose.msra.mxu0 0.0
        %1355 = vmatprep.subr.mxu0 0.0
        %1356 = vmatpush1.xpose.msra.mxu0 0.0
        %1357 = vmatprep.subr.mxu0 0.0
        %1358 = vmatpush1.xpose.msra.mxu0 0.0
        %1359 = vmatprep.subr.mxu0 0.0
        %1360 = vmatpush1.xpose.msra.mxu0 0.0
        %1361 = vmatprep.subr.mxu0 0.0
        %1362 = vmatpush1.xpose.msra.mxu0 0.0
        %1363 = vmatprep.subr.mxu0 0.0
        %1364 = vmatpush1.xpose.msra.mxu0 0.0
        %1365 = vmatprep.subr.mxu0 0.0
        %1366 = vmatpush1.xpose.msra.mxu0 0.0
        %1367 = vmatprep.subr.mxu0 0.0
        %1368 = vmatpush1.xpose.msra.mxu0 0.0
        %1369 = vmatprep.subr.mxu0 0.0
        %1370 = vmatpush1.xpose.msra.mxu0 0.0
        %1371 = vmatprep.subr.mxu0 0.0
        %1372 = vmatpush1.xpose.msra.mxu0 0.0
        %1373 = vmatprep.subr.mxu0 0.0
        %1374 = vmatpush1.xpose.msra.mxu0 0.0
        %1375 = vmatprep.mubr.f32.mxu0 0.0
        %1376 = vmatmul.mubr.f32.gmra.mrb[0].mxu0 %v1307
        %v1377 = vpop.f32.mrb[0].mxu0
        %v1378 = vadd.f32 0.0, %v1377
        %v1379 = vpop.f32.mrb[0].mxu0
        %1380 = vdwg.mxu0
        %v1381 = vmul.f32 %v1378, 0.25
        %vm1382 = vcmp.gt.f32.partialorder %v1204, 0.0
        %v1383 = vsel %vm1382, -1e+30, %v1381
        %vm1384 = vcmask 64512
        %v1385 = vsel %vm1384, %v1383, -inf
        %1386 = vmax.xlane.f32.xlu0 %v1385
        %v1387 = vpop.xlane.xlu0 %1386
        %v1388 = vsub.f32 %v1383, %v1387
        %v1389 = vmul.f32 %v1388, 1.442695
        %v1390 = vpow.pop %v1389
        %v1391 = vsel %vm1384, %v1390, 0.0
        %1392 = vadd.xlane.f32.xlu0 %v1391
        %v1393 = vpop.xlane.xlu0 %1392
        %v1394 = vrcp.pop %v1393
        %v1395 = vmul.f32 %v1390, %v1394
        %1396 = vrot.lane.b32.xlu0 %v1295, 64
        %v1397 = vpop.permute.xlu0 %1396
        %v1400 = vsel %vm1384, %v1395, 0
        %1402 = vmatprep.subr.mxu0 0.0
        %1403 = vmatpush1.msra.mxu0 %v1397
        %1404 = vmatprep.subr.mxu0 0.0
        %1405 = vmatpush1.msra.mxu0 0.0
        %1406 = vmatprep.subr.mxu0 0.0
        %1407 = vmatpush1.msra.mxu0 0.0
        %1408 = vmatprep.subr.mxu0 0.0
        %1409 = vmatpush1.msra.mxu0 0.0
        %1410 = vmatprep.subr.mxu0 0.0
        %1411 = vmatpush1.msra.mxu0 0.0
        %1412 = vmatprep.subr.mxu0 0.0
        %1413 = vmatpush1.msra.mxu0 0.0
        %1414 = vmatprep.subr.mxu0 0.0
        %1415 = vmatpush1.msra.mxu0 0.0
        %1416 = vmatprep.subr.mxu0 0.0
        %1417 = vmatpush1.msra.mxu0 0.0
        %1418 = vmatprep.subr.mxu0 0.0
        %1419 = vmatpush1.msra.mxu0 0.0
        %1420 = vmatprep.subr.mxu0 0.0
        %1421 = vmatpush1.msra.mxu0 0.0
        %1422 = vmatprep.subr.mxu0 0.0
        %1423 = vmatpush1.msra.mxu0 0.0
        %1424 = vmatprep.subr.mxu0 0.0
        %1425 = vmatpush1.msra.mxu0 0.0
        %1426 = vmatprep.subr.mxu0 0.0
        %1427 = vmatpush1.msra.mxu0 0.0
        %1428 = vmatprep.subr.mxu0 0.0
        %1429 = vmatpush1.msra.mxu0 0.0
        %1430 = vmatprep.subr.mxu0 0.0
        %1431 = vmatpush1.msra.mxu0 0.0
        %1432 = vmatprep.subr.mxu0 0.0
        %1433 = vmatpush1.msra.mxu0 0.0
        %1434 = vmatprep.subr.mxu0 0.0
        %1435 = vmatpush1.msra.mxu0 0.0
        %1436 = vmatprep.subr.mxu0 0.0
        %1437 = vmatpush1.msra.mxu0 0.0
        %1438 = vmatprep.subr.mxu0 0.0
        %1439 = vmatpush1.msra.mxu0 0.0
        %1440 = vmatprep.subr.mxu0 0.0
        %1441 = vmatpush1.msra.mxu0 0.0
        %1442 = vmatprep.subr.mxu0 0.0
        %1443 = vmatpush1.msra.mxu0 0.0
        %1444 = vmatprep.subr.mxu0 0.0
        %1445 = vmatpush1.msra.mxu0 0.0
        %1446 = vmatprep.subr.mxu0 0.0
        %1447 = vmatpush1.msra.mxu0 0.0
        %1448 = vmatprep.subr.mxu0 0.0
        %1449 = vmatpush1.msra.mxu0 0.0
        %1450 = vmatprep.subr.mxu0 0.0
        %1451 = vmatpush1.msra.mxu0 0.0
        %1452 = vmatprep.subr.mxu0 0.0
        %1453 = vmatpush1.msra.mxu0 0.0
        %1454 = vmatprep.subr.mxu0 0.0
        %1455 = vmatpush1.msra.mxu0 0.0
        %1456 = vmatprep.subr.mxu0 0.0
        %1457 = vmatpush1.msra.mxu0 0.0
        %1458 = vmatprep.subr.mxu0 0.0
        %1459 = vmatpush1.msra.mxu0 0.0
        %1460 = vmatprep.subr.mxu0 0.0
        %1461 = vmatpush1.msra.mxu0 0.0
        %1462 = vmatprep.subr.mxu0 0.0
        %1463 = vmatpush1.msra.mxu0 0.0
        %1464 = vmatprep.subr.mxu0 0.0
        %1465 = vmatpush1.msra.mxu0 0.0
        %1466 = vmatprep.mubr.f32.mxu0 0.0
        %1467 = vmatmul.mubr.f32.gmra.mrb[0].mxu0 %v1400
        %v1468 = vpop.f32.mrb[0].mxu0
        %v1469 = vadd.f32 0.0, %v1468
        %v1470 = vpop.f32.mrb[0].mxu0
        %1471 = vdwg.mxu0
        %1473 = vrot.lane.b32.xlu0 %v1300, 96
        %v1474 = vpop.permute.xlu0 %1473
        %v1475 = vsel %vm1306, %v1300, 0
        %v1477 = vsel %vm1306, %v1474, 0
        %1479 = vmatprep.subr.mxu0 0.0
        %1480 = vmatpush1.xpose.msra.mxu0 %v1477
        %1481 = vmatprep.subr.mxu0 0.0
        %1482 = vmatpush1.xpose.msra.mxu0 0.0
        %1483 = vmatprep.subr.mxu0 0.0
        %1484 = vmatpush1.xpose.msra.mxu0 0.0
        %1485 = vmatprep.subr.mxu0 0.0
        %1486 = vmatpush1.xpose.msra.mxu0 0.0
        %1487 = vmatprep.subr.mxu0 0.0
        %1488 = vmatpush1.xpose.msra.mxu0 0.0
        %1489 = vmatprep.subr.mxu0 0.0
        %1490 = vmatpush1.xpose.msra.mxu0 0.0
        %1491 = vmatprep.subr.mxu0 0.0
        %1492 = vmatpush1.xpose.msra.mxu0 0.0
        %1493 = vmatprep.subr.mxu0 0.0
        %1494 = vmatpush1.xpose.msra.mxu0 0.0
        %1495 = vmatprep.subr.mxu0 0.0
        %1496 = vmatpush1.xpose.msra.mxu0 0.0
        %1497 = vmatprep.subr.mxu0 0.0
        %1498 = vmatpush1.xpose.msra.mxu0 0.0
        %1499 = vmatprep.subr.mxu0 0.0
        %1500 = vmatpush1.xpose.msra.mxu0 0.0
        %1501 = vmatprep.subr.mxu0 0.0
        %1502 = vmatpush1.xpose.msra.mxu0 0.0
        %1503 = vmatprep.subr.mxu0 0.0
        %1504 = vmatpush1.xpose.msra.mxu0 0.0
        %1505 = vmatprep.subr.mxu0 0.0
        %1506 = vmatpush1.xpose.msra.mxu0 0.0
        %1507 = vmatprep.subr.mxu0 0.0
        %1508 = vmatpush1.xpose.msra.mxu0 0.0
        %1509 = vmatprep.subr.mxu0 0.0
        %1510 = vmatpush1.xpose.msra.mxu0 0.0
        %1511 = vmatprep.subr.mxu0 0.0
        %1512 = vmatpush1.xpose.msra.mxu0 0.0
        %1513 = vmatprep.subr.mxu0 0.0
        %1514 = vmatpush1.xpose.msra.mxu0 0.0
        %1515 = vmatprep.subr.mxu0 0.0
        %1516 = vmatpush1.xpose.msra.mxu0 0.0
        %1517 = vmatprep.subr.mxu0 0.0
        %1518 = vmatpush1.xpose.msra.mxu0 0.0
        %1519 = vmatprep.subr.mxu0 0.0
        %1520 = vmatpush1.xpose.msra.mxu0 0.0
        %1521 = vmatprep.subr.mxu0 0.0
        %1522 = vmatpush1.xpose.msra.mxu0 0.0
        %1523 = vmatprep.subr.mxu0 0.0
        %1524 = vmatpush1.xpose.msra.mxu0 0.0
        %1525 = vmatprep.subr.mxu0 0.0
        %1526 = vmatpush1.xpose.msra.mxu0 0.0
        %1527 = vmatprep.subr.mxu0 0.0
        %1528 = vmatpush1.xpose.msra.mxu0 0.0
        %1529 = vmatprep.subr.mxu0 0.0
        %1530 = vmatpush1.xpose.msra.mxu0 0.0
        %1531 = vmatprep.subr.mxu0 0.0
        %1532 = vmatpush1.xpose.msra.mxu0 0.0
        %1533 = vmatprep.subr.mxu0 0.0
        %1534 = vmatpush1.xpose.msra.mxu0 0.0
        %1535 = vmatprep.subr.mxu0 0.0
        %1536 = vmatpush1.xpose.msra.mxu0 0.0
        %1537 = vmatprep.subr.mxu0 0.0
        %1538 = vmatpush1.xpose.msra.mxu0 0.0
        %1539 = vmatprep.subr.mxu0 0.0
        %1540 = vmatpush1.xpose.msra.mxu0 0.0
        %1541 = vmatprep.subr.mxu0 0.0
        %1542 = vmatpush1.xpose.msra.mxu0 0.0
        %1543 = vmatprep.mubr.f32.mxu0 0.0
        %1544 = vmatmul.mubr.f32.gmra.mrb[0].mxu0 %v1475
        %v1545 = vpop.f32.mrb[0].mxu0
        %v1546 = vadd.f32 0.0, %v1545
        %v1547 = vpop.f32.mrb[0].mxu0
        %1548 = vdwg.mxu0
        %v1549 = vmul.f32 %v1546, 0.25
        %vm1550 = vcmp.gt.f32.partialorder %v1205, 0.0
        %v1551 = vsel %vm1550, -1e+30, %v1549
        %v1552 = vsel %vm1384, %v1551, -inf
        %1553 = vmax.xlane.f32.xlu0 %v1552
        %v1554 = vpop.xlane.xlu0 %1553
        %v1555 = vsub.f32 %v1551, %v1554
        %v1556 = vmul.f32 %v1555, 1.442695
        %v1557 = vpow.pop %v1556
        %v1558 = vsel %vm1384, %v1557, 0.0
        %1559 = vadd.xlane.f32.xlu0 %v1558
        %v1560 = vpop.xlane.xlu0 %1559
        %v1561 = vrcp.pop %v1560
        %v1562 = vmul.f32 %v1557, %v1561
        %1563 = vrot.lane.b32.xlu0 %v1300, 64
        %v1564 = vpop.permute.xlu0 %1563
        %v1567 = vsel %vm1384, %v1562, 0
        %1569 = vmatprep.subr.mxu0 0.0
        %1570 = vmatpush1.msra.mxu0 %v1564
        %1571 = vmatprep.subr.mxu0 0.0
        %1572 = vmatpush1.msra.mxu0 0.0
        %1573 = vmatprep.subr.mxu0 0.0
        %1574 = vmatpush1.msra.mxu0 0.0
        %1575 = vmatprep.subr.mxu0 0.0
        %1576 = vmatpush1.msra.mxu0 0.0
        %1577 = vmatprep.subr.mxu0 0.0
        %1578 = vmatpush1.msra.mxu0 0.0
        %1579 = vmatprep.subr.mxu0 0.0
        %1580 = vmatpush1.msra.mxu0 0.0
        %1581 = vmatprep.subr.mxu0 0.0
        %1582 = vmatpush1.msra.mxu0 0.0
        %1583 = vmatprep.subr.mxu0 0.0
        %1584 = vmatpush1.msra.mxu0 0.0
        %1585 = vmatprep.subr.mxu0 0.0
        %1586 = vmatpush1.msra.mxu0 0.0
        %1587 = vmatprep.subr.mxu0 0.0
        %1588 = vmatpush1.msra.mxu0 0.0
        %1589 = vmatprep.subr.mxu0 0.0
        %1590 = vmatpush1.msra.mxu0 0.0
        %1591 = vmatprep.subr.mxu0 0.0
        %1592 = vmatpush1.msra.mxu0 0.0
        %1593 = vmatprep.subr.mxu0 0.0
        %1594 = vmatpush1.msra.mxu0 0.0
        %1595 = vmatprep.subr.mxu0 0.0
        %1596 = vmatpush1.msra.mxu0 0.0
        %1597 = vmatprep.subr.mxu0 0.0
        %1598 = vmatpush1.msra.mxu0 0.0
        %1599 = vmatprep.subr.mxu0 0.0
        %1600 = vmatpush1.msra.mxu0 0.0
        %1601 = vmatprep.subr.mxu0 0.0
        %1602 = vmatpush1.msra.mxu0 0.0
        %1603 = vmatprep.subr.mxu0 0.0
        %1604 = vmatpush1.msra.mxu0 0.0
        %1605 = vmatprep.subr.mxu0 0.0
        %1606 = vmatpush1.msra.mxu0 0.0
        %1607 = vmatprep.subr.mxu0 0.0
        %1608 = vmatpush1.msra.mxu0 0.0
        %1609 = vmatprep.subr.mxu0 0.0
        %1610 = vmatpush1.msra.mxu0 0.0
        %1611 = vmatprep.subr.mxu0 0.0
        %1612 = vmatpush1.msra.mxu0 0.0
        %1613 = vmatprep.subr.mxu0 0.0
        %1614 = vmatpush1.msra.mxu0 0.0
        %1615 = vmatprep.subr.mxu0 0.0
        %1616 = vmatpush1.msra.mxu0 0.0
        %1617 = vmatprep.subr.mxu0 0.0
        %1618 = vmatpush1.msra.mxu0 0.0
        %1619 = vmatprep.subr.mxu0 0.0
        %1620 = vmatpush1.msra.mxu0 0.0
        %1621 = vmatprep.subr.mxu0 0.0
        %1622 = vmatpush1.msra.mxu0 0.0
        %1623 = vmatprep.subr.mxu0 0.0
        %1624 = vmatpush1.msra.mxu0 0.0
        %1625 = vmatprep.subr.mxu0 0.0
        %1626 = vmatpush1.msra.mxu0 0.0
        %1627 = vmatprep.subr.mxu0 0.0
        %1628 = vmatpush1.msra.mxu0 0.0
        %1629 = vmatprep.subr.mxu0 0.0
        %1630 = vmatpush1.msra.mxu0 0.0
        %1631 = vmatprep.subr.mxu0 0.0
        %1632 = vmatpush1.msra.mxu0 0.0
        %1633 = vmatprep.mubr.f32.mxu0 0.0
        %1634 = vmatmul.mubr.f32.gmra.mrb[0].mxu0 %v1567
        %v1635 = vpop.f32.mrb[0].mxu0
        %v1636 = vadd.f32 0.0, %v1635
        %v1637 = vpop.f32.mrb[0].mxu0
        %1638 = vdwg.mxu0
        %1639 = vrot.lane.b32.xlu0 %v1295, 112
        %v1640 = vpop.permute.xlu0 %1639
        %1641 = vrot.lane.b32.xlu0 %v1295, 80
        %v1642 = vpop.permute.xlu0 %1641
        %v1643 = vsel %vm1306, %v1640, 0
        %v1645 = vsel %vm1306, %v1642, 0
        %1647 = vmatprep.subr.mxu0 0.0
        %1648 = vmatpush1.xpose.msra.mxu0 %v1645
        %1649 = vmatprep.subr.mxu0 0.0
        %1650 = vmatpush1.xpose.msra.mxu0 0.0
        %1651 = vmatprep.subr.mxu0 0.0
        %1652 = vmatpush1.xpose.msra.mxu0 0.0
        %1653 = vmatprep.subr.mxu0 0.0
        %1654 = vmatpush1.xpose.msra.mxu0 0.0
        %1655 = vmatprep.subr.mxu0 0.0
        %1656 = vmatpush1.xpose.msra.mxu0 0.0
        %1657 = vmatprep.subr.mxu0 0.0
        %1658 = vmatpush1.xpose.msra.mxu0 0.0
        %1659 = vmatprep.subr.mxu0 0.0
        %1660 = vmatpush1.xpose.msra.mxu0 0.0
        %1661 = vmatprep.subr.mxu0 0.0
        %1662 = vmatpush1.xpose.msra.mxu0 0.0
        %1663 = vmatprep.subr.mxu0 0.0
        %1664 = vmatpush1.xpose.msra.mxu0 0.0
        %1665 = vmatprep.subr.mxu0 0.0
        %1666 = vmatpush1.xpose.msra.mxu0 0.0
        %1667 = vmatprep.subr.mxu0 0.0
        %1668 = vmatpush1.xpose.msra.mxu0 0.0
        %1669 = vmatprep.subr.mxu0 0.0
        %1670 = vmatpush1.xpose.msra.mxu0 0.0
        %1671 = vmatprep.subr.mxu0 0.0
        %1672 = vmatpush1.xpose.msra.mxu0 0.0
        %1673 = vmatprep.subr.mxu0 0.0
        %1674 = vmatpush1.xpose.msra.mxu0 0.0
        %1675 = vmatprep.subr.mxu0 0.0
        %1676 = vmatpush1.xpose.msra.mxu0 0.0
        %1677 = vmatprep.subr.mxu0 0.0
        %1678 = vmatpush1.xpose.msra.mxu0 0.0
        %1679 = vmatprep.subr.mxu0 0.0
        %1680 = vmatpush1.xpose.msra.mxu0 0.0
        %1681 = vmatprep.subr.mxu0 0.0
        %1682 = vmatpush1.xpose.msra.mxu0 0.0
        %1683 = vmatprep.subr.mxu0 0.0
        %1684 = vmatpush1.xpose.msra.mxu0 0.0
        %1685 = vmatprep.subr.mxu0 0.0
        %1686 = vmatpush1.xpose.msra.mxu0 0.0
        %1687 = vmatprep.subr.mxu0 0.0
        %1688 = vmatpush1.xpose.msra.mxu0 0.0
        %1689 = vmatprep.subr.mxu0 0.0
        %1690 = vmatpush1.xpose.msra.mxu0 0.0
        %1691 = vmatprep.subr.mxu0 0.0
        %1692 = vmatpush1.xpose.msra.mxu0 0.0
        %1693 = vmatprep.subr.mxu0 0.0
        %1694 = vmatpush1.xpose.msra.mxu0 0.0
        %1695 = vmatprep.subr.mxu0 0.0
        %1696 = vmatpush1.xpose.msra.mxu0 0.0
        %1697 = vmatprep.subr.mxu0 0.0
        %1698 = vmatpush1.xpose.msra.mxu0 0.0
        %1699 = vmatprep.subr.mxu0 0.0
        %1700 = vmatpush1.xpose.msra.mxu0 0.0
        %1701 = vmatprep.subr.mxu0 0.0
        %1702 = vmatpush1.xpose.msra.mxu0 0.0
        %1703 = vmatprep.subr.mxu0 0.0
        %1704 = vmatpush1.xpose.msra.mxu0 0.0
        %1705 = vmatprep.subr.mxu0 0.0
        %1706 = vmatpush1.xpose.msra.mxu0 0.0
        %1707 = vmatprep.subr.mxu0 0.0
        %1708 = vmatpush1.xpose.msra.mxu0 0.0
        %1709 = vmatprep.subr.mxu0 0.0
        %1710 = vmatpush1.xpose.msra.mxu0 0.0
        %1711 = vmatprep.mubr.f32.mxu0 0.0
        %1712 = vmatmul.mubr.f32.gmra.mrb[0].mxu0 %v1643
        %v1713 = vpop.f32.mrb[0].mxu0
        %v1714 = vadd.f32 0.0, %v1713
        %v1715 = vpop.f32.mrb[0].mxu0
        %1716 = vdwg.mxu0
        %v1717 = vmul.f32 %v1714, 0.25
        %v1718 = vsel %vm1382, -1e+30, %v1717
        %v1719 = vsel %vm1384, %v1718, -inf
        %1720 = vmax.xlane.f32.xlu0 %v1719
        %v1721 = vpop.xlane.xlu0 %1720
        %v1722 = vsub.f32 %v1718, %v1721
        %v1723 = vmul.f32 %v1722, 1.442695
        %v1724 = vpow.pop %v1723
        %v1725 = vsel %vm1384, %v1724, 0.0
        %1726 = vadd.xlane.f32.xlu0 %v1725
        %v1727 = vpop.xlane.xlu0 %1726
        %v1728 = vrcp.pop %v1727
        %v1729 = vmul.f32 %v1724, %v1728
        %1730 = vrot.lane.b32.xlu0 %v1295, 48
        %v1731 = vpop.permute.xlu0 %1730
        %v1734 = vsel %vm1384, %v1729, 0
        %1736 = vmatprep.subr.mxu0 0.0
        %1737 = vmatpush1.msra.mxu0 %v1731
        %1738 = vmatprep.subr.mxu0 0.0
        %1739 = vmatpush1.msra.mxu0 0.0
        %1740 = vmatprep.subr.mxu0 0.0
        %1741 = vmatpush1.msra.mxu0 0.0
        %1742 = vmatprep.subr.mxu0 0.0
        %1743 = vmatpush1.msra.mxu0 0.0
        %1744 = vmatprep.subr.mxu0 0.0
        %1745 = vmatpush1.msra.mxu0 0.0
        %1746 = vmatprep.subr.mxu0 0.0
        %1747 = vmatpush1.msra.mxu0 0.0
        %1748 = vmatprep.subr.mxu0 0.0
        %1749 = vmatpush1.msra.mxu0 0.0
        %1750 = vmatprep.subr.mxu0 0.0
        %1751 = vmatpush1.msra.mxu0 0.0
        %1752 = vmatprep.subr.mxu0 0.0
        %1753 = vmatpush1.msra.mxu0 0.0
        %1754 = vmatprep.subr.mxu0 0.0
        %1755 = vmatpush1.msra.mxu0 0.0
        %1756 = vmatprep.subr.mxu0 0.0
        %1757 = vmatpush1.msra.mxu0 0.0
        %1758 = vmatprep.subr.mxu0 0.0
        %1759 = vmatpush1.msra.mxu0 0.0
        %1760 = vmatprep.subr.mxu0 0.0
        %1761 = vmatpush1.msra.mxu0 0.0
        %1762 = vmatprep.subr.mxu0 0.0
        %1763 = vmatpush1.msra.mxu0 0.0
        %1764 = vmatprep.subr.mxu0 0.0
        %1765 = vmatpush1.msra.mxu0 0.0
        %1766 = vmatprep.subr.mxu0 0.0
        %1767 = vmatpush1.msra.mxu0 0.0
        %1768 = vmatprep.subr.mxu0 0.0
        %1769 = vmatpush1.msra.mxu0 0.0
        %1770 = vmatprep.subr.mxu0 0.0
        %1771 = vmatpush1.msra.mxu0 0.0
        %1772 = vmatprep.subr.mxu0 0.0
        %1773 = vmatpush1.msra.mxu0 0.0
        %1774 = vmatprep.subr.mxu0 0.0
        %1775 = vmatpush1.msra.mxu0 0.0
        %1776 = vmatprep.subr.mxu0 0.0
        %1777 = vmatpush1.msra.mxu0 0.0
        %1778 = vmatprep.subr.mxu0 0.0
        %1779 = vmatpush1.msra.mxu0 0.0
        %1780 = vmatprep.subr.mxu0 0.0
        %1781 = vmatpush1.msra.mxu0 0.0
        %1782 = vmatprep.subr.mxu0 0.0
        %1783 = vmatpush1.msra.mxu0 0.0
        %1784 = vmatprep.subr.mxu0 0.0
        %1785 = vmatpush1.msra.mxu0 0.0
        %1786 = vmatprep.subr.mxu0 0.0
        %1787 = vmatpush1.msra.mxu0 0.0
        %1788 = vmatprep.subr.mxu0 0.0
        %1789 = vmatpush1.msra.mxu0 0.0
        %1790 = vmatprep.subr.mxu0 0.0
        %1791 = vmatpush1.msra.mxu0 0.0
        %1792 = vmatprep.subr.mxu0 0.0
        %1793 = vmatpush1.msra.mxu0 0.0
        %1794 = vmatprep.subr.mxu0 0.0
        %1795 = vmatpush1.msra.mxu0 0.0
        %1796 = vmatprep.subr.mxu0 0.0
        %1797 = vmatpush1.msra.mxu0 0.0
        %1798 = vmatprep.subr.mxu0 0.0
        %1799 = vmatpush1.msra.mxu0 0.0
        %1800 = vmatprep.mubr.f32.mxu0 0.0
        %1801 = vmatmul.mubr.f32.gmra.mrb[0].mxu0 %v1734
        %v1802 = vpop.f32.mrb[0].mxu0
        %v1803 = vadd.f32 0.0, %v1802
        %v1804 = vpop.f32.mrb[0].mxu0
        %1805 = vdwg.mxu0
        %1806 = vrot.lane.b32.xlu0 %v1300, 112
        %v1807 = vpop.permute.xlu0 %1806
        %1808 = vrot.lane.b32.xlu0 %v1300, 80
        %v1809 = vpop.permute.xlu0 %1808
        %v1810 = vsel %vm1306, %v1807, 0
        %v1812 = vsel %vm1306, %v1809, 0
        %1814 = vmatprep.subr.mxu0 0.0
        %1815 = vmatpush1.xpose.msra.mxu0 %v1812
        %1816 = vmatprep.subr.mxu0 0.0
        %1817 = vmatpush1.xpose.msra.mxu0 0.0
        %1818 = vmatprep.subr.mxu0 0.0
        %1819 = vmatpush1.xpose.msra.mxu0 0.0
        %1820 = vmatprep.subr.mxu0 0.0
        %1821 = vmatpush1.xpose.msra.mxu0 0.0
        %1822 = vmatprep.subr.mxu0 0.0
        %1823 = vmatpush1.xpose.msra.mxu0 0.0
        %1824 = vmatprep.subr.mxu0 0.0
        %1825 = vmatpush1.xpose.msra.mxu0 0.0
        %1826 = vmatprep.subr.mxu0 0.0
        %1827 = vmatpush1.xpose.msra.mxu0 0.0
        %1828 = vmatprep.subr.mxu0 0.0
        %1829 = vmatpush1.xpose.msra.mxu0 0.0
        %1830 = vmatprep.subr.mxu0 0.0
        %1831 = vmatpush1.xpose.msra.mxu0 0.0
        %1832 = vmatprep.subr.mxu0 0.0
        %1833 = vmatpush1.xpose.msra.mxu0 0.0
        %1834 = vmatprep.subr.mxu0 0.0
        %1835 = vmatpush1.xpose.msra.mxu0 0.0
        %1836 = vmatprep.subr.mxu0 0.0
        %1837 = vmatpush1.xpose.msra.mxu0 0.0
        %1838 = vmatprep.subr.mxu0 0.0
        %1839 = vmatpush1.xpose.msra.mxu0 0.0
        %1840 = vmatprep.subr.mxu0 0.0
        %1841 = vmatpush1.xpose.msra.mxu0 0.0
        %1842 = vmatprep.subr.mxu0 0.0
        %1843 = vmatpush1.xpose.msra.mxu0 0.0
        %1844 = vmatprep.subr.mxu0 0.0
        %1845 = vmatpush1.xpose.msra.mxu0 0.0
        %1846 = vmatprep.subr.mxu0 0.0
        %1847 = vmatpush1.xpose.msra.mxu0 0.0
        %1848 = vmatprep.subr.mxu0 0.0
        %1849 = vmatpush1.xpose.msra.mxu0 0.0
        %1850 = vmatprep.subr.mxu0 0.0
        %1851 = vmatpush1.xpose.msra.mxu0 0.0
        %1852 = vmatprep.subr.mxu0 0.0
        %1853 = vmatpush1.xpose.msra.mxu0 0.0
        %1854 = vmatprep.subr.mxu0 0.0
        %1855 = vmatpush1.xpose.msra.mxu0 0.0
        %1856 = vmatprep.subr.mxu0 0.0
        %1857 = vmatpush1.xpose.msra.mxu0 0.0
        %1858 = vmatprep.subr.mxu0 0.0
        %1859 = vmatpush1.xpose.msra.mxu0 0.0
        %1860 = vmatprep.subr.mxu0 0.0
        %1861 = vmatpush1.xpose.msra.mxu0 0.0
        %1862 = vmatprep.subr.mxu0 0.0
        %1863 = vmatpush1.xpose.msra.mxu0 0.0
        %1864 = vmatprep.subr.mxu0 0.0
        %1865 = vmatpush1.xpose.msra.mxu0 0.0
        %1866 = vmatprep.subr.mxu0 0.0
        %1867 = vmatpush1.xpose.msra.mxu0 0.0
        %1868 = vmatprep.subr.mxu0 0.0
        %1869 = vmatpush1.xpose.msra.mxu0 0.0
        %1870 = vmatprep.subr.mxu0 0.0
        %1871 = vmatpush1.xpose.msra.mxu0 0.0
        %1872 = vmatprep.subr.mxu0 0.0
        %1873 = vmatpush1.xpose.msra.mxu0 0.0
        %1874 = vmatprep.subr.mxu0 0.0
        %1875 = vmatpush1.xpose.msra.mxu0 0.0
        %1876 = vmatprep.subr.mxu0 0.0
        %1877 = vmatpush1.xpose.msra.mxu0 0.0
        %1878 = vmatprep.mubr.f32.mxu0 0.0
        %1879 = vmatmul.mubr.f32.gmra.mrb[0].mxu0 %v1810
        %v1880 = vpop.f32.mrb[0].mxu0
        %v1881 = vadd.f32 0.0, %v1880
        %v1882 = vpop.f32.mrb[0].mxu0
        %1883 = vdwg.mxu0
        %v1884 = vmul.f32 %v1881, 0.25
        %v1885 = vsel %vm1550, -1e+30, %v1884
        %v1886 = vsel %vm1384, %v1885, -inf
        %1887 = vmax.xlane.f32.xlu0 %v1886
        %v1888 = vpop.xlane.xlu0 %1887
        %v1889 = vsub.f32 %v1885, %v1888
        %v1890 = vmul.f32 %v1889, 1.442695
        %v1891 = vpow.pop %v1890
        %v1892 = vsel %vm1384, %v1891, 0.0
        %1893 = vadd.xlane.f32.xlu0 %v1892
        %v1894 = vpop.xlane.xlu0 %1893
        %v1895 = vrcp.pop %v1894
        %v1896 = vmul.f32 %v1891, %v1895
        %1897 = vrot.lane.b32.xlu0 %v1300, 48
        %v1898 = vpop.permute.xlu0 %1897
        %v1901 = vsel %vm1384, %v1896, 0
        %1903 = vmatprep.subr.mxu0 0.0
        %1904 = vmatpush1.msra.mxu0 %v1898
        %1905 = vmatprep.subr.mxu0 0.0
        %1906 = vmatpush1.msra.mxu0 0.0
        %1907 = vmatprep.subr.mxu0 0.0
        %1908 = vmatpush1.msra.mxu0 0.0
        %1909 = vmatprep.subr.mxu0 0.0
        %1910 = vmatpush1.msra.mxu0 0.0
        %1911 = vmatprep.subr.mxu0 0.0
        %1912 = vmatpush1.msra.mxu0 0.0
        %1913 = vmatprep.subr.mxu0 0.0
        %1914 = vmatpush1.msra.mxu0 0.0
        %1915 = vmatprep.subr.mxu0 0.0
        %1916 = vmatpush1.msra.mxu0 0.0
        %1917 = vmatprep.subr.mxu0 0.0
        %1918 = vmatpush1.msra.mxu0 0.0
        %1919 = vmatprep.subr.mxu0 0.0
        %1920 = vmatpush1.msra.mxu0 0.0
        %1921 = vmatprep.subr.mxu0 0.0
        %1922 = vmatpush1.msra.mxu0 0.0
        %1923 = vmatprep.subr.mxu0 0.0
        %1924 = vmatpush1.msra.mxu0 0.0
        %1925 = vmatprep.subr.mxu0 0.0
        %1926 = vmatpush1.msra.mxu0 0.0
        %1927 = vmatprep.subr.mxu0 0.0
        %1928 = vmatpush1.msra.mxu0 0.0
        %1929 = vmatprep.subr.mxu0 0.0
        %1930 = vmatpush1.msra.mxu0 0.0
        %1931 = vmatprep.subr.mxu0 0.0
        %1932 = vmatpush1.msra.mxu0 0.0
        %1933 = vmatprep.subr.mxu0 0.0
        %1934 = vmatpush1.msra.mxu0 0.0
        %1935 = vmatprep.subr.mxu0 0.0
        %1936 = vmatpush1.msra.mxu0 0.0
        %1937 = vmatprep.subr.mxu0 0.0
        %1938 = vmatpush1.msra.mxu0 0.0
        %1939 = vmatprep.subr.mxu0 0.0
        %1940 = vmatpush1.msra.mxu0 0.0
        %1941 = vmatprep.subr.mxu0 0.0
        %1942 = vmatpush1.msra.mxu0 0.0
        %1943 = vmatprep.subr.mxu0 0.0
        %1944 = vmatpush1.msra.mxu0 0.0
        %1945 = vmatprep.subr.mxu0 0.0
        %1946 = vmatpush1.msra.mxu0 0.0
        %1947 = vmatprep.subr.mxu0 0.0
        %1948 = vmatpush1.msra.mxu0 0.0
        %1949 = vmatprep.subr.mxu0 0.0
        %1950 = vmatpush1.msra.mxu0 0.0
        %1951 = vmatprep.subr.mxu0 0.0
        %1952 = vmatpush1.msra.mxu0 0.0
        %1953 = vmatprep.subr.mxu0 0.0
        %1954 = vmatpush1.msra.mxu0 0.0
        %1955 = vmatprep.subr.mxu0 0.0
        %1956 = vmatpush1.msra.mxu0 0.0
        %1957 = vmatprep.subr.mxu0 0.0
        %1958 = vmatpush1.msra.mxu0 0.0
        %1959 = vmatprep.subr.mxu0 0.0
        %1960 = vmatpush1.msra.mxu0 0.0
        %1961 = vmatprep.subr.mxu0 0.0
        %1962 = vmatpush1.msra.mxu0 0.0
        %1963 = vmatprep.subr.mxu0 0.0
        %1964 = vmatpush1.msra.mxu0 0.0
        %1965 = vmatprep.subr.mxu0 0.0
        %1966 = vmatpush1.msra.mxu0 0.0
        %1967 = vmatprep.mubr.f32.mxu0 0.0
        %1968 = vmatmul.mubr.f32.gmra.mrb[0].mxu0 %v1901
        %v1969 = vpop.f32.mrb[0].mxu0
        %v1970 = vadd.f32 0.0, %v1969
        %v1971 = vpop.f32.mrb[0].mxu0
        %1972 = vdwg.mxu0
        %v1973 = vld [vmem:[%s1150] sm:$0xff]
        %v1974 = vld [vmem:[%s1150 + $0x8] sm:$0xff]
        %v1975 = vld [vmem:[%s1150 + $0x10] sm:$0xff]
        %v1976 = vld [vmem:[%s1150 + $0x18] sm:$0xff]
        %v1977 = vld [vmem:[%s1153] sm:$0x1]
        %v1978 = vld [vmem:[%s1156] sm:$0x1]
        %v1979 = vld [vmem:[%s1159] sm:$0x1]
        %v1981 = vlaneseq
        %v1982 = vshrl.u32 %v1981, 7
        %v1983 = vsub.s32 0, %v1982
        %v1984 = vrot.slane %v1977, %v1983
        %v1986 = vadd.f32 %v1200, %v1984
        %v1987 = vadd.f32 %v1201, %v1984
        %v1989 = vsel %vm1306, %v1469, 0
        %v1992 = vsel %vm1306, %v1636, 0
        %1994 = vmatprep.subr.mxu0 0.0
        %1995 = vmatpush1.msra.mxu0 %v1973
        %1996 = vmatprep.subr.mxu0 0.0
        %1997 = vmatpush1.msra.mxu0 %v1974
        %1998 = vmatprep.subr.mxu0 0.0
        %1999 = vmatpush1.msra.mxu0 0.0
        %2000 = vmatprep.subr.mxu0 0.0
        %2001 = vmatpush1.msra.mxu0 0.0
        %2002 = vmatprep.subr.mxu0 0.0
        %2003 = vmatpush1.msra.mxu0 0.0
        %2004 = vmatprep.subr.mxu0 0.0
        %2005 = vmatpush1.msra.mxu0 0.0
        %2006 = vmatprep.subr.mxu0 0.0
        %2007 = vmatpush1.msra.mxu0 0.0
        %2008 = vmatprep.subr.mxu0 0.0
        %2009 = vmatpush1.msra.mxu0 0.0
        %2010 = vmatprep.subr.mxu0 0.0
        %2011 = vmatpush1.msra.mxu0 0.0
        %2012 = vmatprep.subr.mxu0 0.0
        %2013 = vmatpush1.msra.mxu0 0.0
        %2014 = vmatprep.subr.mxu0 0.0
        %2015 = vmatpush1.msra.mxu0 0.0
        %2016 = vmatprep.subr.mxu0 0.0
        %2017 = vmatpush1.msra.mxu0 0.0
        %2018 = vmatprep.subr.mxu0 0.0
        %2019 = vmatpush1.msra.mxu0 0.0
        %2020 = vmatprep.subr.mxu0 0.0
        %2021 = vmatpush1.msra.mxu0 0.0
        %2022 = vmatprep.subr.mxu0 0.0
        %2023 = vmatpush1.msra.mxu0 0.0
        %2024 = vmatprep.subr.mxu0 0.0
        %2025 = vmatpush1.msra.mxu0 0.0
        %2026 = vmatprep.subr.mxu0 0.0
        %2027 = vmatpush1.msra.mxu0 0.0
        %2028 = vmatprep.subr.mxu0 0.0
        %2029 = vmatpush1.msra.mxu0 0.0
        %2030 = vmatprep.subr.mxu0 0.0
        %2031 = vmatpush1.msra.mxu0 0.0
        %2032 = vmatprep.subr.mxu0 0.0
        %2033 = vmatpush1.msra.mxu0 0.0
        %2034 = vmatprep.subr.mxu0 0.0
        %2035 = vmatpush1.msra.mxu0 0.0
        %2036 = vmatprep.subr.mxu0 0.0
        %2037 = vmatpush1.msra.mxu0 0.0
        %2038 = vmatprep.subr.mxu0 0.0
        %2039 = vmatpush1.msra.mxu0 0.0
        %2040 = vmatprep.subr.mxu0 0.0
        %2041 = vmatpush1.msra.mxu0 0.0
        %2042 = vmatprep.subr.mxu0 0.0
        %2043 = vmatpush1.msra.mxu0 0.0
        %2044 = vmatprep.subr.mxu0 0.0
        %2045 = vmatpush1.msra.mxu0 0.0
        %2046 = vmatprep.subr.mxu0 0.0
        %2047 = vmatpush1.msra.mxu0 0.0
        %2048 = vmatprep.subr.mxu0 0.0
        %2049 = vmatpush1.msra.mxu0 0.0
        %2050 = vmatprep.subr.mxu0 0.0
        %2051 = vmatpush1.msra.mxu0 0.0
        %2052 = vmatprep.subr.mxu0 0.0
        %2053 = vmatpush1.msra.mxu0 0.0
        %2054 = vmatprep.subr.mxu0 0.0
        %2055 = vmatpush1.msra.mxu0 0.0
        %2056 = vmatprep.subr.mxu0 0.0
        %2057 = vmatpush1.msra.mxu0 0.0
        %2058 = vmatprep.mubr.f32.mxu0 0.0
        %2059 = vmatmul.mubr.f32.gmra.mrb[0].mxu0 %v1989
        %v2060 = vpop.f32.mrb[0].mxu0
        %v2061 = vadd.f32 0.0, %v2060
        %v2062 = vpop.f32.mrb[0].mxu0
        %2063 = vmatprep.mubr.f32.mxu0 0.0
        %2064 = vmatmul.mubr.f32.gmra.mrb[0].mxu0 %v1992
        %v2065 = vpop.f32.mrb[0].mxu0
        %v2066 = vadd.f32 0.0, %v2065
        %v2067 = vpop.f32.mrb[0].mxu0
        %2068 = vdwg.mxu0
        %v2069 = vadd.f32 %v1986, %v2061
        %v2070 = vadd.f32 %v1987, %v2066
        %v2072 = vsel %vm1306, %v1803, 0
        %v2075 = vsel %vm1306, %v1970, 0
        %2077 = vmatprep.subr.mxu0 0.0
        %2078 = vmatpush1.msra.mxu0 %v1975
        %2079 = vmatprep.subr.mxu0 0.0
        %2080 = vmatpush1.msra.mxu0 %v1976
        %2081 = vmatprep.subr.mxu0 0.0
        %2082 = vmatpush1.msra.mxu0 0.0
        %2083 = vmatprep.subr.mxu0 0.0
        %2084 = vmatpush1.msra.mxu0 0.0
        %2085 = vmatprep.subr.mxu0 0.0
        %2086 = vmatpush1.msra.mxu0 0.0
        %2087 = vmatprep.subr.mxu0 0.0
        %2088 = vmatpush1.msra.mxu0 0.0
        %2089 = vmatprep.subr.mxu0 0.0
        %2090 = vmatpush1.msra.mxu0 0.0
        %2091 = vmatprep.subr.mxu0 0.0
        %2092 = vmatpush1.msra.mxu0 0.0
        %2093 = vmatprep.subr.mxu0 0.0
        %2094 = vmatpush1.msra.mxu0 0.0
        %2095 = vmatprep.subr.mxu0 0.0
        %2096 = vmatpush1.msra.mxu0 0.0
        %2097 = vmatprep.subr.mxu0 0.0
        %2098 = vmatpush1.msra.mxu0 0.0
        %2099 = vmatprep.subr.mxu0 0.0
        %2100 = vmatpush1.msra.mxu0 0.0
        %2101 = vmatprep.subr.mxu0 0.0
        %2102 = vmatpush1.msra.mxu0 0.0
        %2103 = vmatprep.subr.mxu0 0.0
        %2104 = vmatpush1.msra.mxu0 0.0
        %2105 = vmatprep.subr.mxu0 0.0
        %2106 = vmatpush1.msra.mxu0 0.0
        %2107 = vmatprep.subr.mxu0 0.0
        %2108 = vmatpush1.msra.mxu0 0.0
        %2109 = vmatprep.subr.mxu0 0.0
        %2110 = vmatpush1.msra.mxu0 0.0
        %2111 = vmatprep.subr.mxu0 0.0
        %2112 = vmatpush1.msra.mxu0 0.0
        %2113 = vmatprep.subr.mxu0 0.0
        %2114 = vmatpush1.msra.mxu0 0.0
        %2115 = vmatprep.subr.mxu0 0.0
        %2116 = vmatpush1.msra.mxu0 0.0
        %2117 = vmatprep.subr.mxu0 0.0
        %2118 = vmatpush1.msra.mxu0 0.0
        %2119 = vmatprep.subr.mxu0 0.0
        %2120 = vmatpush1.msra.mxu0 0.0
        %2121 = vmatprep.subr.mxu0 0.0
        %2122 = vmatpush1.msra.mxu0 0.0
        %2123 = vmatprep.subr.mxu0 0.0
        %2124 = vmatpush1.msra.mxu0 0.0
        %2125 = vmatprep.subr.mxu0 0.0
        %2126 = vmatpush1.msra.mxu0 0.0
        %2127 = vmatprep.subr.mxu0 0.0
        %2128 = vmatpush1.msra.mxu0 0.0
        %2129 = vmatprep.subr.mxu0 0.0
        %2130 = vmatpush1.msra.mxu0 0.0
        %2131 = vmatprep.subr.mxu0 0.0
        %2132 = vmatpush1.msra.mxu0 0.0
        %2133 = vmatprep.subr.mxu0 0.0
        %2134 = vmatpush1.msra.mxu0 0.0
        %2135 = vmatprep.subr.mxu0 0.0
        %2136 = vmatpush1.msra.mxu0 0.0
        %2137 = vmatprep.subr.mxu0 0.0
        %2138 = vmatpush1.msra.mxu0 0.0
        %2139 = vmatprep.subr.mxu0 0.0
        %2140 = vmatpush1.msra.mxu0 0.0
        %2141 = vmatprep.mubr.f32.mxu0 0.0
        %2142 = vmatmul.mubr.f32.gmra.mrb[0].mxu0 %v2072
        %v2143 = vpop.f32.mrb[0].mxu0
        %v2144 = vadd.f32 0.0, %v2143
        %v2145 = vpop.f32.mrb[0].mxu0
        %2146 = vmatprep.mubr.f32.mxu0 0.0
        %2147 = vmatmul.mubr.f32.gmra.mrb[0].mxu0 %v2075
        %v2148 = vpop.f32.mrb[0].mxu0
        %v2149 = vadd.f32 0.0, %v2148
        %v2150 = vpop.f32.mrb[0].mxu0
        %2151 = vdwg.mxu0
        %v2152 = vadd.f32 %v2069, %v2144
        %v2153 = vadd.f32 %v2070, %v2149
        %v2154 = vsel %vm1221, %v2152, 0.0
        %2155 = vadd.xlane.f32.xlu0 %v2154
        %v2156 = vpop.xlane.xlu0 %2155
        %v2157 = vsel %vm1221, %v2153, 0.0
        %2158 = vadd.xlane.f32.xlu0 %v2157
        %v2159 = vpop.xlane.xlu0 %2158
        %v2160 = vrcp.pop 32.0
        %v2161 = vmul.f32 %v2156, %v2160
        %v2162 = vmul.f32 %v2159, %v2160
        %v2163 = vsub.f32 %v2152, %v2161
        %v2164 = vsub.f32 %v2153, %v2162
        %v2165 = vmul.f32 %v2163, %v2163
        %v2166 = vmul.f32 %v2164, %v2164
        %v2167 = vsel %vm1221, %v2165, 0.0
        %2168 = vadd.xlane.f32.xlu0 %v2167
        %v2169 = vpop.xlane.xlu0 %2168
        %v2170 = vsel %vm1221, %v2166, 0.0
        %2171 = vadd.xlane.f32.xlu0 %v2170
        %v2172 = vpop.xlane.xlu0 %2171
        %v2173 = vmul.f32 %v2169, %v2160
        %v2174 = vmul.f32 %v2172, %v2160
        %v2175 = vadd.f32 %v2173, 1e-05
        %v2176 = vadd.f32 %v2174, 1e-05
        %v2177 = vrsqrt.pop %v2175
        %v2178 = vrsqrt.pop %v2176
        %v2179 = vmul.f32 %v2163, %v2177
        %v2180 = vmul.f32 %v2164, %v2178
        %v2182 = vlaneseq
        %v2183 = vshrl.u32 %v2182, 7
        %v2184 = vsub.s32 0, %v2183
        %v2185 = vrot.slane %v1978, %v2184
        %v2187 = vmul.f32 %v2179, %v2185
        %v2188 = vmul.f32 %v2180, %v2185
        %v2190 = vlaneseq
        %v2191 = vshrl.u32 %v2190, 7
        %v2192 = vsub.s32 0, %v2191
        %v2193 = vrot.slane %v1979, %v2192
        %v2195 = vadd.f32 %v2187, %v2193
        %v2196 = vadd.f32 %v2188, %v2193
        %2198 = vset.pattern.permute.xlu0 0
        %2199 = vperm.xlu0 %2198, %v1208
        %v2200 = vpop.permute.xlu0 %2199
        %2203 = vset.pattern.permute.xlu0 0
        %2204 = vperm.xlu0 %2203, %v1209
        %v2205 = vpop.permute.xlu0 %2204
        %v2207 = vmul.f32 %v2195, %v2200
        %v2208 = vmul.f32 %v2196, %v2205
        %v2209 = vld [vmem:[%s1164] sm:$0xff]
        %v2210 = vld [vmem:[%s1164 + $0x8] sm:$0xff]
        %v2211 = vld [vmem:[%s1164 + $0x10] sm:$0xff]
        %v2212 = vld [vmem:[%s1164 + $0x18] sm:$0xff]
        %v2213 = vld [vmem:[%s1167] sm:$0x1]
        %v2215 = vlaneseq
        %v2216 = vshrl.u32 %v2215, 7
        %v2217 = vsub.s32 0, %v2216
        %v2218 = vrot.slane %v2213, %v2217
        %v2221 = vsel %vm1221, %v2207, 0
        %v2224 = vsel %vm1221, %v2208, 0
        %2226 = vmatprep.subr.mxu0 0.0
        %2227 = vmatpush1.msra.mxu0 %v2209
        %2228 = vmatprep.subr.mxu0 0.0
        %2229 = vmatpush1.msra.mxu0 %v2210
        %2230 = vmatprep.subr.mxu0 0.0
        %2231 = vmatpush1.msra.mxu0 %v2211
        %2232 = vmatprep.subr.mxu0 0.0
        %2233 = vmatpush1.msra.mxu0 %v2212
        %2234 = vmatprep.subr.mxu0 0.0
        %2235 = vmatpush1.msra.mxu0 0.0
        %2236 = vmatprep.subr.mxu0 0.0
        %2237 = vmatpush1.msra.mxu0 0.0
        %2238 = vmatprep.subr.mxu0 0.0
        %2239 = vmatpush1.msra.mxu0 0.0
        %2240 = vmatprep.subr.mxu0 0.0
        %2241 = vmatpush1.msra.mxu0 0.0
        %2242 = vmatprep.subr.mxu0 0.0
        %2243 = vmatpush1.msra.mxu0 0.0
        %2244 = vmatprep.subr.mxu0 0.0
        %2245 = vmatpush1.msra.mxu0 0.0
        %2246 = vmatprep.subr.mxu0 0.0
        %2247 = vmatpush1.msra.mxu0 0.0
        %2248 = vmatprep.subr.mxu0 0.0
        %2249 = vmatpush1.msra.mxu0 0.0
        %2250 = vmatprep.subr.mxu0 0.0
        %2251 = vmatpush1.msra.mxu0 0.0
        %2252 = vmatprep.subr.mxu0 0.0
        %2253 = vmatpush1.msra.mxu0 0.0
        %2254 = vmatprep.subr.mxu0 0.0
        %2255 = vmatpush1.msra.mxu0 0.0
        %2256 = vmatprep.subr.mxu0 0.0
        %2257 = vmatpush1.msra.mxu0 0.0
        %2258 = vmatprep.subr.mxu0 0.0
        %2259 = vmatpush1.msra.mxu0 0.0
        %2260 = vmatprep.subr.mxu0 0.0
        %2261 = vmatpush1.msra.mxu0 0.0
        %2262 = vmatprep.subr.mxu0 0.0
        %2263 = vmatpush1.msra.mxu0 0.0
        %2264 = vmatprep.subr.mxu0 0.0
        %2265 = vmatpush1.msra.mxu0 0.0
        %2266 = vmatprep.subr.mxu0 0.0
        %2267 = vmatpush1.msra.mxu0 0.0
        %2268 = vmatprep.subr.mxu0 0.0
        %2269 = vmatpush1.msra.mxu0 0.0
        %2270 = vmatprep.subr.mxu0 0.0
        %2271 = vmatpush1.msra.mxu0 0.0
        %2272 = vmatprep.subr.mxu0 0.0
        %2273 = vmatpush1.msra.mxu0 0.0
        %2274 = vmatprep.subr.mxu0 0.0
        %2275 = vmatpush1.msra.mxu0 0.0
        %2276 = vmatprep.subr.mxu0 0.0
        %2277 = vmatpush1.msra.mxu0 0.0
        %2278 = vmatprep.subr.mxu0 0.0
        %2279 = vmatpush1.msra.mxu0 0.0
        %2280 = vmatprep.subr.mxu0 0.0
        %2281 = vmatpush1.msra.mxu0 0.0
        %2282 = vmatprep.subr.mxu0 0.0
        %2283 = vmatpush1.msra.mxu0 0.0
        %2284 = vmatprep.subr.mxu0 0.0
        %2285 = vmatpush1.msra.mxu0 0.0
        %2286 = vmatprep.subr.mxu0 0.0
        %2287 = vmatpush1.msra.mxu0 0.0
        %2288 = vmatprep.subr.mxu0 0.0
        %2289 = vmatpush1.msra.mxu0 0.0
        %2290 = vmatprep.mubr.f32.mxu0 0.0
        %2291 = vmatmul.mubr.f32.gmra.mrb[0].mxu0 %v2221
        %v2292 = vpop.f32.mrb[0].mxu0
        %v2293 = vadd.f32 %v2218, %v2292
        %v2294 = vpop.f32.mrb[0].mxu0
        %2295 = vmatprep.mubr.f32.mxu0 0.0
        %2296 = vmatmul.mubr.f32.gmra.mrb[0].mxu0 %v2224
        %v2297 = vpop.f32.mrb[0].mxu0
        %v2298 = vadd.f32 %v2218, %v2297
        %v2299 = vpop.f32.mrb[0].mxu0
        %2300 = vdwg.mxu0
        %v2301 = vld [vmem:[%s971] sm:$0xff]
        %v2302 = vld [vmem:[%s971 + $0x8] sm:$0xff]
        %v2303 = vld [vmem:[%s971 + $0x10] sm:$0xff]
        %v2304 = vld [vmem:[%s971 + $0x18] sm:$0xff]
        %v2305 = vld [vmem:[%s1170] sm:$0x1]
        %v2307 = vlaneseq
        %v2308 = vshrl.u32 %v2307, 7
        %v2309 = vsub.s32 0, %v2308
        %v2310 = vrot.slane %v2305, %v2309
        %v2313 = vsel %vm1221, %v1202, 0
        %v2316 = vsel %vm1221, %v1203, 0
        %2318 = vmatprep.subr.mxu0 0.0
        %2319 = vmatpush1.msra.mxu0 %v2301
        %2320 = vmatprep.subr.mxu0 0.0
        %2321 = vmatpush1.msra.mxu0 %v2302
        %2322 = vmatprep.subr.mxu0 0.0
        %2323 = vmatpush1.msra.mxu0 %v2303
        %2324 = vmatprep.subr.mxu0 0.0
        %2325 = vmatpush1.msra.mxu0 %v2304
        %2326 = vmatprep.subr.mxu0 0.0
        %2327 = vmatpush1.msra.mxu0 0.0
        %2328 = vmatprep.subr.mxu0 0.0
        %2329 = vmatpush1.msra.mxu0 0.0
        %2330 = vmatprep.subr.mxu0 0.0
        %2331 = vmatpush1.msra.mxu0 0.0
        %2332 = vmatprep.subr.mxu0 0.0
        %2333 = vmatpush1.msra.mxu0 0.0
        %2334 = vmatprep.subr.mxu0 0.0
        %2335 = vmatpush1.msra.mxu0 0.0
        %2336 = vmatprep.subr.mxu0 0.0
        %2337 = vmatpush1.msra.mxu0 0.0
        %2338 = vmatprep.subr.mxu0 0.0
        %2339 = vmatpush1.msra.mxu0 0.0
        %2340 = vmatprep.subr.mxu0 0.0
        %2341 = vmatpush1.msra.mxu0 0.0
        %2342 = vmatprep.subr.mxu0 0.0
        %2343 = vmatpush1.msra.mxu0 0.0
        %2344 = vmatprep.subr.mxu0 0.0
        %2345 = vmatpush1.msra.mxu0 0.0
        %2346 = vmatprep.subr.mxu0 0.0
        %2347 = vmatpush1.msra.mxu0 0.0
        %2348 = vmatprep.subr.mxu0 0.0
        %2349 = vmatpush1.msra.mxu0 0.0
        %2350 = vmatprep.subr.mxu0 0.0
        %2351 = vmatpush1.msra.mxu0 0.0
        %2352 = vmatprep.subr.mxu0 0.0
        %2353 = vmatpush1.msra.mxu0 0.0
        %2354 = vmatprep.subr.mxu0 0.0
        %2355 = vmatpush1.msra.mxu0 0.0
        %2356 = vmatprep.subr.mxu0 0.0
        %2357 = vmatpush1.msra.mxu0 0.0
        %2358 = vmatprep.subr.mxu0 0.0
        %2359 = vmatpush1.msra.mxu0 0.0
        %2360 = vmatprep.subr.mxu0 0.0
        %2361 = vmatpush1.msra.mxu0 0.0
        %2362 = vmatprep.subr.mxu0 0.0
        %2363 = vmatpush1.msra.mxu0 0.0
        %2364 = vmatprep.subr.mxu0 0.0
        %2365 = vmatpush1.msra.mxu0 0.0
        %2366 = vmatprep.subr.mxu0 0.0
        %2367 = vmatpush1.msra.mxu0 0.0
        %2368 = vmatprep.subr.mxu0 0.0
        %2369 = vmatpush1.msra.mxu0 0.0
        %2370 = vmatprep.subr.mxu0 0.0
        %2371 = vmatpush1.msra.mxu0 0.0
        %2372 = vmatprep.subr.mxu0 0.0
        %2373 = vmatpush1.msra.mxu0 0.0
        %2374 = vmatprep.subr.mxu0 0.0
        %2375 = vmatpush1.msra.mxu0 0.0
        %2376 = vmatprep.subr.mxu0 0.0
        %2377 = vmatpush1.msra.mxu0 0.0
        %2378 = vmatprep.subr.mxu0 0.0
        %2379 = vmatpush1.msra.mxu0 0.0
        %2380 = vmatprep.subr.mxu0 0.0
        %2381 = vmatpush1.msra.mxu0 0.0
        %2382 = vmatprep.mubr.f32.mxu0 0.0
        %2383 = vmatmul.mubr.f32.gmra.mrb[0].mxu0 %v2313
        %v2384 = vpop.f32.mrb[0].mxu0
        %v2385 = vadd.f32 %v2310, %v2384
        %v2386 = vpop.f32.mrb[0].mxu0
        %2387 = vmatprep.mubr.f32.mxu0 0.0
        %2388 = vmatmul.mubr.f32.gmra.mrb[0].mxu0 %v2316
        %v2389 = vpop.f32.mrb[0].mxu0
        %v2390 = vadd.f32 %v2310, %v2389
        %v2391 = vpop.f32.mrb[0].mxu0
        %2392 = vdwg.mxu0
        %v2394 = vsel %vm1306, %v2293, 0
        %v2397 = vsel %vm1306, %v2385, 0
        %2399 = vmatprep.subr.mxu0 0.0
        %2400 = vmatpush1.xpose.msra.mxu0 %v2397
        %2401 = vmatprep.subr.mxu0 0.0
        %2402 = vmatpush1.xpose.msra.mxu0 0.0
        %2403 = vmatprep.subr.mxu0 0.0
        %2404 = vmatpush1.xpose.msra.mxu0 0.0
        %2405 = vmatprep.subr.mxu0 0.0
        %2406 = vmatpush1.xpose.msra.mxu0 0.0
        %2407 = vmatprep.subr.mxu0 0.0
        %2408 = vmatpush1.xpose.msra.mxu0 0.0
        %2409 = vmatprep.subr.mxu0 0.0
        %2410 = vmatpush1.xpose.msra.mxu0 0.0
        %2411 = vmatprep.subr.mxu0 0.0
        %2412 = vmatpush1.xpose.msra.mxu0 0.0
        %2413 = vmatprep.subr.mxu0 0.0
        %2414 = vmatpush1.xpose.msra.mxu0 0.0
        %2415 = vmatprep.subr.mxu0 0.0
        %2416 = vmatpush1.xpose.msra.mxu0 0.0
        %2417 = vmatprep.subr.mxu0 0.0
        %2418 = vmatpush1.xpose.msra.mxu0 0.0
        %2419 = vmatprep.subr.mxu0 0.0
        %2420 = vmatpush1.xpose.msra.mxu0 0.0
        %2421 = vmatprep.subr.mxu0 0.0
        %2422 = vmatpush1.xpose.msra.mxu0 0.0
        %2423 = vmatprep.subr.mxu0 0.0
        %2424 = vmatpush1.xpose.msra.mxu0 0.0
        %2425 = vmatprep.subr.mxu0 0.0
        %2426 = vmatpush1.xpose.msra.mxu0 0.0
        %2427 = vmatprep.subr.mxu0 0.0
        %2428 = vmatpush1.xpose.msra.mxu0 0.0
        %2429 = vmatprep.subr.mxu0 0.0
        %2430 = vmatpush1.xpose.msra.mxu0 0.0
        %2431 = vmatprep.subr.mxu0 0.0
        %2432 = vmatpush1.xpose.msra.mxu0 0.0
        %2433 = vmatprep.subr.mxu0 0.0
        %2434 = vmatpush1.xpose.msra.mxu0 0.0
        %2435 = vmatprep.subr.mxu0 0.0
        %2436 = vmatpush1.xpose.msra.mxu0 0.0
        %2437 = vmatprep.subr.mxu0 0.0
        %2438 = vmatpush1.xpose.msra.mxu0 0.0
        %2439 = vmatprep.subr.mxu0 0.0
        %2440 = vmatpush1.xpose.msra.mxu0 0.0
        %2441 = vmatprep.subr.mxu0 0.0
        %2442 = vmatpush1.xpose.msra.mxu0 0.0
        %2443 = vmatprep.subr.mxu0 0.0
        %2444 = vmatpush1.xpose.msra.mxu0 0.0
        %2445 = vmatprep.subr.mxu0 0.0
        %2446 = vmatpush1.xpose.msra.mxu0 0.0
        %2447 = vmatprep.subr.mxu0 0.0
        %2448 = vmatpush1.xpose.msra.mxu0 0.0
        %2449 = vmatprep.subr.mxu0 0.0
        %2450 = vmatpush1.xpose.msra.mxu0 0.0
        %2451 = vmatprep.subr.mxu0 0.0
        %2452 = vmatpush1.xpose.msra.mxu0 0.0
        %2453 = vmatprep.subr.mxu0 0.0
        %2454 = vmatpush1.xpose.msra.mxu0 0.0
        %2455 = vmatprep.subr.mxu0 0.0
        %2456 = vmatpush1.xpose.msra.mxu0 0.0
        %2457 = vmatprep.subr.mxu0 0.0
        %2458 = vmatpush1.xpose.msra.mxu0 0.0
        %2459 = vmatprep.subr.mxu0 0.0
        %2460 = vmatpush1.xpose.msra.mxu0 0.0
        %2461 = vmatprep.subr.mxu0 0.0
        %2462 = vmatpush1.xpose.msra.mxu0 0.0
        %2463 = vmatprep.mubr.f32.mxu0 0.0
        %2464 = vmatmul.mubr.f32.gmra.mrb[0].mxu0 %v2394
        %v2465 = vpop.f32.mrb[0].mxu0
        %v2466 = vadd.f32 0.0, %v2465
        %v2467 = vpop.f32.mrb[0].mxu0
        %2468 = vdwg.mxu0
        %v2469 = vmul.f32 %v2466, 0.25
        %vm2470 = vcmp.gt.f32.partialorder %v1206, 0.0
        %v2471 = vsel %vm2470, -1e+30, %v2469
        %v2472 = vsel %vm1384, %v2471, -inf
        %2473 = vmax.xlane.f32.xlu0 %v2472
        %v2474 = vpop.xlane.xlu0 %2473
        %v2475 = vsub.f32 %v2471, %v2474
        %v2476 = vmul.f32 %v2475, 1.442695
        %v2477 = vpow.pop %v2476
        %v2478 = vsel %vm1384, %v2477, 0.0
        %2479 = vadd.xlane.f32.xlu0 %v2478
        %v2480 = vpop.xlane.xlu0 %2479
        %v2481 = vrcp.pop %v2480
        %v2482 = vmul.f32 %v2477, %v2481
        %2483 = vrot.lane.b32.xlu0 %v2385, 96
        %v2484 = vpop.permute.xlu0 %2483
        %v2487 = vsel %vm1384, %v2482, 0
        %2489 = vmatprep.subr.mxu0 0.0
        %2490 = vmatpush1.msra.mxu0 %v2484
        %2491 = vmatprep.subr.mxu0 0.0
        %2492 = vmatpush1.msra.mxu0 0.0
        %2493 = vmatprep.subr.mxu0 0.0
        %2494 = vmatpush1.msra.mxu0 0.0
        %2495 = vmatprep.subr.mxu0 0.0
        %2496 = vmatpush1.msra.mxu0 0.0
        %2497 = vmatprep.subr.mxu0 0.0
        %2498 = vmatpush1.msra.mxu0 0.0
        %2499 = vmatprep.subr.mxu0 0.0
        %2500 = vmatpush1.msra.mxu0 0.0
        %2501 = vmatprep.subr.mxu0 0.0
        %2502 = vmatpush1.msra.mxu0 0.0
        %2503 = vmatprep.subr.mxu0 0.0
        %2504 = vmatpush1.msra.mxu0 0.0
        %2505 = vmatprep.subr.mxu0 0.0
        %2506 = vmatpush1.msra.mxu0 0.0
        %2507 = vmatprep.subr.mxu0 0.0
        %2508 = vmatpush1.msra.mxu0 0.0
        %2509 = vmatprep.subr.mxu0 0.0
        %2510 = vmatpush1.msra.mxu0 0.0
        %2511 = vmatprep.subr.mxu0 0.0
        %2512 = vmatpush1.msra.mxu0 0.0
        %2513 = vmatprep.subr.mxu0 0.0
        %2514 = vmatpush1.msra.mxu0 0.0
        %2515 = vmatprep.subr.mxu0 0.0
        %2516 = vmatpush1.msra.mxu0 0.0
        %2517 = vmatprep.subr.mxu0 0.0
        %2518 = vmatpush1.msra.mxu0 0.0
        %2519 = vmatprep.subr.mxu0 0.0
        %2520 = vmatpush1.msra.mxu0 0.0
        %2521 = vmatprep.subr.mxu0 0.0
        %2522 = vmatpush1.msra.mxu0 0.0
        %2523 = vmatprep.subr.mxu0 0.0
        %2524 = vmatpush1.msra.mxu0 0.0
        %2525 = vmatprep.subr.mxu0 0.0
        %2526 = vmatpush1.msra.mxu0 0.0
        %2527 = vmatprep.subr.mxu0 0.0
        %2528 = vmatpush1.msra.mxu0 0.0
        %2529 = vmatprep.subr.mxu0 0.0
        %2530 = vmatpush1.msra.mxu0 0.0
        %2531 = vmatprep.subr.mxu0 0.0
        %2532 = vmatpush1.msra.mxu0 0.0
        %2533 = vmatprep.subr.mxu0 0.0
        %2534 = vmatpush1.msra.mxu0 0.0
        %2535 = vmatprep.subr.mxu0 0.0
        %2536 = vmatpush1.msra.mxu0 0.0
        %2537 = vmatprep.subr.mxu0 0.0
        %2538 = vmatpush1.msra.mxu0 0.0
        %2539 = vmatprep.subr.mxu0 0.0
        %2540 = vmatpush1.msra.mxu0 0.0
        %2541 = vmatprep.subr.mxu0 0.0
        %2542 = vmatpush1.msra.mxu0 0.0
        %2543 = vmatprep.subr.mxu0 0.0
        %2544 = vmatpush1.msra.mxu0 0.0
        %2545 = vmatprep.subr.mxu0 0.0
        %2546 = vmatpush1.msra.mxu0 0.0
        %2547 = vmatprep.subr.mxu0 0.0
        %2548 = vmatpush1.msra.mxu0 0.0
        %2549 = vmatprep.subr.mxu0 0.0
        %2550 = vmatpush1.msra.mxu0 0.0
        %2551 = vmatprep.subr.mxu0 0.0
        %2552 = vmatpush1.msra.mxu0 0.0
        %2553 = vmatprep.mubr.f32.mxu0 0.0
        %2554 = vmatmul.mubr.f32.gmra.mrb[0].mxu0 %v2487
        %v2555 = vpop.f32.mrb[0].mxu0
        %v2556 = vadd.f32 0.0, %v2555
        %v2557 = vpop.f32.mrb[0].mxu0
        %2558 = vdwg.mxu0
        %v2560 = vsel %vm1306, %v2298, 0
        %v2563 = vsel %vm1306, %v2390, 0
        %2565 = vmatprep.subr.mxu0 0.0
        %2566 = vmatpush1.xpose.msra.mxu0 %v2563
        %2567 = vmatprep.subr.mxu0 0.0
        %2568 = vmatpush1.xpose.msra.mxu0 0.0
        %2569 = vmatprep.subr.mxu0 0.0
        %2570 = vmatpush1.xpose.msra.mxu0 0.0
        %2571 = vmatprep.subr.mxu0 0.0
        %2572 = vmatpush1.xpose.msra.mxu0 0.0
        %2573 = vmatprep.subr.mxu0 0.0
        %2574 = vmatpush1.xpose.msra.mxu0 0.0
        %2575 = vmatprep.subr.mxu0 0.0
        %2576 = vmatpush1.xpose.msra.mxu0 0.0
        %2577 = vmatprep.subr.mxu0 0.0
        %2578 = vmatpush1.xpose.msra.mxu0 0.0
        %2579 = vmatprep.subr.mxu0 0.0
        %2580 = vmatpush1.xpose.msra.mxu0 0.0
        %2581 = vmatprep.subr.mxu0 0.0
        %2582 = vmatpush1.xpose.msra.mxu0 0.0
        %2583 = vmatprep.subr.mxu0 0.0
        %2584 = vmatpush1.xpose.msra.mxu0 0.0
        %2585 = vmatprep.subr.mxu0 0.0
        %2586 = vmatpush1.xpose.msra.mxu0 0.0
        %2587 = vmatprep.subr.mxu0 0.0
        %2588 = vmatpush1.xpose.msra.mxu0 0.0
        %2589 = vmatprep.subr.mxu0 0.0
        %2590 = vmatpush1.xpose.msra.mxu0 0.0
        %2591 = vmatprep.subr.mxu0 0.0
        %2592 = vmatpush1.xpose.msra.mxu0 0.0
        %2593 = vmatprep.subr.mxu0 0.0
        %2594 = vmatpush1.xpose.msra.mxu0 0.0
        %2595 = vmatprep.subr.mxu0 0.0
        %2596 = vmatpush1.xpose.msra.mxu0 0.0
        %2597 = vmatprep.subr.mxu0 0.0
        %2598 = vmatpush1.xpose.msra.mxu0 0.0
        %2599 = vmatprep.subr.mxu0 0.0
        %2600 = vmatpush1.xpose.msra.mxu0 0.0
        %2601 = vmatprep.subr.mxu0 0.0
        %2602 = vmatpush1.xpose.msra.mxu0 0.0
        %2603 = vmatprep.subr.mxu0 0.0
        %2604 = vmatpush1.xpose.msra.mxu0 0.0
        %2605 = vmatprep.subr.mxu0 0.0
        %2606 = vmatpush1.xpose.msra.mxu0 0.0
        %2607 = vmatprep.subr.mxu0 0.0
        %2608 = vmatpush1.xpose.msra.mxu0 0.0
        %2609 = vmatprep.subr.mxu0 0.0
        %2610 = vmatpush1.xpose.msra.mxu0 0.0
        %2611 = vmatprep.subr.mxu0 0.0
        %2612 = vmatpush1.xpose.msra.mxu0 0.0
        %2613 = vmatprep.subr.mxu0 0.0
        %2614 = vmatpush1.xpose.msra.mxu0 0.0
        %2615 = vmatprep.subr.mxu0 0.0
        %2616 = vmatpush1.xpose.msra.mxu0 0.0
        %2617 = vmatprep.subr.mxu0 0.0
        %2618 = vmatpush1.xpose.msra.mxu0 0.0
        %2619 = vmatprep.subr.mxu0 0.0
        %2620 = vmatpush1.xpose.msra.mxu0 0.0
        %2621 = vmatprep.subr.mxu0 0.0
        %2622 = vmatpush1.xpose.msra.mxu0 0.0
        %2623 = vmatprep.subr.mxu0 0.0
        %2624 = vmatpush1.xpose.msra.mxu0 0.0
        %2625 = vmatprep.subr.mxu0 0.0
        %2626 = vmatpush1.xpose.msra.mxu0 0.0
        %2627 = vmatprep.subr.mxu0 0.0
        %2628 = vmatpush1.xpose.msra.mxu0 0.0
        %2629 = vmatprep.mubr.f32.mxu0 0.0
        %2630 = vmatmul.mubr.f32.gmra.mrb[0].mxu0 %v2560
        %v2631 = vpop.f32.mrb[0].mxu0
        %v2632 = vadd.f32 0.0, %v2631
        %v2633 = vpop.f32.mrb[0].mxu0
        %2634 = vdwg.mxu0
        %v2635 = vmul.f32 %v2632, 0.25
        %vm2636 = vcmp.gt.f32.partialorder %v1207, 0.0
        %v2637 = vsel %vm2636, -1e+30, %v2635
        %v2638 = vsel %vm1384, %v2637, -inf
        %2639 = vmax.xlane.f32.xlu0 %v2638
        %v2640 = vpop.xlane.xlu0 %2639
        %v2641 = vsub.f32 %v2637, %v2640
        %v2642 = vmul.f32 %v2641, 1.442695
        %v2643 = vpow.pop %v2642
        %v2644 = vsel %vm1384, %v2643, 0.0
        %2645 = vadd.xlane.f32.xlu0 %v2644
        %v2646 = vpop.xlane.xlu0 %2645
        %v2647 = vrcp.pop %v2646
        %v2648 = vmul.f32 %v2643, %v2647
        %2649 = vrot.lane.b32.xlu0 %v2390, 96
        %v2650 = vpop.permute.xlu0 %2649
        %v2653 = vsel %vm1384, %v2648, 0
        %2655 = vmatprep.subr.mxu0 0.0
        %2656 = vmatpush1.msra.mxu0 %v2650
        %2657 = vmatprep.subr.mxu0 0.0
        %2658 = vmatpush1.msra.mxu0 0.0
        %2659 = vmatprep.subr.mxu0 0.0
        %2660 = vmatpush1.msra.mxu0 0.0
        %2661 = vmatprep.subr.mxu0 0.0
        %2662 = vmatpush1.msra.mxu0 0.0
        %2663 = vmatprep.subr.mxu0 0.0
        %2664 = vmatpush1.msra.mxu0 0.0
        %2665 = vmatprep.subr.mxu0 0.0
        %2666 = vmatpush1.msra.mxu0 0.0
        %2667 = vmatprep.subr.mxu0 0.0
        %2668 = vmatpush1.msra.mxu0 0.0
        %2669 = vmatprep.subr.mxu0 0.0
        %2670 = vmatpush1.msra.mxu0 0.0
        %2671 = vmatprep.subr.mxu0 0.0
        %2672 = vmatpush1.msra.mxu0 0.0
        %2673 = vmatprep.subr.mxu0 0.0
        %2674 = vmatpush1.msra.mxu0 0.0
        %2675 = vmatprep.subr.mxu0 0.0
        %2676 = vmatpush1.msra.mxu0 0.0
        %2677 = vmatprep.subr.mxu0 0.0
        %2678 = vmatpush1.msra.mxu0 0.0
        %2679 = vmatprep.subr.mxu0 0.0
        %2680 = vmatpush1.msra.mxu0 0.0
        %2681 = vmatprep.subr.mxu0 0.0
        %2682 = vmatpush1.msra.mxu0 0.0
        %2683 = vmatprep.subr.mxu0 0.0
        %2684 = vmatpush1.msra.mxu0 0.0
        %2685 = vmatprep.subr.mxu0 0.0
        %2686 = vmatpush1.msra.mxu0 0.0
        %2687 = vmatprep.subr.mxu0 0.0
        %2688 = vmatpush1.msra.mxu0 0.0
        %2689 = vmatprep.subr.mxu0 0.0
        %2690 = vmatpush1.msra.mxu0 0.0
        %2691 = vmatprep.subr.mxu0 0.0
        %2692 = vmatpush1.msra.mxu0 0.0
        %2693 = vmatprep.subr.mxu0 0.0
        %2694 = vmatpush1.msra.mxu0 0.0
        %2695 = vmatprep.subr.mxu0 0.0
        %2696 = vmatpush1.msra.mxu0 0.0
        %2697 = vmatprep.subr.mxu0 0.0
        %2698 = vmatpush1.msra.mxu0 0.0
        %2699 = vmatprep.subr.mxu0 0.0
        %2700 = vmatpush1.msra.mxu0 0.0
        %2701 = vmatprep.subr.mxu0 0.0
        %2702 = vmatpush1.msra.mxu0 0.0
        %2703 = vmatprep.subr.mxu0 0.0
        %2704 = vmatpush1.msra.mxu0 0.0
        %2705 = vmatprep.subr.mxu0 0.0
        %2706 = vmatpush1.msra.mxu0 0.0
        %2707 = vmatprep.subr.mxu0 0.0
        %2708 = vmatpush1.msra.mxu0 0.0
        %2709 = vmatprep.subr.mxu0 0.0
        %2710 = vmatpush1.msra.mxu0 0.0
        %2711 = vmatprep.subr.mxu0 0.0
        %2712 = vmatpush1.msra.mxu0 0.0
        %2713 = vmatprep.subr.mxu0 0.0
        %2714 = vmatpush1.msra.mxu0 0.0
        %2715 = vmatprep.subr.mxu0 0.0
        %2716 = vmatpush1.msra.mxu0 0.0
        %2717 = vmatprep.subr.mxu0 0.0
        %2718 = vmatpush1.msra.mxu0 0.0
        %2719 = vmatprep.mubr.f32.mxu0 0.0
        %2720 = vmatmul.mubr.f32.gmra.mrb[0].mxu0 %v2653
        %v2721 = vpop.f32.mrb[0].mxu0
        %v2722 = vadd.f32 0.0, %v2721
        %v2723 = vpop.f32.mrb[0].mxu0
        %2724 = vdwg.mxu0
        %2725 = vrot.lane.b32.xlu0 %v2293, 112
        %v2726 = vpop.permute.xlu0 %2725
        %2727 = vrot.lane.b32.xlu0 %v2385, 112
        %v2728 = vpop.permute.xlu0 %2727
        %v2729 = vsel %vm1306, %v2726, 0
        %v2731 = vsel %vm1306, %v2728, 0
        %2733 = vmatprep.subr.mxu0 0.0
        %2734 = vmatpush1.xpose.msra.mxu0 %v2731
        %2735 = vmatprep.subr.mxu0 0.0
        %2736 = vmatpush1.xpose.msra.mxu0 0.0
        %2737 = vmatprep.subr.mxu0 0.0
        %2738 = vmatpush1.xpose.msra.mxu0 0.0
        %2739 = vmatprep.subr.mxu0 0.0
        %2740 = vmatpush1.xpose.msra.mxu0 0.0
        %2741 = vmatprep.subr.mxu0 0.0
        %2742 = vmatpush1.xpose.msra.mxu0 0.0
        %2743 = vmatprep.subr.mxu0 0.0
        %2744 = vmatpush1.xpose.msra.mxu0 0.0
        %2745 = vmatprep.subr.mxu0 0.0
        %2746 = vmatpush1.xpose.msra.mxu0 0.0
        %2747 = vmatprep.subr.mxu0 0.0
        %2748 = vmatpush1.xpose.msra.mxu0 0.0
        %2749 = vmatprep.subr.mxu0 0.0
        %2750 = vmatpush1.xpose.msra.mxu0 0.0
        %2751 = vmatprep.subr.mxu0 0.0
        %2752 = vmatpush1.xpose.msra.mxu0 0.0
        %2753 = vmatprep.subr.mxu0 0.0
        %2754 = vmatpush1.xpose.msra.mxu0 0.0
        %2755 = vmatprep.subr.mxu0 0.0
        %2756 = vmatpush1.xpose.msra.mxu0 0.0
        %2757 = vmatprep.subr.mxu0 0.0
        %2758 = vmatpush1.xpose.msra.mxu0 0.0
        %2759 = vmatprep.subr.mxu0 0.0
        %2760 = vmatpush1.xpose.msra.mxu0 0.0
        %2761 = vmatprep.subr.mxu0 0.0
        %2762 = vmatpush1.xpose.msra.mxu0 0.0
        %2763 = vmatprep.subr.mxu0 0.0
        %2764 = vmatpush1.xpose.msra.mxu0 0.0
        %2765 = vmatprep.subr.mxu0 0.0
        %2766 = vmatpush1.xpose.msra.mxu0 0.0
        %2767 = vmatprep.subr.mxu0 0.0
        %2768 = vmatpush1.xpose.msra.mxu0 0.0
        %2769 = vmatprep.subr.mxu0 0.0
        %2770 = vmatpush1.xpose.msra.mxu0 0.0
        %2771 = vmatprep.subr.mxu0 0.0
        %2772 = vmatpush1.xpose.msra.mxu0 0.0
        %2773 = vmatprep.subr.mxu0 0.0
        %2774 = vmatpush1.xpose.msra.mxu0 0.0
        %2775 = vmatprep.subr.mxu0 0.0
        %2776 = vmatpush1.xpose.msra.mxu0 0.0
        %2777 = vmatprep.subr.mxu0 0.0
        %2778 = vmatpush1.xpose.msra.mxu0 0.0
        %2779 = vmatprep.subr.mxu0 0.0
        %2780 = vmatpush1.xpose.msra.mxu0 0.0
        %2781 = vmatprep.subr.mxu0 0.0
        %2782 = vmatpush1.xpose.msra.mxu0 0.0
        %2783 = vmatprep.subr.mxu0 0.0
        %2784 = vmatpush1.xpose.msra.mxu0 0.0
        %2785 = vmatprep.subr.mxu0 0.0
        %2786 = vmatpush1.xpose.msra.mxu0 0.0
        %2787 = vmatprep.subr.mxu0 0.0
        %2788 = vmatpush1.xpose.msra.mxu0 0.0
        %2789 = vmatprep.subr.mxu0 0.0
        %2790 = vmatpush1.xpose.msra.mxu0 0.0
        %2791 = vmatprep.subr.mxu0 0.0
        %2792 = vmatpush1.xpose.msra.mxu0 0.0
        %2793 = vmatprep.subr.mxu0 0.0
        %2794 = vmatpush1.xpose.msra.mxu0 0.0
        %2795 = vmatprep.subr.mxu0 0.0
        %2796 = vmatpush1.xpose.msra.mxu0 0.0
        %2797 = vmatprep.mubr.f32.mxu0 0.0
        %2798 = vmatmul.mubr.f32.gmra.mrb[0].mxu0 %v2729
        %v2799 = vpop.f32.mrb[0].mxu0
        %v2800 = vadd.f32 0.0, %v2799
        %v2801 = vpop.f32.mrb[0].mxu0
        %2802 = vdwg.mxu0
        %v2803 = vmul.f32 %v2800, 0.25
        %v2804 = vsel %vm2470, -1e+30, %v2803
        %v2805 = vsel %vm1384, %v2804, -inf
        %2806 = vmax.xlane.f32.xlu0 %v2805
        %v2807 = vpop.xlane.xlu0 %2806
        %v2808 = vsub.f32 %v2804, %v2807
        %v2809 = vmul.f32 %v2808, 1.442695
        %v2810 = vpow.pop %v2809
        %v2811 = vsel %vm1384, %v2810, 0.0
        %2812 = vadd.xlane.f32.xlu0 %v2811
        %v2813 = vpop.xlane.xlu0 %2812
        %v2814 = vrcp.pop %v2813
        %v2815 = vmul.f32 %v2810, %v2814
        %2816 = vrot.lane.b32.xlu0 %v2385, 80
        %v2817 = vpop.permute.xlu0 %2816
        %v2820 = vsel %vm1384, %v2815, 0
        %2822 = vmatprep.subr.mxu0 0.0
        %2823 = vmatpush1.msra.mxu0 %v2817
        %2824 = vmatprep.subr.mxu0 0.0
        %2825 = vmatpush1.msra.mxu0 0.0
        %2826 = vmatprep.subr.mxu0 0.0
        %2827 = vmatpush1.msra.mxu0 0.0
        %2828 = vmatprep.subr.mxu0 0.0
        %2829 = vmatpush1.msra.mxu0 0.0
        %2830 = vmatprep.subr.mxu0 0.0
        %2831 = vmatpush1.msra.mxu0 0.0
        %2832 = vmatprep.subr.mxu0 0.0
        %2833 = vmatpush1.msra.mxu0 0.0
        %2834 = vmatprep.subr.mxu0 0.0
        %2835 = vmatpush1.msra.mxu0 0.0
        %2836 = vmatprep.subr.mxu0 0.0
        %2837 = vmatpush1.msra.mxu0 0.0
        %2838 = vmatprep.subr.mxu0 0.0
        %2839 = vmatpush1.msra.mxu0 0.0
        %2840 = vmatprep.subr.mxu0 0.0
        %2841 = vmatpush1.msra.mxu0 0.0
        %2842 = vmatprep.subr.mxu0 0.0
        %2843 = vmatpush1.msra.mxu0 0.0
        %2844 = vmatprep.subr.mxu0 0.0
        %2845 = vmatpush1.msra.mxu0 0.0
        %2846 = vmatprep.subr.mxu0 0.0
        %2847 = vmatpush1.msra.mxu0 0.0
        %2848 = vmatprep.subr.mxu0 0.0
        %2849 = vmatpush1.msra.mxu0 0.0
        %2850 = vmatprep.subr.mxu0 0.0
        %2851 = vmatpush1.msra.mxu0 0.0
        %2852 = vmatprep.subr.mxu0 0.0
        %2853 = vmatpush1.msra.mxu0 0.0
        %2854 = vmatprep.subr.mxu0 0.0
        %2855 = vmatpush1.msra.mxu0 0.0
        %2856 = vmatprep.subr.mxu0 0.0
        %2857 = vmatpush1.msra.mxu0 0.0
        %2858 = vmatprep.subr.mxu0 0.0
        %2859 = vmatpush1.msra.mxu0 0.0
        %2860 = vmatprep.subr.mxu0 0.0
        %2861 = vmatpush1.msra.mxu0 0.0
        %2862 = vmatprep.subr.mxu0 0.0
        %2863 = vmatpush1.msra.mxu0 0.0
        %2864 = vmatprep.subr.mxu0 0.0
        %2865 = vmatpush1.msra.mxu0 0.0
        %2866 = vmatprep.subr.mxu0 0.0
        %2867 = vmatpush1.msra.mxu0 0.0
        %2868 = vmatprep.subr.mxu0 0.0
        %2869 = vmatpush1.msra.mxu0 0.0
        %2870 = vmatprep.subr.mxu0 0.0
        %2871 = vmatpush1.msra.mxu0 0.0
        %2872 = vmatprep.subr.mxu0 0.0
        %2873 = vmatpush1.msra.mxu0 0.0
        %2874 = vmatprep.subr.mxu0 0.0
        %2875 = vmatpush1.msra.mxu0 0.0
        %2876 = vmatprep.subr.mxu0 0.0
        %2877 = vmatpush1.msra.mxu0 0.0
        %2878 = vmatprep.subr.mxu0 0.0
        %2879 = vmatpush1.msra.mxu0 0.0
        %2880 = vmatprep.subr.mxu0 0.0
        %2881 = vmatpush1.msra.mxu0 0.0
        %2882 = vmatprep.subr.mxu0 0.0
        %2883 = vmatpush1.msra.mxu0 0.0
        %2884 = vmatprep.subr.mxu0 0.0
        %2885 = vmatpush1.msra.mxu0 0.0
        %2886 = vmatprep.mubr.f32.mxu0 0.0
        %2887 = vmatmul.mubr.f32.gmra.mrb[0].mxu0 %v2820
        %v2888 = vpop.f32.mrb[0].mxu0
        %v2889 = vadd.f32 0.0, %v2888
        %v2890 = vpop.f32.mrb[0].mxu0
        %2891 = vdwg.mxu0
        %2892 = vrot.lane.b32.xlu0 %v2298, 112
        %v2893 = vpop.permute.xlu0 %2892
        %2894 = vrot.lane.b32.xlu0 %v2390, 112
        %v2895 = vpop.permute.xlu0 %2894
        %v2896 = vsel %vm1306, %v2893, 0
        %v2898 = vsel %vm1306, %v2895, 0
        %2900 = vmatprep.subr.mxu0 0.0
        %2901 = vmatpush1.xpose.msra.mxu0 %v2898
        %2902 = vmatprep.subr.mxu0 0.0
        %2903 = vmatpush1.xpose.msra.mxu0 0.0
        %2904 = vmatprep.subr.mxu0 0.0
        %2905 = vmatpush1.xpose.msra.mxu0 0.0
        %2906 = vmatprep.subr.mxu0 0.0
        %2907 = vmatpush1.xpose.msra.mxu0 0.0
        %2908 = vmatprep.subr.mxu0 0.0
        %2909 = vmatpush1.xpose.msra.mxu0 0.0
        %2910 = vmatprep.subr.mxu0 0.0
        %2911 = vmatpush1.xpose.msra.mxu0 0.0
        %2912 = vmatprep.subr.mxu0 0.0
        %2913 = vmatpush1.xpose.msra.mxu0 0.0
        %2914 = vmatprep.subr.mxu0 0.0
        %2915 = vmatpush1.xpose.msra.mxu0 0.0
        %2916 = vmatprep.subr.mxu0 0.0
        %2917 = vmatpush1.xpose.msra.mxu0 0.0
        %2918 = vmatprep.subr.mxu0 0.0
        %2919 = vmatpush1.xpose.msra.mxu0 0.0
        %2920 = vmatprep.subr.mxu0 0.0
        %2921 = vmatpush1.xpose.msra.mxu0 0.0
        %2922 = vmatprep.subr.mxu0 0.0
        %2923 = vmatpush1.xpose.msra.mxu0 0.0
        %2924 = vmatprep.subr.mxu0 0.0
        %2925 = vmatpush1.xpose.msra.mxu0 0.0
        %2926 = vmatprep.subr.mxu0 0.0
        %2927 = vmatpush1.xpose.msra.mxu0 0.0
        %2928 = vmatprep.subr.mxu0 0.0
        %2929 = vmatpush1.xpose.msra.mxu0 0.0
        %2930 = vmatprep.subr.mxu0 0.0
        %2931 = vmatpush1.xpose.msra.mxu0 0.0
        %2932 = vmatprep.subr.mxu0 0.0
        %2933 = vmatpush1.xpose.msra.mxu0 0.0
        %2934 = vmatprep.subr.mxu0 0.0
        %2935 = vmatpush1.xpose.msra.mxu0 0.0
        %2936 = vmatprep.subr.mxu0 0.0
        %2937 = vmatpush1.xpose.msra.mxu0 0.0
        %2938 = vmatprep.subr.mxu0 0.0
        %2939 = vmatpush1.xpose.msra.mxu0 0.0
        %2940 = vmatprep.subr.mxu0 0.0
        %2941 = vmatpush1.xpose.msra.mxu0 0.0
        %2942 = vmatprep.subr.mxu0 0.0
        %2943 = vmatpush1.xpose.msra.mxu0 0.0
        %2944 = vmatprep.subr.mxu0 0.0
        %2945 = vmatpush1.xpose.msra.mxu0 0.0
        %2946 = vmatprep.subr.mxu0 0.0
        %2947 = vmatpush1.xpose.msra.mxu0 0.0
        %2948 = vmatprep.subr.mxu0 0.0
        %2949 = vmatpush1.xpose.msra.mxu0 0.0
        %2950 = vmatprep.subr.mxu0 0.0
        %2951 = vmatpush1.xpose.msra.mxu0 0.0
        %2952 = vmatprep.subr.mxu0 0.0
        %2953 = vmatpush1.xpose.msra.mxu0 0.0
        %2954 = vmatprep.subr.mxu0 0.0
        %2955 = vmatpush1.xpose.msra.mxu0 0.0
        %2956 = vmatprep.subr.mxu0 0.0
        %2957 = vmatpush1.xpose.msra.mxu0 0.0
        %2958 = vmatprep.subr.mxu0 0.0
        %2959 = vmatpush1.xpose.msra.mxu0 0.0
        %2960 = vmatprep.subr.mxu0 0.0
        %2961 = vmatpush1.xpose.msra.mxu0 0.0
        %2962 = vmatprep.subr.mxu0 0.0
        %2963 = vmatpush1.xpose.msra.mxu0 0.0
        %2964 = vmatprep.mubr.f32.mxu0 0.0
        %2965 = vmatmul.mubr.f32.gmra.mrb[0].mxu0 %v2896
        %v2966 = vpop.f32.mrb[0].mxu0
        %v2967 = vadd.f32 0.0, %v2966
        %v2968 = vpop.f32.mrb[0].mxu0
        %2969 = vdwg.mxu0
        %v2970 = vmul.f32 %v2967, 0.25
        %v2971 = vsel %vm2636, -1e+30, %v2970
        %v2972 = vsel %vm1384, %v2971, -inf
        %2973 = vmax.xlane.f32.xlu0 %v2972
        %v2974 = vpop.xlane.xlu0 %2973
        %v2975 = vsub.f32 %v2971, %v2974
        %v2976 = vmul.f32 %v2975, 1.442695
        %v2977 = vpow.pop %v2976
        %v2978 = vsel %vm1384, %v2977, 0.0
        %2979 = vadd.xlane.f32.xlu0 %v2978
        %v2980 = vpop.xlane.xlu0 %2979
        %v2981 = vrcp.pop %v2980
        %v2982 = vmul.f32 %v2977, %v2981
        %2983 = vrot.lane.b32.xlu0 %v2390, 80
        %v2984 = vpop.permute.xlu0 %2983
        %v2987 = vsel %vm1384, %v2982, 0
        %2989 = vmatprep.subr.mxu0 0.0
        %2990 = vmatpush1.msra.mxu0 %v2984
        %2991 = vmatprep.subr.mxu0 0.0
        %2992 = vmatpush1.msra.mxu0 0.0
        %2993 = vmatprep.subr.mxu0 0.0
        %2994 = vmatpush1.msra.mxu0 0.0
        %2995 = vmatprep.subr.mxu0 0.0
        %2996 = vmatpush1.msra.mxu0 0.0
        %2997 = vmatprep.subr.mxu0 0.0
        %2998 = vmatpush1.msra.mxu0 0.0
        %2999 = vmatprep.subr.mxu0 0.0
        %3000 = vmatpush1.msra.mxu0 0.0
        %3001 = vmatprep.subr.mxu0 0.0
        %3002 = vmatpush1.msra.mxu0 0.0
        %3003 = vmatprep.subr.mxu0 0.0
        %3004 = vmatpush1.msra.mxu0 0.0
        %3005 = vmatprep.subr.mxu0 0.0
        %3006 = vmatpush1.msra.mxu0 0.0
        %3007 = vmatprep.subr.mxu0 0.0
        %3008 = vmatpush1.msra.mxu0 0.0
        %3009 = vmatprep.subr.mxu0 0.0
        %3010 = vmatpush1.msra.mxu0 0.0
        %3011 = vmatprep.subr.mxu0 0.0
        %3012 = vmatpush1.msra.mxu0 0.0
        %3013 = vmatprep.subr.mxu0 0.0
        %3014 = vmatpush1.msra.mxu0 0.0
        %3015 = vmatprep.subr.mxu0 0.0
        %3016 = vmatpush1.msra.mxu0 0.0
        %3017 = vmatprep.subr.mxu0 0.0
        %3018 = vmatpush1.msra.mxu0 0.0
        %3019 = vmatprep.subr.mxu0 0.0
        %3020 = vmatpush1.msra.mxu0 0.0
        %3021 = vmatprep.subr.mxu0 0.0
        %3022 = vmatpush1.msra.mxu0 0.0
        %3023 = vmatprep.subr.mxu0 0.0
        %3024 = vmatpush1.msra.mxu0 0.0
        %3025 = vmatprep.subr.mxu0 0.0
        %3026 = vmatpush1.msra.mxu0 0.0
        %3027 = vmatprep.subr.mxu0 0.0
        %3028 = vmatpush1.msra.mxu0 0.0
        %3029 = vmatprep.subr.mxu0 0.0
        %3030 = vmatpush1.msra.mxu0 0.0
        %3031 = vmatprep.subr.mxu0 0.0
        %3032 = vmatpush1.msra.mxu0 0.0
        %3033 = vmatprep.subr.mxu0 0.0
        %3034 = vmatpush1.msra.mxu0 0.0
        %3035 = vmatprep.subr.mxu0 0.0
        %3036 = vmatpush1.msra.mxu0 0.0
        %3037 = vmatprep.subr.mxu0 0.0
        %3038 = vmatpush1.msra.mxu0 0.0
        %3039 = vmatprep.subr.mxu0 0.0
        %3040 = vmatpush1.msra.mxu0 0.0
        %3041 = vmatprep.subr.mxu0 0.0
        %3042 = vmatpush1.msra.mxu0 0.0
        %3043 = vmatprep.subr.mxu0 0.0
        %3044 = vmatpush1.msra.mxu0 0.0
        %3045 = vmatprep.subr.mxu0 0.0
        %3046 = vmatpush1.msra.mxu0 0.0
        %3047 = vmatprep.subr.mxu0 0.0
        %3048 = vmatpush1.msra.mxu0 0.0
        %3049 = vmatprep.subr.mxu0 0.0
        %3050 = vmatpush1.msra.mxu0 0.0
        %3051 = vmatprep.subr.mxu0 0.0
        %3052 = vmatpush1.msra.mxu0 0.0
        %3053 = vmatprep.mubr.f32.mxu0 0.0
        %3054 = vmatmul.mubr.f32.gmra.mrb[0].mxu0 %v2987
        %v3055 = vpop.f32.mrb[0].mxu0
        %v3056 = vadd.f32 0.0, %v3055
        %v3057 = vpop.f32.mrb[0].mxu0
        %3058 = vdwg.mxu0
        %v3059 = vld [vmem:[%s980] sm:$0xff]
        %v3060 = vld [vmem:[%s980 + $0x8] sm:$0xff]
        %v3061 = vld [vmem:[%s980 + $0x10] sm:$0xff]
        %v3062 = vld [vmem:[%s980 + $0x18] sm:$0xff]
        %v3063 = vld [vmem:[%s1173] sm:$0x1]
        %v3064 = vld [vmem:[%s1176] sm:$0x1]
        %v3065 = vld [vmem:[%s988] sm:$0x1]
        %v3067 = vlaneseq
        %v3068 = vshrl.u32 %v3067, 7
        %v3069 = vsub.s32 0, %v3068
        %v3070 = vrot.slane %v3063, %v3069
        %v3072 = vadd.f32 %v2207, %v3070
        %v3073 = vadd.f32 %v2208, %v3070
        %v3075 = vsel %vm1306, %v2556, 0
        %v3078 = vsel %vm1306, %v2722, 0
        %3080 = vmatprep.subr.mxu0 0.0
        %3081 = vmatpush1.msra.mxu0 %v3059
        %3082 = vmatprep.subr.mxu0 0.0
        %3083 = vmatpush1.msra.mxu0 %v3060
        %3084 = vmatprep.subr.mxu0 0.0
        %3085 = vmatpush1.msra.mxu0 0.0
        %3086 = vmatprep.subr.mxu0 0.0
        %3087 = vmatpush1.msra.mxu0 0.0
        %3088 = vmatprep.subr.mxu0 0.0
        %3089 = vmatpush1.msra.mxu0 0.0
        %3090 = vmatprep.subr.mxu0 0.0
        %3091 = vmatpush1.msra.mxu0 0.0
        %3092 = vmatprep.subr.mxu0 0.0
        %3093 = vmatpush1.msra.mxu0 0.0
        %3094 = vmatprep.subr.mxu0 0.0
        %3095 = vmatpush1.msra.mxu0 0.0
        %3096 = vmatprep.subr.mxu0 0.0
        %3097 = vmatpush1.msra.mxu0 0.0
        %3098 = vmatprep.subr.mxu0 0.0
        %3099 = vmatpush1.msra.mxu0 0.0
        %3100 = vmatprep.subr.mxu0 0.0
        %3101 = vmatpush1.msra.mxu0 0.0
        %3102 = vmatprep.subr.mxu0 0.0
        %3103 = vmatpush1.msra.mxu0 0.0
        %3104 = vmatprep.subr.mxu0 0.0
        %3105 = vmatpush1.msra.mxu0 0.0
        %3106 = vmatprep.subr.mxu0 0.0
        %3107 = vmatpush1.msra.mxu0 0.0
        %3108 = vmatprep.subr.mxu0 0.0
        %3109 = vmatpush1.msra.mxu0 0.0
        %3110 = vmatprep.subr.mxu0 0.0
        %3111 = vmatpush1.msra.mxu0 0.0
        %3112 = vmatprep.subr.mxu0 0.0
        %3113 = vmatpush1.msra.mxu0 0.0
        %3114 = vmatprep.subr.mxu0 0.0
        %3115 = vmatpush1.msra.mxu0 0.0
        %3116 = vmatprep.subr.mxu0 0.0
        %3117 = vmatpush1.msra.mxu0 0.0
        %3118 = vmatprep.subr.mxu0 0.0
        %3119 = vmatpush1.msra.mxu0 0.0
        %3120 = vmatprep.subr.mxu0 0.0
        %3121 = vmatpush1.msra.mxu0 0.0
        %3122 = vmatprep.subr.mxu0 0.0
        %3123 = vmatpush1.msra.mxu0 0.0
        %3124 = vmatprep.subr.mxu0 0.0
        %3125 = vmatpush1.msra.mxu0 0.0
        %3126 = vmatprep.subr.mxu0 0.0
        %3127 = vmatpush1.msra.mxu0 0.0
        %3128 = vmatprep.subr.mxu0 0.0
        %3129 = vmatpush1.msra.mxu0 0.0
        %3130 = vmatprep.subr.mxu0 0.0
        %3131 = vmatpush1.msra.mxu0 0.0
        %3132 = vmatprep.subr.mxu0 0.0
        %3133 = vmatpush1.msra.mxu0 0.0
        %3134 = vmatprep.subr.mxu0 0.0
        %3135 = vmatpush1.msra.mxu0 0.0
        %3136 = vmatprep.subr.mxu0 0.0
        %3137 = vmatpush1.msra.mxu0 0.0
        %3138 = vmatprep.subr.mxu0 0.0
        %3139 = vmatpush1.msra.mxu0 0.0
        %3140 = vmatprep.subr.mxu0 0.0
        %3141 = vmatpush1.msra.mxu0 0.0
        %3142 = vmatprep.subr.mxu0 0.0
        %3143 = vmatpush1.msra.mxu0 0.0
        %3144 = vmatprep.mubr.f32.mxu0 0.0
        %3145 = vmatmul.mubr.f32.gmra.mrb[0].mxu0 %v3075
        %v3146 = vpop.f32.mrb[0].mxu0
        %v3147 = vadd.f32 0.0, %v3146
        %v3148 = vpop.f32.mrb[0].mxu0
        %3149 = vmatprep.mubr.f32.mxu0 0.0
        %3150 = vmatmul.mubr.f32.gmra.mrb[0].mxu0 %v3078
        %v3151 = vpop.f32.mrb[0].mxu0
        %v3152 = vadd.f32 0.0, %v3151
        %v3153 = vpop.f32.mrb[0].mxu0
        %3154 = vdwg.mxu0
        %v3155 = vadd.f32 %v3072, %v3147
        %v3156 = vadd.f32 %v3073, %v3152
        %v3158 = vsel %vm1306, %v2889, 0
        %v3161 = vsel %vm1306, %v3056, 0
        %3163 = vmatprep.subr.mxu0 0.0
        %3164 = vmatpush1.msra.mxu0 %v3061
        %3165 = vmatprep.subr.mxu0 0.0
        %3166 = vmatpush1.msra.mxu0 %v3062
        %3167 = vmatprep.subr.mxu0 0.0
        %3168 = vmatpush1.msra.mxu0 0.0
        %3169 = vmatprep.subr.mxu0 0.0
        %3170 = vmatpush1.msra.mxu0 0.0
        %3171 = vmatprep.subr.mxu0 0.0
        %3172 = vmatpush1.msra.mxu0 0.0
        %3173 = vmatprep.subr.mxu0 0.0
        %3174 = vmatpush1.msra.mxu0 0.0
        %3175 = vmatprep.subr.mxu0 0.0
        %3176 = vmatpush1.msra.mxu0 0.0
        %3177 = vmatprep.subr.mxu0 0.0
        %3178 = vmatpush1.msra.mxu0 0.0
        %3179 = vmatprep.subr.mxu0 0.0
        %3180 = vmatpush1.msra.mxu0 0.0
        %3181 = vmatprep.subr.mxu0 0.0
        %3182 = vmatpush1.msra.mxu0 0.0
        %3183 = vmatprep.subr.mxu0 0.0
        %3184 = vmatpush1.msra.mxu0 0.0
        %3185 = vmatprep.subr.mxu0 0.0
        %3186 = vmatpush1.msra.mxu0 0.0
        %3187 = vmatprep.subr.mxu0 0.0
        %3188 = vmatpush1.msra.mxu0 0.0
        %3189 = vmatprep.subr.mxu0 0.0
        %3190 = vmatpush1.msra.mxu0 0.0
        %3191 = vmatprep.subr.mxu0 0.0
        %3192 = vmatpush1.msra.mxu0 0.0
        %3193 = vmatprep.subr.mxu0 0.0
        %3194 = vmatpush1.msra.mxu0 0.0
        %3195 = vmatprep.subr.mxu0 0.0
        %3196 = vmatpush1.msra.mxu0 0.0
        %3197 = vmatprep.subr.mxu0 0.0
        %3198 = vmatpush1.msra.mxu0 0.0
        %3199 = vmatprep.subr.mxu0 0.0
        %3200 = vmatpush1.msra.mxu0 0.0
        %3201 = vmatprep.subr.mxu0 0.0
        %3202 = vmatpush1.msra.mxu0 0.0
        %3203 = vmatprep.subr.mxu0 0.0
        %3204 = vmatpush1.msra.mxu0 0.0
        %3205 = vmatprep.subr.mxu0 0.0
        %3206 = vmatpush1.msra.mxu0 0.0
        %3207 = vmatprep.subr.mxu0 0.0
        %3208 = vmatpush1.msra.mxu0 0.0
        %3209 = vmatprep.subr.mxu0 0.0
        %3210 = vmatpush1.msra.mxu0 0.0
        %3211 = vmatprep.subr.mxu0 0.0
        %3212 = vmatpush1.msra.mxu0 0.0
        %3213 = vmatprep.subr.mxu0 0.0
        %3214 = vmatpush1.msra.mxu0 0.0
        %3215 = vmatprep.subr.mxu0 0.0
        %3216 = vmatpush1.msra.mxu0 0.0
        %3217 = vmatprep.subr.mxu0 0.0
        %3218 = vmatpush1.msra.mxu0 0.0
        %3219 = vmatprep.subr.mxu0 0.0
        %3220 = vmatpush1.msra.mxu0 0.0
        %3221 = vmatprep.subr.mxu0 0.0
        %3222 = vmatpush1.msra.mxu0 0.0
        %3223 = vmatprep.subr.mxu0 0.0
        %3224 = vmatpush1.msra.mxu0 0.0
        %3225 = vmatprep.subr.mxu0 0.0
        %3226 = vmatpush1.msra.mxu0 0.0
        %3227 = vmatprep.mubr.f32.mxu0 0.0
        %3228 = vmatmul.mubr.f32.gmra.mrb[0].mxu0 %v3158
        %v3229 = vpop.f32.mrb[0].mxu0
        %v3230 = vadd.f32 0.0, %v3229
        %v3231 = vpop.f32.mrb[0].mxu0
        %3232 = vmatprep.mubr.f32.mxu0 0.0
        %3233 = vmatmul.mubr.f32.gmra.mrb[0].mxu0 %v3161
        %v3234 = vpop.f32.mrb[0].mxu0
        %v3235 = vadd.f32 0.0, %v3234
        %v3236 = vpop.f32.mrb[0].mxu0
        %3237 = vdwg.mxu0
        %v3238 = vadd.f32 %v3155, %v3230
        %v3239 = vadd.f32 %v3156, %v3235
        %v3240 = vsel %vm1221, %v3238, 0.0
        %3241 = vadd.xlane.f32.xlu0 %v3240
        %v3242 = vpop.xlane.xlu0 %3241
        %v3243 = vsel %vm1221, %v3239, 0.0
        %3244 = vadd.xlane.f32.xlu0 %v3243
        %v3245 = vpop.xlane.xlu0 %3244
        %v3246 = vmul.f32 %v3242, %v2160
        %v3247 = vmul.f32 %v3245, %v2160
        %v3248 = vsub.f32 %v3238, %v3246
        %v3249 = vsub.f32 %v3239, %v3247
        %v3250 = vmul.f32 %v3248, %v3248
        %v3251 = vmul.f32 %v3249, %v3249
        %v3252 = vsel %vm1221, %v3250, 0.0
        %3253 = vadd.xlane.f32.xlu0 %v3252
        %v3254 = vpop.xlane.xlu0 %3253
        %v3255 = vsel %vm1221, %v3251, 0.0
        %3256 = vadd.xlane.f32.xlu0 %v3255
        %v3257 = vpop.xlane.xlu0 %3256
        %v3258 = vmul.f32 %v3254, %v2160
        %v3259 = vmul.f32 %v3257, %v2160
        %v3260 = vadd.f32 %v3258, 1e-05
        %v3261 = vadd.f32 %v3259, 1e-05
        %v3262 = vrsqrt.pop %v3260
        %v3263 = vrsqrt.pop %v3261
        %v3264 = vmul.f32 %v3248, %v3262
        %v3265 = vmul.f32 %v3249, %v3263
        %v3267 = vlaneseq
        %v3268 = vshrl.u32 %v3267, 7
        %v3269 = vsub.s32 0, %v3268
        %v3270 = vrot.slane %v3064, %v3269
        %v3272 = vmul.f32 %v3264, %v3270
        %v3273 = vmul.f32 %v3265, %v3270
        %v3275 = vlaneseq
        %v3276 = vshrl.u32 %v3275, 7
        %v3277 = vsub.s32 0, %v3276
        %v3278 = vrot.slane %v3065, %v3277
        %v3280 = vadd.f32 %v3272, %v3278
        %v3281 = vadd.f32 %v3273, %v3278
        %v3282 = vmul.f32 %v3280, %v2200
        %v3283 = vmul.f32 %v3281, %v2205
        %v3284 = vld [vmem:[%s997] sm:$0xff]
        %v3285 = vld [vmem:[%s997 + $0x8] sm:$0xff]
        %v3286 = vld [vmem:[%s997 + $0x10] sm:$0xff]
        %v3287 = vld [vmem:[%s997 + $0x18] sm:$0xff]
        %v3288 = vld [vmem:[%s1005] sm:$0x1]
        %v3290 = vlaneseq
        %v3291 = vshrl.u32 %v3290, 7
        %v3292 = vsub.s32 0, %v3291
        %v3293 = vrot.slane %v3288, %v3292
        %v3296 = vsel %vm1221, %v3282, 0
        %v3299 = vsel %vm1221, %v3283, 0
        %3301 = vmatprep.subr.mxu0 0.0
        %3302 = vmatpush1.msra.mxu0 %v3284
        %3303 = vmatprep.subr.mxu0 0.0
        %3304 = vmatpush1.msra.mxu0 %v3285
        %3305 = vmatprep.subr.mxu0 0.0
        %3306 = vmatpush1.msra.mxu0 %v3286
        %3307 = vmatprep.subr.mxu0 0.0
        %3308 = vmatpush1.msra.mxu0 %v3287
        %3309 = vmatprep.subr.mxu0 0.0
        %3310 = vmatpush1.msra.mxu0 0.0
        %3311 = vmatprep.subr.mxu0 0.0
        %3312 = vmatpush1.msra.mxu0 0.0
        %3313 = vmatprep.subr.mxu0 0.0
        %3314 = vmatpush1.msra.mxu0 0.0
        %3315 = vmatprep.subr.mxu0 0.0
        %3316 = vmatpush1.msra.mxu0 0.0
        %3317 = vmatprep.subr.mxu0 0.0
        %3318 = vmatpush1.msra.mxu0 0.0
        %3319 = vmatprep.subr.mxu0 0.0
        %3320 = vmatpush1.msra.mxu0 0.0
        %3321 = vmatprep.subr.mxu0 0.0
        %3322 = vmatpush1.msra.mxu0 0.0
        %3323 = vmatprep.subr.mxu0 0.0
        %3324 = vmatpush1.msra.mxu0 0.0
        %3325 = vmatprep.subr.mxu0 0.0
        %3326 = vmatpush1.msra.mxu0 0.0
        %3327 = vmatprep.subr.mxu0 0.0
        %3328 = vmatpush1.msra.mxu0 0.0
        %3329 = vmatprep.subr.mxu0 0.0
        %3330 = vmatpush1.msra.mxu0 0.0
        %3331 = vmatprep.subr.mxu0 0.0
        %3332 = vmatpush1.msra.mxu0 0.0
        %3333 = vmatprep.subr.mxu0 0.0
        %3334 = vmatpush1.msra.mxu0 0.0
        %3335 = vmatprep.subr.mxu0 0.0
        %3336 = vmatpush1.msra.mxu0 0.0
        %3337 = vmatprep.subr.mxu0 0.0
        %3338 = vmatpush1.msra.mxu0 0.0
        %3339 = vmatprep.subr.mxu0 0.0
        %3340 = vmatpush1.msra.mxu0 0.0
        %3341 = vmatprep.subr.mxu0 0.0
        %3342 = vmatpush1.msra.mxu0 0.0
        %3343 = vmatprep.subr.mxu0 0.0
        %3344 = vmatpush1.msra.mxu0 0.0
        %3345 = vmatprep.subr.mxu0 0.0
        %3346 = vmatpush1.msra.mxu0 0.0
        %3347 = vmatprep.subr.mxu0 0.0
        %3348 = vmatpush1.msra.mxu0 0.0
        %3349 = vmatprep.subr.mxu0 0.0
        %3350 = vmatpush1.msra.mxu0 0.0
        %3351 = vmatprep.subr.mxu0 0.0
        %3352 = vmatpush1.msra.mxu0 0.0
        %3353 = vmatprep.subr.mxu0 0.0
        %3354 = vmatpush1.msra.mxu0 0.0
        %3355 = vmatprep.subr.mxu0 0.0
        %3356 = vmatpush1.msra.mxu0 0.0
        %3357 = vmatprep.subr.mxu0 0.0
        %3358 = vmatpush1.msra.mxu0 0.0
        %3359 = vmatprep.subr.mxu0 0.0
        %3360 = vmatpush1.msra.mxu0 0.0
        %3361 = vmatprep.subr.mxu0 0.0
        %3362 = vmatpush1.msra.mxu0 0.0
        %3363 = vmatprep.subr.mxu0 0.0
        %3364 = vmatpush1.msra.mxu0 0.0
        %3365 = vmatprep.mubr.f32.mxu0 0.0
        %3366 = vmatmul.mubr.f32.gmra.mrb[0].mxu0 %v3296
        %v3367 = vpop.f32.mrb[0].mxu0
        %v3368 = vadd.f32 %v3293, %v3367
        %v3369 = vpop.f32.mrb[0].mxu0
        %3370 = vmatprep.mubr.f32.mxu0 0.0
        %3371 = vmatmul.mubr.f32.gmra.mrb[0].mxu0 %v3299
        %v3372 = vpop.f32.mrb[0].mxu0
        %v3373 = vadd.f32 %v3293, %v3372
        %v3374 = vpop.f32.mrb[0].mxu0
        %3375 = vdwg.mxu0
        %v3376 = vmax.f32 %v3368, 0.0
        %v3377 = vmax.f32 %v3373, 0.0
        %v3378 = vld [vmem:[%s1181] sm:$0xff]
        %v3379 = vld [vmem:[%s1181 + $0x8] sm:$0xff]
        %v3380 = vld [vmem:[%s1181 + $0x10] sm:$0xff]
        %v3381 = vld [vmem:[%s1181 + $0x18] sm:$0xff]
        %v3382 = vld [vmem:[%s1181 + $0x20] sm:$0xff]
        %v3383 = vld [vmem:[%s1181 + $0x28] sm:$0xff]
        %v3384 = vld [vmem:[%s1181 + $0x30] sm:$0xff]
        %v3385 = vld [vmem:[%s1181 + $0x38] sm:$0xff]
        %v3386 = vld [vmem:[%s1184] sm:$0x1]
        %v3388 = vlaneseq
        %v3389 = vshrl.u32 %v3388, 7
        %v3390 = vsub.s32 0, %v3389
        %v3391 = vrot.slane %v3386, %v3390
        %vm3393 = vcmask 523264
        %v3395 = vsel %vm3393, %v3376, 0
        %v3398 = vsel %vm3393, %v3377, 0
        %3400 = vmatprep.subr.mxu0 0.0
        %3401 = vmatpush1.msra.mxu0 %v3378
        %3402 = vmatprep.subr.mxu0 0.0
        %3403 = vmatpush1.msra.mxu0 %v3379
        %3404 = vmatprep.subr.mxu0 0.0
        %3405 = vmatpush1.msra.mxu0 %v3380
        %3406 = vmatprep.subr.mxu0 0.0
        %3407 = vmatpush1.msra.mxu0 %v3381
        %3408 = vmatprep.subr.mxu0 0.0
        %3409 = vmatpush1.msra.mxu0 %v3382
        %3410 = vmatprep.subr.mxu0 0.0
        %3411 = vmatpush1.msra.mxu0 %v3383
        %3412 = vmatprep.subr.mxu0 0.0
        %3413 = vmatpush1.msra.mxu0 %v3384
        %3414 = vmatprep.subr.mxu0 0.0
        %3415 = vmatpush1.msra.mxu0 %v3385
        %3416 = vmatprep.subr.mxu0 0.0
        %3417 = vmatpush1.msra.mxu0 0.0
        %3418 = vmatprep.subr.mxu0 0.0
        %3419 = vmatpush1.msra.mxu0 0.0
        %3420 = vmatprep.subr.mxu0 0.0
        %3421 = vmatpush1.msra.mxu0 0.0
        %3422 = vmatprep.subr.mxu0 0.0
        %3423 = vmatpush1.msra.mxu0 0.0
        %3424 = vmatprep.subr.mxu0 0.0
        %3425 = vmatpush1.msra.mxu0 0.0
        %3426 = vmatprep.subr.mxu0 0.0
        %3427 = vmatpush1.msra.mxu0 0.0
        %3428 = vmatprep.subr.mxu0 0.0
        %3429 = vmatpush1.msra.mxu0 0.0
        %3430 = vmatprep.subr.mxu0 0.0
        %3431 = vmatpush1.msra.mxu0 0.0
        %3432 = vmatprep.subr.mxu0 0.0
        %3433 = vmatpush1.msra.mxu0 0.0
        %3434 = vmatprep.subr.mxu0 0.0
        %3435 = vmatpush1.msra.mxu0 0.0
        %3436 = vmatprep.subr.mxu0 0.0
        %3437 = vmatpush1.msra.mxu0 0.0
        %3438 = vmatprep.subr.mxu0 0.0
        %3439 = vmatpush1.msra.mxu0 0.0
        %3440 = vmatprep.subr.mxu0 0.0
        %3441 = vmatpush1.msra.mxu0 0.0
        %3442 = vmatprep.subr.mxu0 0.0
        %3443 = vmatpush1.msra.mxu0 0.0
        %3444 = vmatprep.subr.mxu0 0.0
        %3445 = vmatpush1.msra.mxu0 0.0
        %3446 = vmatprep.subr.mxu0 0.0
        %3447 = vmatpush1.msra.mxu0 0.0
        %3448 = vmatprep.subr.mxu0 0.0
        %3449 = vmatpush1.msra.mxu0 0.0
        %3450 = vmatprep.subr.mxu0 0.0
        %3451 = vmatpush1.msra.mxu0 0.0
        %3452 = vmatprep.subr.mxu0 0.0
        %3453 = vmatpush1.msra.mxu0 0.0
        %3454 = vmatprep.subr.mxu0 0.0
        %3455 = vmatpush1.msra.mxu0 0.0
        %3456 = vmatprep.subr.mxu0 0.0
        %3457 = vmatpush1.msra.mxu0 0.0
        %3458 = vmatprep.subr.mxu0 0.0
        %3459 = vmatpush1.msra.mxu0 0.0
        %3460 = vmatprep.subr.mxu0 0.0
        %3461 = vmatpush1.msra.mxu0 0.0
        %3462 = vmatprep.subr.mxu0 0.0
        %3463 = vmatpush1.msra.mxu0 0.0
        %3464 = vmatprep.mubr.f32.mxu0 0.0
        %3465 = vmatmul.mubr.f32.gmra.mrb[0].mxu0 %v3395
        %v3466 = vpop.f32.mrb[0].mxu0
        %v3467 = vadd.f32 %v3391, %v3466
        %v3468 = vpop.f32.mrb[0].mxu0
        %3469 = vmatprep.mubr.f32.mxu0 0.0
        %3470 = vmatmul.mubr.f32.gmra.mrb[0].mxu0 %v3398
        %v3471 = vpop.f32.mrb[0].mxu0
        %v3472 = vadd.f32 %v3391, %v3471
        %v3473 = vpop.f32.mrb[0].mxu0
        %3474 = vdwg.mxu0
        %v3475 = vadd.f32 %v3467, %v3282
        %v3476 = vadd.f32 %v3472, %v3283
        %v3477 = vld [vmem:[%s1187] sm:$0x1]
        %v3478 = vld [vmem:[%s1190] sm:$0x1]
        %v3479 = vsel %vm1221, %v3475, 0.0
        %3480 = vadd.xlane.f32.xlu0 %v3479
        %v3481 = vpop.xlane.xlu0 %3480
        %v3482 = vsel %vm1221, %v3476, 0.0
        %3483 = vadd.xlane.f32.xlu0 %v3482
        %v3484 = vpop.xlane.xlu0 %3483
        %v3485 = vmul.f32 %v3481, %v2160
        %v3486 = vmul.f32 %v3484, %v2160
        %v3487 = vsub.f32 %v3475, %v3485
        %v3488 = vsub.f32 %v3476, %v3486
        %v3489 = vmul.f32 %v3487, %v3487
        %v3490 = vmul.f32 %v3488, %v3488
        %v3491 = vsel %vm1221, %v3489, 0.0
        %3492 = vadd.xlane.f32.xlu0 %v3491
        %v3493 = vpop.xlane.xlu0 %3492
        %v3494 = vsel %vm1221, %v3490, 0.0
        %3495 = vadd.xlane.f32.xlu0 %v3494
        %v3496 = vpop.xlane.xlu0 %3495
        %v3497 = vmul.f32 %v3493, %v2160
        %v3498 = vmul.f32 %v3496, %v2160
        %v3499 = vadd.f32 %v3497, 1e-05
        %v3500 = vadd.f32 %v3498, 1e-05
        %v3501 = vrsqrt.pop %v3499
        %v3502 = vrsqrt.pop %v3500
        %v3503 = vmul.f32 %v3487, %v3501
        %v3504 = vmul.f32 %v3488, %v3502
        %v3506 = vlaneseq
        %v3507 = vshrl.u32 %v3506, 7
        %v3508 = vsub.s32 0, %v3507
        %v3509 = vrot.slane %v3477, %v3508
        %v3511 = vmul.f32 %v3503, %v3509
        %v3512 = vmul.f32 %v3504, %v3509
        %v3514 = vlaneseq
        %v3515 = vshrl.u32 %v3514, 7
        %v3516 = vsub.s32 0, %v3515
        %v3517 = vrot.slane %v3478, %v3516
        %v3519 = vadd.f32 %v3511, %v3517
        %v3520 = vadd.f32 %v3512, %v3517
        %v3521 = vmul.f32 %v3519, %v2200
        %v3522 = vmul.f32 %v3520, %v2205
        %3523 = vst.msk [vmem:[#allocation2] sm:$0xff] %vm1221, %v3521
        %3524 = vst.msk [vmem:[#allocation2 + $0x8] sm:$0xff] %vm1221, %v3522
        %3525 = vst.msk [vmem:[#allocation17] sm:$0xff] %vm1221, %v3521
        %3526 = vst.msk [vmem:[#allocation17 + $0x8] sm:$0xff] %vm1221, %v3522
        // Predicated region
        $region157: #{tpu_custom_call.1} parent=119 // pred_check
          %p3527 = pneg %p686
        $region158: #{tpu_custom_call.1} parent=119 // pred_check_branch
          %3529 = sbr.rel (%p3527) target = $region160
        $region159: #{tpu_custom_call.1} parent=119 // pred_region
          %s3531 = ssub.s32 256, 256
          %3532 = vsyncadd [#allocation5], %s3531
          %s3533 = sshll.u32 [#allocation17], 4
          %s3534 = int_to_ptr.vmem [resolvable:$true] %s3533
          %3539 = dma.vmem_to_hbm [thread:$0]  %s3534, 256, %s25, [#allocation5], 128, 128, 8
        $region160: #{tpu_custom_call.1} parent=119 // pred_fallthru
          _
        // Predicated region
        $region161: #{tpu_custom_call.1} parent=119 // pred_check
          %p3540 = pneg %p686
        $region162: #{tpu_custom_call.1} parent=119 // pred_check_branch
          %3542 = sbr.rel (%p3540) target = $region164
        $region163: #{tpu_custom_call.1} parent=119 // pred_region
          %3543 = dma.done [#allocation5], 256
        $region164: #{tpu_custom_call.1} parent=119 // pred_fallthru
          _
      $region120: #{tpu_custom_call.1} parent=5 // pred_fallthru
        _
      %p3544 = scmp.le.s32.totalorder 2, %s43
      // Predicated region
      $region165: #{tpu_custom_call.1} parent=5 // pred_check
        %p3545 = pneg %p3544
      $region166: #{tpu_custom_call.1} parent=5 // pred_check_branch
        %3547 = sbr.rel (%p3545) target = $region168
      $region167: #{tpu_custom_call.1} parent=5 // pred_region
        %s3548 = ssub.s32 %s43, 2
      $region168: #{tpu_custom_call.1} parent=5 // pred_fallthru
        _
    $region6: #{tpu_custom_call.1} parent=1 // loop_footer
      %s47 = sadd.s32 1, %s43
    $region7: #{tpu_custom_call.1} parent=1 // loop_footer_branch
      %42 = sbr.rel target = $region3
    $region8: #{tpu_custom_call.1} parent=1 // loop_exit
      _
    %3549 = vsyncpa [#allocation4], 1
    %s3550 = scalar_lea.sflag [#allocation4], 1
    %3551 = vsyncpa %s3550, 1
    %3552 = vsyncpa [#allocation7], 1
    %3553 = vsyncpa [#allocation10], 1
    %s3554 = scalar_lea.sflag [#allocation10], 1
    %3555 = vsyncpa %s3554, 1
    %3556 = vsyncpa [#allocation13], 1
    %s3557 = scalar_lea.sflag [#allocation13], 1
    %3558 = vsyncpa %s3557, 1
    %3559 = vsyncpa [#allocation16], 1
    %s3560 = scalar_lea.sflag [#allocation16], 1
    %3561 = vsyncpa %s3560, 1
    %3562 = vsyncpa [#allocation5], 1
    %s3563 = scalar_lea.sflag [#allocation5], 1
    %3564 = vsyncpa %s3563, 1

</llo_original>
